<compile_context>
chip_gen: v6e
topology: v6e:2x2x1
jax: 0.10.0
libtpu: 0.0.40
codegen_flags: <defaults>
</compile_context>

<pallas_src>
import functools

import jax
import jax.numpy as jnp
from jax.experimental import pallas as pl
from jax.experimental.pallas import tpu as pltpu

# MXU operand dtype (see TODO above).
_MXU_DTYPE = jnp.float32


# -----------------------------------------------------------------------------
# helpers
# -----------------------------------------------------------------------------
def _round_up(x, m):
    return ((x + m - 1) // m) * m


def _pad_axis(a, axis, new):
    pad = [(0, 0)] * a.ndim
    pad[axis] = (0, new - a.shape[axis])
    return jnp.pad(a, pad)


def _pad_gates(w, H, Hp):
    """Pad the packed r|z|n last axis (3H) so each gate is Hp wide (lane-aligned)."""
    parts = [_pad_axis(w[..., g * H:(g + 1) * H], -1, Hp) for g in range(3)]
    return jnp.concatenate(parts, axis=-1)


def _tile(dim, pref, align):
    """Largest tile <= pref dividing dim (dims pre-padded to `align`); else full dim."""
    if dim <= pref:
        return dim
    if dim % align:
        return dim
    t = (pref // align) * align
    while dim % t:
        t -= align
    return t


def _batch_layout(B):
    """Pad batch to a sublane multiple.  For Bp >= 16 split into 2 batch blocks
    so the 'parallel' batch grid axis can be sharded across v7x's 2 TensorCores
    (GRU batch rows are independent)."""
    Bp = _round_up(B, 8)
    if Bp >= 16:
        Bp = _round_up(Bp, 16)
        return Bp, 2
    return Bp, 1


def _time_chunk(T, Bt, Hp, budget_bytes=4 * 1024 * 1024):
    """Largest divisor of T (<=64) whose double-buffered gi+out chunk stays
    under a conservative VMEM budget (safe on v5e's 16 MiB scoped default)."""
    per_step = Bt * (4 * Hp) * 4 * 2          # (3Hp gi + Hp out) f32, x2 buffers
    tc = int(max(1, min(T, budget_bytes // per_step, 64)))
    while T % tc:
        tc -= 1
    return tc


# -----------------------------------------------------------------------------
# Tiled matmul + bias kernel:  (N, K) @ (K, V) + b
# Used for: batched GRU input projections and the output logits.
# -----------------------------------------------------------------------------
def matmul_bias_kernel(x_ref, w_ref, b_ref, o_ref, acc_ref):
    @pl.when(pl.program_id(2) == 0)
    def _():
        acc_ref[...] = jnp.zeros_like(acc_ref)

    acc_ref[...] += jnp.dot(x_ref[...].astype(_MXU_DTYPE),
                            w_ref[...].astype(_MXU_DTYPE),
                            preferred_element_type=jnp.float32)

    @pl.when(pl.program_id(2) == pl.num_programs(2) - 1)
    def _():
        o_ref[...] = acc_ref[...] + b_ref[...]


def matmul_bias(x, w, b, *, tm=256, tn=512, tk=512):
    N, K = x.shape
    V = w.shape[1]
    btm = _tile(N, tm, 8)
    btn = _tile(V, tn, 128)
    btk = _tile(K, tk, 128)
    grid = (N // btm, V // btn, K // btk)
    return pl.pallas_call(
        matmul_bias_kernel,
        out_shape=jax.ShapeDtypeStruct((N, V), jnp.float32),
        grid_spec=pltpu.PrefetchScalarGridSpec(
            num_scalar_prefetch=0,
            grid=grid,
            in_specs=[pl.BlockSpec((btm, btk), lambda i, j, k: (i, k)),
                      pl.BlockSpec((btk, btn), lambda i, j, k: (k, j)),
                      pl.BlockSpec((1, btn), lambda i, j, k: (0, j))],
            out_specs=pl.BlockSpec((btm, btn), lambda i, j, k: (i, j)),
            scratch_shapes=[pltpu.VMEM((btm, btn), jnp.float32)],
        ),
        compiler_params=pltpu.CompilerParams(
            dimension_semantics=("parallel", "parallel", "arbitrary")),
    )(x, w, b.reshape(1, V))


# -----------------------------------------------------------------------------
# GRU recurrence kernels (T-chunked, hidden state resident in VMEM scratch).
# PyTorch gate math (packed r|z|n, lane-aligned to Hp per gate):
#   r = sigmoid(gi_r + gb_r + h W_hr)
#   z = sigmoid(gi_z + gb_z + h W_hz)
#   n = tanh   (gi_n + gb_n + r * (h W_hn + b_hn))
#   h' = n + z * (h - n)            ( == (1-z)*n + z*h )
# gi already contains x@W_ih + (b_ir+b_hr | b_iz+b_hz | b_in).
# -----------------------------------------------------------------------------
def _gru_chunk(gi_ref, whh_ref, bhn_ref, out_ref, h_sc, gb):
    Tc = gi_ref.shape[0]
    Hp = h_sc.shape[-1]
    bhn = bhn_ref[...]

    def step(t, h):
        gi = gi_ref[t]
        if gb is not None:
            gi = gi + gb
        # whh deliberately NOT hoisted into vregs: stream it from VMEM into the
        # MXU every step (avoids spills across the loop; vld slot has slack).
        gh = jnp.dot(h.astype(_MXU_DTYPE), whh_ref[...].astype(_MXU_DTYPE),
                     preferred_element_type=jnp.float32)
        r = jax.nn.sigmoid(gi[:, 0:Hp] + gh[:, 0:Hp])
        z = jax.nn.sigmoid(gi[:, Hp:2 * Hp] + gh[:, Hp:2 * Hp])
        n = jnp.tanh(gi[:, 2 * Hp:3 * Hp] + r * (gh[:, 2 * Hp:3 * Hp] + bhn))
        h_new = n + z * (h - n)
        if out_ref is not None:
            out_ref[t] = h_new
        return h_new

    h_fin = jax.lax.fori_loop(0, Tc, step, h_sc[...],
                              unroll=(True if Tc <= 8 else 4))
    h_sc[...] = h_fin
    return h_fin


def gru_enc_kernel(gi_ref, whh_ref, bhn_ref, hT_ref, h_sc):
    @pl.when(pl.program_id(1) == 0)
    def _():
        h_sc[...] = jnp.zeros_like(h_sc)

    h_fin = _gru_chunk(gi_ref, whh_ref, bhn_ref, None, h_sc, None)
    hT_ref[...] = h_fin            # output block is VMEM-resident across T axis


def gru_dec_kernel(gi_ref, h0_ref, wihc_ref, whh_ref, bhn_ref, out_ref,
                   h_sc, gb_sc):
    @pl.when(pl.program_id(1) == 0)
    def _():
        h_sc[...] = h0_ref[...]
        # fused, time-invariant context projection: enc_hT @ W_ih[E:, :]
        gb_sc[...] = jnp.dot(h0_ref[...], wihc_ref[...],
                             preferred_element_type=jnp.float32)

    _gru_chunk(gi_ref, whh_ref, bhn_ref, out_ref, h_sc, gb_sc[...])


def gru_encoder(gi, whh, bhn, *, n_bb, t_chunk):
    T, Bp, G3 = gi.shape
    Hp = whh.shape[0]
    Bt = Bp // n_bb
    return pl.pallas_call(
        gru_enc_kernel,
        out_shape=jax.ShapeDtypeStruct((Bp, Hp), jnp.float32),
        grid_spec=pltpu.PrefetchScalarGridSpec(
            num_scalar_prefetch=0,
            grid=(n_bb, T // t_chunk),
            in_specs=[pl.BlockSpec((t_chunk, Bt, G3), lambda b, t: (t, b, 0)),
                      pl.BlockSpec((Hp, G3), lambda b, t: (0, 0)),
                      pl.BlockSpec((1, Hp), lambda b, t: (0, 0))],
            out_specs=pl.BlockSpec((Bt, Hp), lambda b, t: (b, 0)),
            scratch_shapes=[pltpu.VMEM((Bt, Hp), jnp.float32)],
        ),
        compiler_params=pltpu.CompilerParams(
            dimension_semantics=("parallel", "arbitrary")),
    )(gi, whh, bhn)


def gru_decoder(gi, h0, wihc, whh, bhn, *, n_bb, t_chunk):
    T, Bp, G3 = gi.shape
    Hp = whh.shape[0]
    Bt = Bp // n_bb
    return pl.pallas_call(
        gru_dec_kernel,
        out_shape=jax.ShapeDtypeStruct((T, Bp, Hp), jnp.float32),
        grid_spec=pltpu.PrefetchScalarGridSpec(
            num_scalar_prefetch=0,
            grid=(n_bb, T // t_chunk),
            in_specs=[pl.BlockSpec((t_chunk, Bt, G3), lambda b, t: (t, b, 0)),
                      pl.BlockSpec((Bt, Hp), lambda b, t: (b, 0)),
                      pl.BlockSpec((Hp, G3), lambda b, t: (0, 0)),
                      pl.BlockSpec((Hp, G3), lambda b, t: (0, 0)),
                      pl.BlockSpec((1, Hp), lambda b, t: (0, 0))],
            out_specs=pl.BlockSpec((t_chunk, Bt, Hp), lambda b, t: (t, b, 0)),
            scratch_shapes=[pltpu.VMEM((Bt, Hp), jnp.float32),
                            pltpu.VMEM((Bt, G3), jnp.float32)],
        ),
        compiler_params=pltpu.CompilerParams(
            dimension_semantics=("parallel", "arbitrary")),
    )(gi, h0, wihc, whh, bhn)


# -----------------------------------------------------------------------------
# Parameter packing: gate-pad to Hp lanes, pre-sum r/z biases, split decoder
# W_ih into x-part and context-part, pad dense layer to (Hp, Vp).
# -----------------------------------------------------------------------------
def pack_params(p, H, Hp, Vp):
    E = p["enc_emb"].shape[1]

    def gru_pack(wih, whh, bih, bhh):
        wih_p = _pad_gates(wih, H, Hp)                               # (Din, 3Hp)
        whh_p = _pad_axis(_pad_gates(whh, H, Hp), 0, Hp)             # (Hp, 3Hp)
        bih = bih.reshape(-1)
        bhh = bhh.reshape(-1)
        # pre-sum r/z biases; keep b_in in the input bias, b_hn separate
        bi = jnp.concatenate([bih[:H] + bhh[:H],
                              bih[H:2 * H] + bhh[H:2 * H],
                              bih[2 * H:3 * H]])
        bi_p = _pad_gates(bi, H, Hp)                                 # (3Hp,)
        bhn_p = _pad_axis(bhh[2 * H:3 * H].reshape(1, H), -1, Hp)    # (1, Hp)
        return wih_p, whh_p, bi_p, bhn_p

    enc_wih, enc_whh, enc_bi, enc_bhn = gru_pack(
        p["enc_wih"], p["enc_whh"], p["enc_bih"], p["enc_bhh"])
    dec_wih_full, dec_whh, dec_bi, dec_bhn = gru_pack(
        p["dec_wih"], p["dec_whh"], p["dec_bih"], p["dec_bhh"])

    dec_wih_x = dec_wih_full[:E]                                     # (E, 3Hp)
    dec_wih_c = _pad_axis(dec_wih_full[E:E + H], 0, Hp)              # (Hp, 3Hp)

    dense_w = _pad_axis(_pad_axis(p["dense_w"], 0, Hp), 1, Vp)       # (Hp, Vp)
    dense_b = _pad_axis(p["dense_b"], 0, Vp)                         # (Vp,)

    return dict(enc_emb=p["enc_emb"], dec_emb=p["dec_emb"],
                enc_wih=enc_wih, enc_whh=enc_whh, enc_bi=enc_bi, enc_bhn=enc_bhn,
                dec_wih_x=dec_wih_x, dec_wih_c=dec_wih_c,
                dec_whh=dec_whh, dec_bi=dec_bi, dec_bhn=dec_bhn,
                dense_w=dense_w, dense_b=dense_b)


# -----------------------------------------------------------------------------
# EncoderDecoder forward (Seq2SeqEncoder -> Seq2SeqDecoder, num_layers = 1)
# -----------------------------------------------------------------------------
def encoder_decoder_forward(pp, enc_X, dec_X, *, H, V):
    B, T_enc = enc_X.shape
    _, T_dec = dec_X.shape
    E = pp["enc_emb"].shape[1]
    Hp = pp["enc_whh"].shape[0]
    G3 = 3 * Hp
    Vp = pp["dense_w"].shape[1]
    Bp, n_bb = _batch_layout(B)
    Bt = Bp // n_bb

    # ---------------- encoder ----------------
    # gather pre-transposed: (T, B, E) directly, no XLA transpose pass
    enc_emb = jnp.take(pp["enc_emb"], enc_X.T, axis=0)
    enc_emb = _pad_axis(enc_emb, 1, Bp)                                     # (T,Bp,E)
    # hoisted input projection: one batched MXU matmul for all timesteps
    gi_enc = matmul_bias(enc_emb.reshape(T_enc * Bp, E), pp["enc_wih"], pp["enc_bi"])
    gi_enc = gi_enc.reshape(T_enc, Bp, G3)
    enc_hT = gru_encoder(gi_enc, pp["enc_whh"], pp["enc_bhn"],
                         n_bb=n_bb, t_chunk=_time_chunk(T_enc, Bt, Hp))     # (Bp,Hp)

    # ---------------- decoder (init_state = encoder final hidden state) ----------------
    dec_emb = jnp.take(pp["dec_emb"], dec_X.T, axis=0)
    dec_emb = _pad_axis(dec_emb, 1, Bp)                                     # (T,Bp,E)
    gi_dec = matmul_bias(dec_emb.reshape(T_dec * Bp, E), pp["dec_wih_x"], pp["dec_bi"])
    gi_dec = gi_dec.reshape(T_dec, Bp, G3)
    # context projection is fused inside gru_decoder (gb scratch), h0 = enc_hT
    dec_out = gru_decoder(gi_dec, enc_hT, pp["dec_wih_c"], pp["dec_whh"],
                          pp["dec_bhn"], n_bb=n_bb,
                          t_chunk=_time_chunk(T_dec, Bt, Hp))               # (T,Bp,Hp)

    dec_hT = dec_out[T_dec - 1, :B, :H]

    # ---------------- dense logits ----------------
    # Swap layout on the small Hp-wide tensor (not the Vp-wide logits) so the
    # logits matmul writes directly in (B, T, V) order — no post-hoc transpose.
    dec_bm = jnp.swapaxes(dec_out, 0, 1).reshape(Bp * T_dec, Hp)
    logits = matmul_bias(dec_bm, pp["dense_w"], pp["dense_b"])
    logits = logits.reshape(Bp, T_dec, Vp)[:B, :, :V]

    # state returned as (1, B, H) mirroring torch GRU state (num_layers=1)
    return logits, dec_hT[None]


# -----------------------------------------------------------------------------
# Pure-JAX reference (unpadded params) for correctness check
# -----------------------------------------------------------------------------
def gru_ref(x_tbd, h0, wih, whh, bih, bhh):
    H = h0.shape[-1]
    hi = jax.lax.Precision.HIGHEST

    def step(h, x_t):
        gi = jnp.dot(x_t, wih, precision=hi) + bih[0]
        gh = jnp.dot(h, whh, precision=hi) + bhh[0]
        r = jax.nn.sigmoid(gi[:, :H] + gh[:, :H])
        z = jax.nn.sigmoid(gi[:, H:2 * H] + gh[:, H:2 * H])
        n = jnp.tanh(gi[:, 2 * H:] + r * gh[:, 2 * H:])
        h_new = (1.0 - z) * n + z * h
        return h_new, h_new

    hT, outs = jax.lax.scan(step, h0, x_tbd)
    return outs, hT


def reference_forward(params, enc_X, dec_X):
    p = params
    B, T_dec = dec_X.shape
    H = p["enc_whh"].shape[0]
    hi = jax.lax.Precision.HIGHEST
    enc_emb = jnp.transpose(jnp.take(p["enc_emb"], enc_X, axis=0), (1, 0, 2))
    _, enc_hT = gru_ref(enc_emb, jnp.zeros((B, H), jnp.float32),
                        p["enc_wih"], p["enc_whh"], p["enc_bih"], p["enc_bhh"])
    dec_emb = jnp.transpose(jnp.take(p["dec_emb"], dec_X, axis=0), (1, 0, 2))
    ctx = jnp.broadcast_to(enc_hT[None], (T_dec, B, H))
    dec_out, dec_hT = gru_ref(jnp.concatenate([dec_emb, ctx], -1), enc_hT,
                              p["dec_wih"], p["dec_whh"], p["dec_bih"], p["dec_bhh"])
    logits = jnp.dot(dec_out, p["dense_w"], precision=hi) + p["dense_b"]
    return jnp.transpose(logits, (1, 0, 2)), dec_hT[None]


# -----------------------------------------------------------------------------
# Deterministic parameter init (PyTorch-like shapes, gates packed r|z|n)
# -----------------------------------------------------------------------------
def init_params(key, vocab, embed, hidden):
    ks = jax.random.split(key, 12)
    k = 1.0 / jnp.sqrt(hidden)
    u = lambda kk, shape: jax.random.uniform(kk, shape, jnp.float32, -k, k)
    return {
        "enc_emb": jax.random.normal(ks[0], (vocab, embed), jnp.float32) * 0.1,
        "enc_wih": u(ks[1], (embed, 3 * hidden)),
        "enc_whh": u(ks[2], (hidden, 3 * hidden)),
        "enc_bih": u(ks[3], (1, 3 * hidden)),
        "enc_bhh": u(ks[4], (1, 3 * hidden)),
        "dec_emb": jax.random.normal(ks[5], (vocab, embed), jnp.float32) * 0.1,
        "dec_wih": u(ks[6], (embed + hidden, 3 * hidden)),
        "dec_whh": u(ks[7], (hidden, 3 * hidden)),
        "dec_bih": u(ks[8], (1, 3 * hidden)),
        "dec_bhh": u(ks[9], (1, 3 * hidden)),
        "dense_w": u(ks[10], (hidden, vocab)),
        "dense_b": u(ks[11], (vocab,)),
    }


if __name__ == "__main__":
    VOCAB, EMBED, HIDDEN = 32, 16, 32
    BATCH, SEQ = 4, 8

    key = jax.random.PRNGKey(0)
    kp, ke, kd = jax.random.split(key, 3)
    params = init_params(kp, VOCAB, EMBED, HIDDEN)

    H_PAD = _round_up(HIDDEN, 128)
    V_PAD = _round_up(VOCAB, 128)
    packed = pack_params(params, HIDDEN, H_PAD, V_PAD)

    enc_X = jax.random.randint(ke, (BATCH, SEQ), 0, VOCAB, jnp.int32)
    dec_X = jax.random.randint(kd, (BATCH, SEQ), 0, VOCAB, jnp.int32)

    fwd = jax.jit(functools.partial(encoder_decoder_forward, H=HIDDEN, V=VOCAB))
    logits, state = fwd(packed, enc_X, dec_X)
    jax.block_until_ready(logits)
    jax.block_until_ready(state)

    ref_logits, ref_state = reference_forward(params, enc_X, dec_X)
    assert logits.shape == (BATCH, SEQ, VOCAB)
    assert state.shape == (1, BATCH, HIDDEN)
    assert jnp.allclose(logits, ref_logits, rtol=1e-4, atol=1e-4), "logits mismatch"
    assert jnp.allclose(state, ref_state, rtol=1e-4, atol=1e-4), "state mismatch"

    print("KERNEL_OK")
</pallas_src>

<mosaic_0001>
module attributes {stable_mosaic.version = 11 : i64} {
  func.func @matmul_bias_kernel(%arg0: i32, %arg1: i32, %arg2: i32, %arg3: memref<64x16xf32, #tpu.memory_space<vmem>>, %arg4: memref<16x384xf32, #tpu.memory_space<vmem>>, %arg5: memref<1x384xf32, #tpu.memory_space<vmem>>, %arg6: memref<64x384xf32, #tpu.memory_space<vmem>>, %arg7: memref<64x384xf32, #tpu.memory_space<vmem>>) attributes {dimension_semantics = [#tpu.dimension_semantics<parallel>, #tpu.dimension_semantics<parallel>, #tpu.dimension_semantics<arbitrary>], iteration_bounds = array<i64: 1, 1, 1>, scalar_prefetch = 0 : i64, scratch_operands = 1 : i64, tpu.core_type = #tpu.core_type<tc>, window_params = [{transform_indices = @transform_0, window_bounds = array<i64: 64, 16>}, {transform_indices = @transform_1, window_bounds = array<i64: 16, 384>}, {transform_indices = @transform_2, window_bounds = array<i64: 1, 384>}, {transform_indices = @transform_3, window_bounds = array<i64: 64, 384>}]} {
    %c0_i32 = arith.constant 0 : i32
    %0 = arith.cmpi eq, %arg2, %c0_i32 : i32
    %1 = arith.extui %0 : i1 to i32
    %c0_i32_0 = arith.constant 0 : i32
    %2 = arith.cmpi ne, %1, %c0_i32_0 : i32
    scf.if %2 {
      %cst_10 = arith.constant 0.000000e+00 : f32
      %12 = vector.broadcast %cst_10 : f32 to vector<64x384xf32>
      %c0_11 = arith.constant 0 : index
      %c0_12 = arith.constant 0 : index
      %13 = vector.load %arg7[%c0_11, %c0_12] : memref<64x384xf32, #tpu.memory_space<vmem>>, vector<64x384xf32>
      tpu.vector_store %arg7[%c0_11, %c0_12], %12 {strides = array<i32>} : memref<64x384xf32, #tpu.memory_space<vmem>>, vector<64x384xf32>,
    } else {
    }
    %c0 = arith.constant 0 : index
    %c0_1 = arith.constant 0 : index
    %3 = vector.load %arg7[%c0, %c0_1] : memref<64x384xf32, #tpu.memory_space<vmem>>, vector<64x384xf32>
    %c0_2 = arith.constant 0 : index
    %c0_3 = arith.constant 0 : index
    %4 = vector.load %arg3[%c0_2, %c0_3] : memref<64x16xf32, #tpu.memory_space<vmem>>, vector<64x16xf32>
    %c0_4 = arith.constant 0 : index
    %c0_5 = arith.constant 0 : index
    %5 = vector.load %arg4[%c0_4, %c0_5] : memref<16x384xf32, #tpu.memory_space<vmem>>, vector<16x384xf32>
    %cst = arith.constant dense<0.000000e+00> : vector<64x384xf32>
    %6 = tpu.matmul %4, %5, %cst {dimension_numbers = #tpu.dot_dimension_numbers<[1], [0], [0], [1], [0, 0, 1, 1], [], []>} : vector<64x16xf32>, vector<16x384xf32>, vector<64x384xf32> -> vector<64x384xf32>
    %7 = arith.addf %3, %6 : vector<64x384xf32>
    %c0_6 = arith.constant 0 : index
    %c0_7 = arith.constant 0 : index
    %8 = vector.load %arg7[%c0_6, %c0_7] : memref<64x384xf32, #tpu.memory_space<vmem>>, vector<64x384xf32>
    tpu.vector_store %arg7[%c0_6, %c0_7], %7 {strides = array<i32>} : memref<64x384xf32, #tpu.memory_space<vmem>>, vector<64x384xf32>,
    %c0_i32_8 = arith.constant 0 : i32
    %9 = arith.cmpi eq, %arg2, %c0_i32_8 : i32
    %10 = arith.extui %9 : i1 to i32
    %c0_i32_9 = arith.constant 0 : i32
    %11 = arith.cmpi ne, %10, %c0_i32_9 : i32
    scf.if %11 {
      %c0_10 = arith.constant 0 : index
      %c0_11 = arith.constant 0 : index
      %12 = vector.load %arg7[%c0_10, %c0_11] : memref<64x384xf32, #tpu.memory_space<vmem>>, vector<64x384xf32>
      %c0_12 = arith.constant 0 : index
      %c0_13 = arith.constant 0 : index
      %13 = vector.load %arg5[%c0_12, %c0_13] : memref<1x384xf32, #tpu.memory_space<vmem>>, vector<1x384xf32>
      %14 = vector.broadcast %13 : vector<1x384xf32> to vector<64x384xf32>
      %15 = arith.addf %12, %14 : vector<64x384xf32>
      %c0_14 = arith.constant 0 : index
      %c0_15 = arith.constant 0 : index
      %16 = vector.load %arg6[%c0_14, %c0_15] : memref<64x384xf32, #tpu.memory_space<vmem>>, vector<64x384xf32>
      tpu.vector_store %arg6[%c0_14, %c0_15], %15 {strides = array<i32>} : memref<64x384xf32, #tpu.memory_space<vmem>>, vector<64x384xf32>,
    } else {
    }
    return
  }
  func.func @transform_0(%arg0: i32, %arg1: i32, %arg2: i32) -> (i32, i32) {
    %c0_i32 = arith.constant 0 : i32
    return %arg0, %arg2 : i32, i32
  }
  func.func @transform_1(%arg0: i32, %arg1: i32, %arg2: i32) -> (i32, i32) {
    %c0_i32 = arith.constant 0 : i32
    return %arg2, %arg1 : i32, i32
  }
  func.func @transform_2(%arg0: i32, %arg1: i32, %arg2: i32) -> (i32, i32) {
    %c0_i32 = arith.constant 0 : i32
    %c0_i32_0 = arith.constant 0 : i32
    return %c0_i32, %arg1 : i32, i32
  }
  func.func @transform_3(%arg0: i32, %arg1: i32, %arg2: i32) -> (i32, i32) {
    %c0_i32 = arith.constant 0 : i32
    return %arg0, %arg1 : i32, i32
  }
}

module attributes {stable_mosaic.version = 11 : i64} {
  func.func @gru_dec_kernel(%arg0: i32, %arg1: i32, %arg2: memref<8x8x384xf32, #tpu.memory_space<vmem>>, %arg3: memref<8x128xf32, #tpu.memory_space<vmem>>, %arg4: memref<128x384xf32, #tpu.memory_space<vmem>>, %arg5: memref<128x384xf32, #tpu.memory_space<vmem>>, %arg6: memref<1x128xf32, #tpu.memory_space<vmem>>, %arg7: memref<8x8x128xf32, #tpu.memory_space<vmem>>, %arg8: memref<8x128xf32, #tpu.memory_space<vmem>>, %arg9: memref<8x384xf32, #tpu.memory_space<vmem>>) attributes {dimension_semantics = [#tpu.dimension_semantics<parallel>, #tpu.dimension_semantics<arbitrary>], iteration_bounds = array<i64: 1, 1>, scalar_prefetch = 0 : i64, scratch_operands = 2 : i64, tpu.core_type = #tpu.core_type<tc>, window_params = [{transform_indices = @transform_0, window_bounds = array<i64: 8, 8, 384>}, {transform_indices = @transform_1, window_bounds = array<i64: 8, 128>}, {pipeline_mode = #tpu.pipeline_mode<synchronous>, transform_indices = @transform_2, window_bounds = array<i64: 128, 384>}, {pipeline_mode = #tpu.pipeline_mode<synchronous>, transform_indices = @transform_3, window_bounds = array<i64: 128, 384>}, {pipeline_mode = #tpu.pipeline_mode<synchronous>, transform_indices = @transform_4, window_bounds = array<i64: 1, 128>}, {transform_indices = @transform_5, window_bounds = array<i64: 8, 8, 128>}]} {
    %c0_i32 = arith.constant 0 : i32
    %0 = arith.cmpi eq, %arg1, %c0_i32 : i32
    %1 = arith.extui %0 : i1 to i32
    %c0_i32_0 = arith.constant 0 : i32
    %2 = arith.cmpi ne, %1, %c0_i32_0 : i32
    scf.if %2 {
      %c0_80 = arith.constant 0 : index
      %c0_81 = arith.constant 0 : index
      %295 = vector.load %arg3[%c0_80, %c0_81] : memref<8x128xf32, #tpu.memory_space<vmem>>, vector<8x128xf32>
      %c0_82 = arith.constant 0 : index
      %c0_83 = arith.constant 0 : index
      %296 = vector.load %arg8[%c0_82, %c0_83] : memref<8x128xf32, #tpu.memory_space<vmem>>, vector<8x128xf32>
      tpu.vector_store %arg8[%c0_82, %c0_83], %295 {strides = array<i32>} : memref<8x128xf32, #tpu.memory_space<vmem>>, vector<8x128xf32>,
      %c0_84 = arith.constant 0 : index
      %c0_85 = arith.constant 0 : index
      %297 = vector.load %arg3[%c0_84, %c0_85] : memref<8x128xf32, #tpu.memory_space<vmem>>, vector<8x128xf32>
      %c0_86 = arith.constant 0 : index
      %c0_87 = arith.constant 0 : index
      %298 = vector.load %arg4[%c0_86, %c0_87] : memref<128x384xf32, #tpu.memory_space<vmem>>, vector<128x384xf32>
      %cst_88 = arith.constant dense<0.000000e+00> : vector<8x384xf32>
      %299 = tpu.matmul %297, %298, %cst_88 {dimension_numbers = #tpu.dot_dimension_numbers<[1], [0], [0], [1], [0, 0, 1, 1], [], []>} : vector<8x128xf32>, vector<128x384xf32>, vector<8x384xf32> -> vector<8x384xf32>
      %c0_89 = arith.constant 0 : index
      %c0_90 = arith.constant 0 : index
      %300 = vector.load %arg9[%c0_89, %c0_90] : memref<8x384xf32, #tpu.memory_space<vmem>>, vector<8x384xf32>
      tpu.vector_store %arg9[%c0_89, %c0_90], %299 {strides = array<i32>} : memref<8x384xf32, #tpu.memory_space<vmem>>, vector<8x384xf32>,
    } else {
    }
    %c0 = arith.constant 0 : index
    %c0_1 = arith.constant 0 : index
    %3 = vector.load %arg9[%c0, %c0_1] : memref<8x384xf32, #tpu.memory_space<vmem>>, vector<8x384xf32>
    %c0_2 = arith.constant 0 : index
    %c0_3 = arith.constant 0 : index
    %4 = vector.load %arg6[%c0_2, %c0_3] : memref<1x128xf32, #tpu.memory_space<vmem>>, vector<1x128xf32>
    %c0_4 = arith.constant 0 : index
    %c0_5 = arith.constant 0 : index
    %5 = vector.load %arg8[%c0_4, %c0_5] : memref<8x128xf32, #tpu.memory_space<vmem>>, vector<8x128xf32>
    %c0_i32_6 = arith.constant 0 : i32
    %6 = arith.index_cast %c0_i32_6 : i32 to index
    %c0_7 = arith.constant 0 : index
    %c0_8 = arith.constant 0 : index
    %7 = vector.load %arg2[%6, %c0_7, %c0_8] : memref<8x8x384xf32, #tpu.memory_space<vmem>>, vector<1x8x384xf32>
    %8 = vector.shape_cast %7 : vector<1x8x384xf32> to vector<8x384xf32>
    %9 = arith.addf %8, %3 : vector<8x384xf32>
    %c0_9 = arith.constant 0 : index
    %c0_10 = arith.constant 0 : index
    %10 = vector.load %arg5[%c0_9, %c0_10] : memref<128x384xf32, #tpu.memory_space<vmem>>, vector<128x384xf32>
    %cst = arith.constant dense<0.000000e+00> : vector<8x384xf32>
    %11 = tpu.matmul %5, %10, %cst {dimension_numbers = #tpu.dot_dimension_numbers<[1], [0], [0], [1], [0, 0, 1, 1], [], []>} : vector<8x128xf32>, vector<128x384xf32>, vector<8x384xf32> -> vector<8x384xf32>
    %12 = vector.extract_strided_slice %9 {offsets = [0, 0], sizes = [8, 128], strides = [1, 1]} : vector<8x384xf32> to vector<8x128xf32>
    %13 = vector.extract_strided_slice %11 {offsets = [0, 0], sizes = [8, 128], strides = [1, 1]} : vector<8x384xf32> to vector<8x128xf32>
    %14 = arith.addf %12, %13 : vector<8x128xf32>
    %15 = arith.negf %14 : vector<8x128xf32>
    %16 = math.exp %15 : vector<8x128xf32>
    %cst_11 = arith.constant 1.000000e+00 : f32
    %17 = vector.broadcast %cst_11 : f32 to vector<8x128xf32>
    %18 = arith.addf %17, %16 : vector<8x128xf32>
    %19 = arith.divf %17, %18 : vector<8x128xf32>
    %20 = vector.extract_strided_slice %9 {offsets = [0, 128], sizes = [8, 128], strides = [1, 1]} : vector<8x384xf32> to vector<8x128xf32>
    %21 = vector.extract_strided_slice %11 {offsets = [0, 128], sizes = [8, 128], strides = [1, 1]} : vector<8x384xf32> to vector<8x128xf32>
    %22 = arith.addf %20, %21 : vector<8x128xf32>
    %23 = arith.negf %22 : vector<8x128xf32>
    %24 = math.exp %23 : vector<8x128xf32>
    %cst_12 = arith.constant 1.000000e+00 : f32
    %25 = vector.broadcast %cst_12 : f32 to vector<8x128xf32>
    %26 = arith.addf %25, %24 : vector<8x128xf32>
    %27 = arith.divf %25, %26 : vector<8x128xf32>
    %28 = vector.extract_strided_slice %9 {offsets = [0, 256], sizes = [8, 128], strides = [1, 1]} : vector<8x384xf32> to vector<8x128xf32>
    %29 = vector.extract_strided_slice %11 {offsets = [0, 256], sizes = [8, 128], strides = [1, 1]} : vector<8x384xf32> to vector<8x128xf32>
    %30 = vector.broadcast %4 : vector<1x128xf32> to vector<8x128xf32>
    %31 = arith.addf %29, %30 : vector<8x128xf32>
    %32 = arith.mulf %19, %31 : vector<8x128xf32>
    %33 = arith.addf %28, %32 : vector<8x128xf32>
    %34 = math.tanh %33 : vector<8x128xf32>
    %35 = arith.subf %5, %34 : vector<8x128xf32>
    %36 = arith.mulf %27, %35 : vector<8x128xf32>
    %37 = arith.addf %34, %36 : vector<8x128xf32>
    %38 = arith.index_cast %c0_i32_6 : i32 to index
    %c0_13 = arith.constant 0 : index
    %c0_14 = arith.constant 0 : index
    %39 = vector.load %arg7[%38, %c0_13, %c0_14] : memref<8x8x128xf32, #tpu.memory_space<vmem>>, vector<1x8x128xf32>
    %40 = vector.shape_cast %39 : vector<1x8x128xf32> to vector<8x128xf32>
    %41 = vector.shape_cast %37 : vector<8x128xf32> to vector<1x8x128xf32>
    tpu.vector_store %arg7[%38, %c0_13, %c0_14], %41 {strides = array<i32>} : memref<8x8x128xf32, #tpu.memory_space<vmem>>, vector<1x8x128xf32>,
    %c1_i32 = arith.constant 1 : i32
    %42 = arith.index_cast %c1_i32 : i32 to index
    %c0_15 = arith.constant 0 : index
    %c0_16 = arith.constant 0 : index
    %43 = vector.load %arg2[%42, %c0_15, %c0_16] : memref<8x8x384xf32, #tpu.memory_space<vmem>>, vector<1x8x384xf32>
    %44 = vector.shape_cast %43 : vector<1x8x384xf32> to vector<8x384xf32>
    %45 = arith.addf %44, %3 : vector<8x384xf32>
    %c0_17 = arith.constant 0 : index
    %c0_18 = arith.constant 0 : index
    %46 = vector.load %arg5[%c0_17, %c0_18] : memref<128x384xf32, #tpu.memory_space<vmem>>, vector<128x384xf32>
    %cst_19 = arith.constant dense<0.000000e+00> : vector<8x384xf32>
    %47 = tpu.matmul %37, %46, %cst_19 {dimension_numbers = #tpu.dot_dimension_numbers<[1], [0], [0], [1], [0, 0, 1, 1], [], []>} : vector<8x128xf32>, vector<128x384xf32>, vector<8x384xf32> -> vector<8x384xf32>
    %48 = vector.extract_strided_slice %45 {offsets = [0, 0], sizes = [8, 128], strides = [1, 1]} : vector<8x384xf32> to vector<8x128xf32>
    %49 = vector.extract_strided_slice %47 {offsets = [0, 0], sizes = [8, 128], strides = [1, 1]} : vector<8x384xf32> to vector<8x128xf32>
    %50 = arith.addf %48, %49 : vector<8x128xf32>
    %51 = arith.negf %50 : vector<8x128xf32>
    %52 = math.exp %51 : vector<8x128xf32>
    %cst_20 = arith.constant 1.000000e+00 : f32
    %53 = vector.broadcast %cst_20 : f32 to vector<8x128xf32>
    %54 = arith.addf %53, %52 : vector<8x128xf32>
    %55 = arith.divf %53, %54 : vector<8x128xf32>
    %56 = vector.extract_strided_slice %45 {offsets = [0, 128], sizes = [8, 128], strides = [1, 1]} : vector<8x384xf32> to vector<8x128xf32>
    %57 = vector.extract_strided_slice %47 {offsets = [0, 128], sizes = [8, 128], strides = [1, 1]} : vector<8x384xf32> to vector<8x128xf32>
    %58 = arith.addf %56, %57 : vector<8x128xf32>
    %59 = arith.negf %58 : vector<8x128xf32>
    %60 = math.exp %59 : vector<8x128xf32>
    %cst_21 = arith.constant 1.000000e+00 : f32
    %61 = vector.broadcast %cst_21 : f32 to vector<8x128xf32>
    %62 = arith.addf %61, %60 : vector<8x128xf32>
    %63 = arith.divf %61, %62 : vector<8x128xf32>
    %64 = vector.extract_strided_slice %45 {offsets = [0, 256], sizes = [8, 128], strides = [1, 1]} : vector<8x384xf32> to vector<8x128xf32>
    %65 = vector.extract_strided_slice %47 {offsets = [0, 256], sizes = [8, 128], strides = [1, 1]} : vector<8x384xf32> to vector<8x128xf32>
    %66 = vector.broadcast %4 : vector<1x128xf32> to vector<8x128xf32>
    %67 = arith.addf %65, %66 : vector<8x128xf32>
    %68 = arith.mulf %55, %67 : vector<8x128xf32>
    %69 = arith.addf %64, %68 : vector<8x128xf32>
    %70 = math.tanh %69 : vector<8x128xf32>
    %71 = arith.subf %37, %70 : vector<8x128xf32>
    %72 = arith.mulf %63, %71 : vector<8x128xf32>
    %73 = arith.addf %70, %72 : vector<8x128xf32>
    %74 = arith.index_cast %c1_i32 : i32 to index
    %c0_22 = arith.constant 0 : index
    %c0_23 = arith.constant 0 : index
    %75 = vector.load %arg7[%74, %c0_22, %c0_23] : memref<8x8x128xf32, #tpu.memory_space<vmem>>, vector<1x8x128xf32>
    %76 = vector.shape_cast %75 : vector<1x8x128xf32> to vector<8x128xf32>
    %77 = vector.shape_cast %73 : vector<8x128xf32> to vector<1x8x128xf32>
    tpu.vector_store %arg7[%74, %c0_22, %c0_23], %77 {strides = array<i32>} : memref<8x8x128xf32, #tpu.memory_space<vmem>>, vector<1x8x128xf32>,
    %c2_i32 = arith.constant 2 : i32
    %78 = arith.index_cast %c2_i32 : i32 to index
    %c0_24 = arith.constant 0 : index
    %c0_25 = arith.constant 0 : index
    %79 = vector.load %arg2[%78, %c0_24, %c0_25] : memref<8x8x384xf32, #tpu.memory_space<vmem>>, vector<1x8x384xf32>
    %80 = vector.shape_cast %79 : vector<1x8x384xf32> to vector<8x384xf32>
    %81 = arith.addf %80, %3 : vector<8x384xf32>
    %c0_26 = arith.constant 0 : index
    %c0_27 = arith.constant 0 : index
    %82 = vector.load %arg5[%c0_26, %c0_27] : memref<128x384xf32, #tpu.memory_space<vmem>>, vector<128x384xf32>
    %cst_28 = arith.constant dense<0.000000e+00> : vector<8x384xf32>
    %83 = tpu.matmul %73, %82, %cst_28 {dimension_numbers = #tpu.dot_dimension_numbers<[1], [0], [0], [1], [0, 0, 1, 1], [], []>} : vector<8x128xf32>, vector<128x384xf32>, vector<8x384xf32> -> vector<8x384xf32>
    %84 = vector.extract_strided_slice %81 {offsets = [0, 0], sizes = [8, 128], strides = [1, 1]} : vector<8x384xf32> to vector<8x128xf32>
    %85 = vector.extract_strided_slice %83 {offsets = [0, 0], sizes = [8, 128], strides = [1, 1]} : vector<8x384xf32> to vector<8x128xf32>
    %86 = arith.addf %84, %85 : vector<8x128xf32>
    %87 = arith.negf %86 : vector<8x128xf32>
    %88 = math.exp %87 : vector<8x128xf32>
    %cst_29 = arith.constant 1.000000e+00 : f32
    %89 = vector.broadcast %cst_29 : f32 to vector<8x128xf32>
    %90 = arith.addf %89, %88 : vector<8x128xf32>
    %91 = arith.divf %89, %90 : vector<8x128xf32>
    %92 = vector.extract_strided_slice %81 {offsets = [0, 128], sizes = [8, 128], strides = [1, 1]} : vector<8x384xf32> to vector<8x128xf32>
    %93 = vector.extract_strided_slice %83 {offsets = [0, 128], sizes = [8, 128], strides = [1, 1]} : vector<8x384xf32> to vector<8x128xf32>
    %94 = arith.addf %92, %93 : vector<8x128xf32>
    %95 = arith.negf %94 : vector<8x128xf32>
    %96 = math.exp %95 : vector<8x128xf32>
    %cst_30 = arith.constant 1.000000e+00 : f32
    %97 = vector.broadcast %cst_30 : f32 to vector<8x128xf32>
    %98 = arith.addf %97, %96 : vector<8x128xf32>
    %99 = arith.divf %97, %98 : vector<8x128xf32>
    %100 = vector.extract_strided_slice %81 {offsets = [0, 256], sizes = [8, 128], strides = [1, 1]} : vector<8x384xf32> to vector<8x128xf32>
    %101 = vector.extract_strided_slice %83 {offsets = [0, 256], sizes = [8, 128], strides = [1, 1]} : vector<8x384xf32> to vector<8x128xf32>
    %102 = vector.broadcast %4 : vector<1x128xf32> to vector<8x128xf32>
    %103 = arith.addf %101, %102 : vector<8x128xf32>
    %104 = arith.mulf %91, %103 : vector<8x128xf32>
    %105 = arith.addf %100, %104 : vector<8x128xf32>
    %106 = math.tanh %105 : vector<8x128xf32>
    %107 = arith.subf %73, %106 : vector<8x128xf32>
    %108 = arith.mulf %99, %107 : vector<8x128xf32>
    %109 = arith.addf %106, %108 : vector<8x128xf32>
    %110 = arith.index_cast %c2_i32 : i32 to index
    %c0_31 = arith.constant 0 : index
    %c0_32 = arith.constant 0 : index
    %111 = vector.load %arg7[%110, %c0_31, %c0_32] : memref<8x8x128xf32, #tpu.memory_space<vmem>>, vector<1x8x128xf32>
    %112 = vector.shape_cast %111 : vector<1x8x128xf32> to vector<8x128xf32>
    %113 = vector.shape_cast %109 : vector<8x128xf32> to vector<1x8x128xf32>
    tpu.vector_store %arg7[%110, %c0_31, %c0_32], %113 {strides = array<i32>} : memref<8x8x128xf32, #tpu.memory_space<vmem>>, vector<1x8x128xf32>,
    %c3_i32 = arith.constant 3 : i32
    %114 = arith.index_cast %c3_i32 : i32 to index
    %c0_33 = arith.constant 0 : index
    %c0_34 = arith.constant 0 : index
    %115 = vector.load %arg2[%114, %c0_33, %c0_34] : memref<8x8x384xf32, #tpu.memory_space<vmem>>, vector<1x8x384xf32>
    %116 = vector.shape_cast %115 : vector<1x8x384xf32> to vector<8x384xf32>
    %117 = arith.addf %116, %3 : vector<8x384xf32>
    %c0_35 = arith.constant 0 : index
    %c0_36 = arith.constant 0 : index
    %118 = vector.load %arg5[%c0_35, %c0_36] : memref<128x384xf32, #tpu.memory_space<vmem>>, vector<128x384xf32>
    %cst_37 = arith.constant dense<0.000000e+00> : vector<8x384xf32>
    %119 = tpu.matmul %109, %118, %cst_37 {dimension_numbers = #tpu.dot_dimension_numbers<[1], [0], [0], [1], [0, 0, 1, 1], [], []>} : vector<8x128xf32>, vector<128x384xf32>, vector<8x384xf32> -> vector<8x384xf32>
    %120 = vector.extract_strided_slice %117 {offsets = [0, 0], sizes = [8, 128], strides = [1, 1]} : vector<8x384xf32> to vector<8x128xf32>
    %121 = vector.extract_strided_slice %119 {offsets = [0, 0], sizes = [8, 128], strides = [1, 1]} : vector<8x384xf32> to vector<8x128xf32>
    %122 = arith.addf %120, %121 : vector<8x128xf32>
    %123 = arith.negf %122 : vector<8x128xf32>
    %124 = math.exp %123 : vector<8x128xf32>
    %cst_38 = arith.constant 1.000000e+00 : f32
    %125 = vector.broadcast %cst_38 : f32 to vector<8x128xf32>
    %126 = arith.addf %125, %124 : vector<8x128xf32>
    %127 = arith.divf %125, %126 : vector<8x128xf32>
    %128 = vector.extract_strided_slice %117 {offsets = [0, 128], sizes = [8, 128], strides = [1, 1]} : vector<8x384xf32> to vector<8x128xf32>
    %129 = vector.extract_strided_slice %119 {offsets = [0, 128], sizes = [8, 128], strides = [1, 1]} : vector<8x384xf32> to vector<8x128xf32>
    %130 = arith.addf %128, %129 : vector<8x128xf32>
    %131 = arith.negf %130 : vector<8x128xf32>
    %132 = math.exp %131 : vector<8x128xf32>
    %cst_39 = arith.constant 1.000000e+00 : f32
    %133 = vector.broadcast %cst_39 : f32 to vector<8x128xf32>
    %134 = arith.addf %133, %132 : vector<8x128xf32>
    %135 = arith.divf %133, %134 : vector<8x128xf32>
    %136 = vector.extract_strided_slice %117 {offsets = [0, 256], sizes = [8, 128], strides = [1, 1]} : vector<8x384xf32> to vector<8x128xf32>
    %137 = vector.extract_strided_slice %119 {offsets = [0, 256], sizes = [8, 128], strides = [1, 1]} : vector<8x384xf32> to vector<8x128xf32>
    %138 = vector.broadcast %4 : vector<1x128xf32> to vector<8x128xf32>
    %139 = arith.addf %137, %138 : vector<8x128xf32>
    %140 = arith.mulf %127, %139 : vector<8x128xf32>
    %141 = arith.addf %136, %140 : vector<8x128xf32>
    %142 = math.tanh %141 : vector<8x128xf32>
    %143 = arith.subf %109, %142 : vector<8x128xf32>
    %144 = arith.mulf %135, %143 : vector<8x128xf32>
    %145 = arith.addf %142, %144 : vector<8x128xf32>
    %146 = arith.index_cast %c3_i32 : i32 to index
    %c0_40 = arith.constant 0 : index
    %c0_41 = arith.constant 0 : index
    %147 = vector.load %arg7[%146, %c0_40, %c0_41] : memref<8x8x128xf32, #tpu.memory_space<vmem>>, vector<1x8x128xf32>
    %148 = vector.shape_cast %147 : vector<1x8x128xf32> to vector<8x128xf32>
    %149 = vector.shape_cast %145 : vector<8x128xf32> to vector<1x8x128xf32>
    tpu.vector_store %arg7[%146, %c0_40, %c0_41], %149 {strides = array<i32>} : memref<8x8x128xf32, #tpu.memory_space<vmem>>, vector<1x8x128xf32>,
    %c4_i32 = arith.constant 4 : i32
    %150 = arith.index_cast %c4_i32 : i32 to index
    %c0_42 = arith.constant 0 : index
    %c0_43 = arith.constant 0 : index
    %151 = vector.load %arg2[%150, %c0_42, %c0_43] : memref<8x8x384xf32, #tpu.memory_space<vmem>>, vector<1x8x384xf32>
    %152 = vector.shape_cast %151 : vector<1x8x384xf32> to vector<8x384xf32>
    %153 = arith.addf %152, %3 : vector<8x384xf32>
    %c0_44 = arith.constant 0 : index
    %c0_45 = arith.constant 0 : index
    %154 = vector.load %arg5[%c0_44, %c0_45] : memref<128x384xf32, #tpu.memory_space<vmem>>, vector<128x384xf32>
    %cst_46 = arith.constant dense<0.000000e+00> : vector<8x384xf32>
    %155 = tpu.matmul %145, %154, %cst_46 {dimension_numbers = #tpu.dot_dimension_numbers<[1], [0], [0], [1], [0, 0, 1, 1], [], []>} : vector<8x128xf32>, vector<128x384xf32>, vector<8x384xf32> -> vector<8x384xf32>
    %156 = vector.extract_strided_slice %153 {offsets = [0, 0], sizes = [8, 128], strides = [1, 1]} : vector<8x384xf32> to vector<8x128xf32>
    %157 = vector.extract_strided_slice %155 {offsets = [0, 0], sizes = [8, 128], strides = [1, 1]} : vector<8x384xf32> to vector<8x128xf32>
    %158 = arith.addf %156, %157 : vector<8x128xf32>
    %159 = arith.negf %158 : vector<8x128xf32>
    %160 = math.exp %159 : vector<8x128xf32>
    %cst_47 = arith.constant 1.000000e+00 : f32
    %161 = vector.broadcast %cst_47 : f32 to vector<8x128xf32>
    %162 = arith.addf %161, %160 : vector<8x128xf32>
    %163 = arith.divf %161, %162 : vector<8x128xf32>
    %164 = vector.extract_strided_slice %153 {offsets = [0, 128], sizes = [8, 128], strides = [1, 1]} : vector<8x384xf32> to vector<8x128xf32>
    %165 = vector.extract_strided_slice %155 {offsets = [0, 128], sizes = [8, 128], strides = [1, 1]} : vector<8x384xf32> to vector<8x128xf32>
    %166 = arith.addf %164, %165 : vector<8x128xf32>
    %167 = arith.negf %166 : vector<8x128xf32>
    %168 = math.exp %167 : vector<8x128xf32>
    %cst_48 = arith.constant 1.000000e+00 : f32
    %169 = vector.broadcast %cst_48 : f32 to vector<8x128xf32>
    %170 = arith.addf %169, %168 : vector<8x128xf32>
    %171 = arith.divf %169, %170 : vector<8x128xf32>
    %172 = vector.extract_strided_slice %153 {offsets = [0, 256], sizes = [8, 128], strides = [1, 1]} : vector<8x384xf32> to vector<8x128xf32>
    %173 = vector.extract_strided_slice %155 {offsets = [0, 256], sizes = [8, 128], strides = [1, 1]} : vector<8x384xf32> to vector<8x128xf32>
    %174 = vector.broadcast %4 : vector<1x128xf32> to vector<8x128xf32>
    %175 = arith.addf %173, %174 : vector<8x128xf32>
    %176 = arith.mulf %163, %175 : vector<8x128xf32>
    %177 = arith.addf %172, %176 : vector<8x128xf32>
    %178 = math.tanh %177 : vector<8x128xf32>
    %179 = arith.subf %145, %178 : vector<8x128xf32>
    %180 = arith.mulf %171, %179 : vector<8x128xf32>
    %181 = arith.addf %178, %180 : vector<8x128xf32>
    %182 = arith.index_cast %c4_i32 : i32 to index
    %c0_49 = arith.constant 0 : index
    %c0_50 = arith.constant 0 : index
    %183 = vector.load %arg7[%182, %c0_49, %c0_50] : memref<8x8x128xf32, #tpu.memory_space<vmem>>, vector<1x8x128xf32>
    %184 = vector.shape_cast %183 : vector<1x8x128xf32> to vector<8x128xf32>
    %185 = vector.shape_cast %181 : vector<8x128xf32> to vector<1x8x128xf32>
    tpu.vector_store %arg7[%182, %c0_49, %c0_50], %185 {strides = array<i32>} : memref<8x8x128xf32, #tpu.memory_space<vmem>>, vector<1x8x128xf32>,
    %c5_i32 = arith.constant 5 : i32
    %186 = arith.index_cast %c5_i32 : i32 to index
    %c0_51 = arith.constant 0 : index
    %c0_52 = arith.constant 0 : index
    %187 = vector.load %arg2[%186, %c0_51, %c0_52] : memref<8x8x384xf32, #tpu.memory_space<vmem>>, vector<1x8x384xf32>
    %188 = vector.shape_cast %187 : vector<1x8x384xf32> to vector<8x384xf32>
    %189 = arith.addf %188, %3 : vector<8x384xf32>
    %c0_53 = arith.constant 0 : index
    %c0_54 = arith.constant 0 : index
    %190 = vector.load %arg5[%c0_53, %c0_54] : memref<128x384xf32, #tpu.memory_space<vmem>>, vector<128x384xf32>
    %cst_55 = arith.constant dense<0.000000e+00> : vector<8x384xf32>
    %191 = tpu.matmul %181, %190, %cst_55 {dimension_numbers = #tpu.dot_dimension_numbers<[1], [0], [0], [1], [0, 0, 1, 1], [], []>} : vector<8x128xf32>, vector<128x384xf32>, vector<8x384xf32> -> vector<8x384xf32>
    %192 = vector.extract_strided_slice %189 {offsets = [0, 0], sizes = [8, 128], strides = [1, 1]} : vector<8x384xf32> to vector<8x128xf32>
    %193 = vector.extract_strided_slice %191 {offsets = [0, 0], sizes = [8, 128], strides = [1, 1]} : vector<8x384xf32> to vector<8x128xf32>
    %194 = arith.addf %192, %193 : vector<8x128xf32>
    %195 = arith.negf %194 : vector<8x128xf32>
    %196 = math.exp %195 : vector<8x128xf32>
    %cst_56 = arith.constant 1.000000e+00 : f32
    %197 = vector.broadcast %cst_56 : f32 to vector<8x128xf32>
    %198 = arith.addf %197, %196 : vector<8x128xf32>
    %199 = arith.divf %197, %198 : vector<8x128xf32>
    %200 = vector.extract_strided_slice %189 {offsets = [0, 128], sizes = [8, 128], strides = [1, 1]} : vector<8x384xf32> to vector<8x128xf32>
    %201 = vector.extract_strided_slice %191 {offsets = [0, 128], sizes = [8, 128], strides = [1, 1]} : vector<8x384xf32> to vector<8x128xf32>
    %202 = arith.addf %200, %201 : vector<8x128xf32>
    %203 = arith.negf %202 : vector<8x128xf32>
    %204 = math.exp %203 : vector<8x128xf32>
    %cst_57 = arith.constant 1.000000e+00 : f32
    %205 = vector.broadcast %cst_57 : f32 to vector<8x128xf32>
    %206 = arith.addf %205, %204 : vector<8x128xf32>
    %207 = arith.divf %205, %206 : vector<8x128xf32>
    %208 = vector.extract_strided_slice %189 {offsets = [0, 256], sizes = [8, 128], strides = [1, 1]} : vector<8x384xf32> to vector<8x128xf32>
    %209 = vector.extract_strided_slice %191 {offsets = [0, 256], sizes = [8, 128], strides = [1, 1]} : vector<8x384xf32> to vector<8x128xf32>
    %210 = vector.broadcast %4 : vector<1x128xf32> to vector<8x128xf32>
    %211 = arith.addf %209, %210 : vector<8x128xf32>
    %212 = arith.mulf %199, %211 : vector<8x128xf32>
    %213 = arith.addf %208, %212 : vector<8x128xf32>
    %214 = math.tanh %213 : vector<8x128xf32>
    %215 = arith.subf %181, %214 : vector<8x128xf32>
    %216 = arith.mulf %207, %215 : vector<8x128xf32>
    %217 = arith.addf %214, %216 : vector<8x128xf32>
    %218 = arith.index_cast %c5_i32 : i32 to index
    %c0_58 = arith.constant 0 : index
    %c0_59 = arith.constant 0 : index
    %219 = vector.load %arg7[%218, %c0_58, %c0_59] : memref<8x8x128xf32, #tpu.memory_space<vmem>>, vector<1x8x128xf32>
    %220 = vector.shape_cast %219 : vector<1x8x128xf32> to vector<8x128xf32>
    %221 = vector.shape_cast %217 : vector<8x128xf32> to vector<1x8x128xf32>
    tpu.vector_store %arg7[%218, %c0_58, %c0_59], %221 {strides = array<i32>} : memref<8x8x128xf32, #tpu.memory_space<vmem>>, vector<1x8x128xf32>,
    %c6_i32 = arith.constant 6 : i32
    %222 = arith.index_cast %c6_i32 : i32 to index
    %c0_60 = arith.constant 0 : index
    %c0_61 = arith.constant 0 : index
    %223 = vector.load %arg2[%222, %c0_60, %c0_61] : memref<8x8x384xf32, #tpu.memory_space<vmem>>, vector<1x8x384xf32>
    %224 = vector.shape_cast %223 : vector<1x8x384xf32> to vector<8x384xf32>
    %225 = arith.addf %224, %3 : vector<8x384xf32>
    %c0_62 = arith.constant 0 : index
    %c0_63 = arith.constant 0 : index
    %226 = vector.load %arg5[%c0_62, %c0_63] : memref<128x384xf32, #tpu.memory_space<vmem>>, vector<128x384xf32>
    %cst_64 = arith.constant dense<0.000000e+00> : vector<8x384xf32>
    %227 = tpu.matmul %217, %226, %cst_64 {dimension_numbers = #tpu.dot_dimension_numbers<[1], [0], [0], [1], [0, 0, 1, 1], [], []>} : vector<8x128xf32>, vector<128x384xf32>, vector<8x384xf32> -> vector<8x384xf32>
    %228 = vector.extract_strided_slice %225 {offsets = [0, 0], sizes = [8, 128], strides = [1, 1]} : vector<8x384xf32> to vector<8x128xf32>
    %229 = vector.extract_strided_slice %227 {offsets = [0, 0], sizes = [8, 128], strides = [1, 1]} : vector<8x384xf32> to vector<8x128xf32>
    %230 = arith.addf %228, %229 : vector<8x128xf32>
    %231 = arith.negf %230 : vector<8x128xf32>
    %232 = math.exp %231 : vector<8x128xf32>
    %cst_65 = arith.constant 1.000000e+00 : f32
    %233 = vector.broadcast %cst_65 : f32 to vector<8x128xf32>
    %234 = arith.addf %233, %232 : vector<8x128xf32>
    %235 = arith.divf %233, %234 : vector<8x128xf32>
    %236 = vector.extract_strided_slice %225 {offsets = [0, 128], sizes = [8, 128], strides = [1, 1]} : vector<8x384xf32> to vector<8x128xf32>
    %237 = vector.extract_strided_slice %227 {offsets = [0, 128], sizes = [8, 128], strides = [1, 1]} : vector<8x384xf32> to vector<8x128xf32>
    %238 = arith.addf %236, %237 : vector<8x128xf32>
    %239 = arith.negf %238 : vector<8x128xf32>
    %240 = math.exp %239 : vector<8x128xf32>
    %cst_66 = arith.constant 1.000000e+00 : f32
    %241 = vector.broadcast %cst_66 : f32 to vector<8x128xf32>
    %242 = arith.addf %241, %240 : vector<8x128xf32>
    %243 = arith.divf %241, %242 : vector<8x128xf32>
    %244 = vector.extract_strided_slice %225 {offsets = [0, 256], sizes = [8, 128], strides = [1, 1]} : vector<8x384xf32> to vector<8x128xf32>
    %245 = vector.extract_strided_slice %227 {offsets = [0, 256], sizes = [8, 128], strides = [1, 1]} : vector<8x384xf32> to vector<8x128xf32>
    %246 = vector.broadcast %4 : vector<1x128xf32> to vector<8x128xf32>
    %247 = arith.addf %245, %246 : vector<8x128xf32>
    %248 = arith.mulf %235, %247 : vector<8x128xf32>
    %249 = arith.addf %244, %248 : vector<8x128xf32>
    %250 = math.tanh %249 : vector<8x128xf32>
    %251 = arith.subf %217, %250 : vector<8x128xf32>
    %252 = arith.mulf %243, %251 : vector<8x128xf32>
    %253 = arith.addf %250, %252 : vector<8x128xf32>
    %254 = arith.index_cast %c6_i32 : i32 to index
    %c0_67 = arith.constant 0 : index
    %c0_68 = arith.constant 0 : index
    %255 = vector.load %arg7[%254, %c0_67, %c0_68] : memref<8x8x128xf32, #tpu.memory_space<vmem>>, vector<1x8x128xf32>
    %256 = vector.shape_cast %255 : vector<1x8x128xf32> to vector<8x128xf32>
    %257 = vector.shape_cast %253 : vector<8x128xf32> to vector<1x8x128xf32>
    tpu.vector_store %arg7[%254, %c0_67, %c0_68], %257 {strides = array<i32>} : memref<8x8x128xf32, #tpu.memory_space<vmem>>, vector<1x8x128xf32>,
    %c7_i32 = arith.constant 7 : i32
    %258 = arith.index_cast %c7_i32 : i32 to index
    %c0_69 = arith.constant 0 : index
    %c0_70 = arith.constant 0 : index
    %259 = vector.load %arg2[%258, %c0_69, %c0_70] : memref<8x8x384xf32, #tpu.memory_space<vmem>>, vector<1x8x384xf32>
    %260 = vector.shape_cast %259 : vector<1x8x384xf32> to vector<8x384xf32>
    %261 = arith.addf %260, %3 : vector<8x384xf32>
    %c0_71 = arith.constant 0 : index
    %c0_72 = arith.constant 0 : index
    %262 = vector.load %arg5[%c0_71, %c0_72] : memref<128x384xf32, #tpu.memory_space<vmem>>, vector<128x384xf32>
    %cst_73 = arith.constant dense<0.000000e+00> : vector<8x384xf32>
    %263 = tpu.matmul %253, %262, %cst_73 {dimension_numbers = #tpu.dot_dimension_numbers<[1], [0], [0], [1], [0, 0, 1, 1], [], []>} : vector<8x128xf32>, vector<128x384xf32>, vector<8x384xf32> -> vector<8x384xf32>
    %264 = vector.extract_strided_slice %261 {offsets = [0, 0], sizes = [8, 128], strides = [1, 1]} : vector<8x384xf32> to vector<8x128xf32>
    %265 = vector.extract_strided_slice %263 {offsets = [0, 0], sizes = [8, 128], strides = [1, 1]} : vector<8x384xf32> to vector<8x128xf32>
    %266 = arith.addf %264, %265 : vector<8x128xf32>
    %267 = arith.negf %266 : vector<8x128xf32>
    %268 = math.exp %267 : vector<8x128xf32>
    %cst_74 = arith.constant 1.000000e+00 : f32
    %269 = vector.broadcast %cst_74 : f32 to vector<8x128xf32>
    %270 = arith.addf %269, %268 : vector<8x128xf32>
    %271 = arith.divf %269, %270 : vector<8x128xf32>
    %272 = vector.extract_strided_slice %261 {offsets = [0, 128], sizes = [8, 128], strides = [1, 1]} : vector<8x384xf32> to vector<8x128xf32>
    %273 = vector.extract_strided_slice %263 {offsets = [0, 128], sizes = [8, 128], strides = [1, 1]} : vector<8x384xf32> to vector<8x128xf32>
    %274 = arith.addf %272, %273 : vector<8x128xf32>
    %275 = arith.negf %274 : vector<8x128xf32>
    %276 = math.exp %275 : vector<8x128xf32>
    %cst_75 = arith.constant 1.000000e+00 : f32
    %277 = vector.broadcast %cst_75 : f32 to vector<8x128xf32>
    %278 = arith.addf %277, %276 : vector<8x128xf32>
    %279 = arith.divf %277, %278 : vector<8x128xf32>
    %280 = vector.extract_strided_slice %261 {offsets = [0, 256], sizes = [8, 128], strides = [1, 1]} : vector<8x384xf32> to vector<8x128xf32>
    %281 = vector.extract_strided_slice %263 {offsets = [0, 256], sizes = [8, 128], strides = [1, 1]} : vector<8x384xf32> to vector<8x128xf32>
    %282 = vector.broadcast %4 : vector<1x128xf32> to vector<8x128xf32>
    %283 = arith.addf %281, %282 : vector<8x128xf32>
    %284 = arith.mulf %271, %283 : vector<8x128xf32>
    %285 = arith.addf %280, %284 : vector<8x128xf32>
    %286 = math.tanh %285 : vector<8x128xf32>
    %287 = arith.subf %253, %286 : vector<8x128xf32>
    %288 = arith.mulf %279, %287 : vector<8x128xf32>
    %289 = arith.addf %286, %288 : vector<8x128xf32>
    %290 = arith.index_cast %c7_i32 : i32 to index
    %c0_76 = arith.constant 0 : index
    %c0_77 = arith.constant 0 : index
    %291 = vector.load %arg7[%290, %c0_76, %c0_77] : memref<8x8x128xf32, #tpu.memory_space<vmem>>, vector<1x8x128xf32>
    %292 = vector.shape_cast %291 : vector<1x8x128xf32> to vector<8x128xf32>
    %293 = vector.shape_cast %289 : vector<8x128xf32> to vector<1x8x128xf32>
    tpu.vector_store %arg7[%290, %c0_76, %c0_77], %293 {strides = array<i32>} : memref<8x8x128xf32, #tpu.memory_space<vmem>>, vector<1x8x128xf32>,
    %c8_i32 = arith.constant 8 : i32
    %c0_78 = arith.constant 0 : index
    %c0_79 = arith.constant 0 : index
    %294 = vector.load %arg8[%c0_78, %c0_79] : memref<8x128xf32, #tpu.memory_space<vmem>>, vector<8x128xf32>
    tpu.vector_store %arg8[%c0_78, %c0_79], %289 {strides = array<i32>} : memref<8x128xf32, #tpu.memory_space<vmem>>, vector<8x128xf32>,
    return
  }
  func.func @transform_0(%arg0: i32, %arg1: i32) -> (i32, i32, i32) {
    %c0_i32 = arith.constant 0 : i32
    %c0_i32_0 = arith.constant 0 : i32
    return %arg1, %arg0, %c0_i32 : i32, i32, i32
  }
  func.func @transform_1(%arg0: i32, %arg1: i32) -> (i32, i32) {
    %c0_i32 = arith.constant 0 : i32
    %c0_i32_0 = arith.constant 0 : i32
    return %arg0, %c0_i32 : i32, i32
  }
  func.func @transform_2(%arg0: i32, %arg1: i32) -> (i32, i32) {
    %c0_i32 = arith.constant 0 : i32
    %c0_i32_0 = arith.constant 0 : i32
    %c0_i32_1 = arith.constant 0 : i32
    return %c0_i32, %c0_i32_0 : i32, i32
  }
  func.func @transform_3(%arg0: i32, %arg1: i32) -> (i32, i32) {
    %c0_i32 = arith.constant 0 : i32
    %c0_i32_0 = arith.constant 0 : i32
    %c0_i32_1 = arith.constant 0 : i32
    return %c0_i32, %c0_i32_0 : i32, i32
  }
  func.func @transform_4(%arg0: i32, %arg1: i32) -> (i32, i32) {
    %c0_i32 = arith.constant 0 : i32
    %c0_i32_0 = arith.constant 0 : i32
    %c0_i32_1 = arith.constant 0 : i32
    return %c0_i32, %c0_i32_0 : i32, i32
  }
  func.func @transform_5(%arg0: i32, %arg1: i32) -> (i32, i32, i32) {
    %c0_i32 = arith.constant 0 : i32
    %c0_i32_0 = arith.constant 0 : i32
    return %arg1, %arg0, %c0_i32 : i32, i32, i32
  }
}

module attributes {stable_mosaic.version = 11 : i64} {
  func.func @gru_enc_kernel(%arg0: i32, %arg1: i32, %arg2: memref<8x8x384xf32, #tpu.memory_space<vmem>>, %arg3: memref<128x384xf32, #tpu.memory_space<vmem>>, %arg4: memref<1x128xf32, #tpu.memory_space<vmem>>, %arg5: memref<8x128xf32, #tpu.memory_space<vmem>>, %arg6: memref<8x128xf32, #tpu.memory_space<vmem>>) attributes {dimension_semantics = [#tpu.dimension_semantics<parallel>, #tpu.dimension_semantics<arbitrary>], iteration_bounds = array<i64: 1, 1>, scalar_prefetch = 0 : i64, scratch_operands = 1 : i64, tpu.core_type = #tpu.core_type<tc>, window_params = [{transform_indices = @transform_0, window_bounds = array<i64: 8, 8, 384>}, {pipeline_mode = #tpu.pipeline_mode<synchronous>, transform_indices = @transform_1, window_bounds = array<i64: 128, 384>}, {pipeline_mode = #tpu.pipeline_mode<synchronous>, transform_indices = @transform_2, window_bounds = array<i64: 1, 128>}, {transform_indices = @transform_3, window_bounds = array<i64: 8, 128>}]} {
    %c0_i32 = arith.constant 0 : i32
    %0 = arith.cmpi eq, %arg1, %c0_i32 : i32
    %1 = arith.extui %0 : i1 to i32
    %c0_i32_0 = arith.constant 0 : i32
    %2 = arith.cmpi ne, %1, %c0_i32_0 : i32
    scf.if %2 {
      %cst_64 = arith.constant 0.000000e+00 : f32
      %255 = vector.broadcast %cst_64 : f32 to vector<8x128xf32>
      %c0_65 = arith.constant 0 : index
      %c0_66 = arith.constant 0 : index
      %256 = vector.load %arg6[%c0_65, %c0_66] : memref<8x128xf32, #tpu.memory_space<vmem>>, vector<8x128xf32>
      tpu.vector_store %arg6[%c0_65, %c0_66], %255 {strides = array<i32>} : memref<8x128xf32, #tpu.memory_space<vmem>>, vector<8x128xf32>,
    } else {
    }
    %c0 = arith.constant 0 : index
    %c0_1 = arith.constant 0 : index
    %3 = vector.load %arg4[%c0, %c0_1] : memref<1x128xf32, #tpu.memory_space<vmem>>, vector<1x128xf32>
    %c0_2 = arith.constant 0 : index
    %c0_3 = arith.constant 0 : index
    %4 = vector.load %arg6[%c0_2, %c0_3] : memref<8x128xf32, #tpu.memory_space<vmem>>, vector<8x128xf32>
    %c0_i32_4 = arith.constant 0 : i32
    %5 = arith.index_cast %c0_i32_4 : i32 to index
    %c0_5 = arith.constant 0 : index
    %c0_6 = arith.constant 0 : index
    %6 = vector.load %arg2[%5, %c0_5, %c0_6] : memref<8x8x384xf32, #tpu.memory_space<vmem>>, vector<1x8x384xf32>
    %7 = vector.shape_cast %6 : vector<1x8x384xf32> to vector<8x384xf32>
    %c0_7 = arith.constant 0 : index
    %c0_8 = arith.constant 0 : index
    %8 = vector.load %arg3[%c0_7, %c0_8] : memref<128x384xf32, #tpu.memory_space<vmem>>, vector<128x384xf32>
    %cst = arith.constant dense<0.000000e+00> : vector<8x384xf32>
    %9 = tpu.matmul %4, %8, %cst {dimension_numbers = #tpu.dot_dimension_numbers<[1], [0], [0], [1], [0, 0, 1, 1], [], []>} : vector<8x128xf32>, vector<128x384xf32>, vector<8x384xf32> -> vector<8x384xf32>
    %10 = vector.extract_strided_slice %7 {offsets = [0, 0], sizes = [8, 128], strides = [1, 1]} : vector<8x384xf32> to vector<8x128xf32>
    %11 = vector.extract_strided_slice %9 {offsets = [0, 0], sizes = [8, 128], strides = [1, 1]} : vector<8x384xf32> to vector<8x128xf32>
    %12 = arith.addf %10, %11 : vector<8x128xf32>
    %13 = arith.negf %12 : vector<8x128xf32>
    %14 = math.exp %13 : vector<8x128xf32>
    %cst_9 = arith.constant 1.000000e+00 : f32
    %15 = vector.broadcast %cst_9 : f32 to vector<8x128xf32>
    %16 = arith.addf %15, %14 : vector<8x128xf32>
    %17 = arith.divf %15, %16 : vector<8x128xf32>
    %18 = vector.extract_strided_slice %7 {offsets = [0, 128], sizes = [8, 128], strides = [1, 1]} : vector<8x384xf32> to vector<8x128xf32>
    %19 = vector.extract_strided_slice %9 {offsets = [0, 128], sizes = [8, 128], strides = [1, 1]} : vector<8x384xf32> to vector<8x128xf32>
    %20 = arith.addf %18, %19 : vector<8x128xf32>
    %21 = arith.negf %20 : vector<8x128xf32>
    %22 = math.exp %21 : vector<8x128xf32>
    %cst_10 = arith.constant 1.000000e+00 : f32
    %23 = vector.broadcast %cst_10 : f32 to vector<8x128xf32>
    %24 = arith.addf %23, %22 : vector<8x128xf32>
    %25 = arith.divf %23, %24 : vector<8x128xf32>
    %26 = vector.extract_strided_slice %7 {offsets = [0, 256], sizes = [8, 128], strides = [1, 1]} : vector<8x384xf32> to vector<8x128xf32>
    %27 = vector.extract_strided_slice %9 {offsets = [0, 256], sizes = [8, 128], strides = [1, 1]} : vector<8x384xf32> to vector<8x128xf32>
    %28 = vector.broadcast %3 : vector<1x128xf32> to vector<8x128xf32>
    %29 = arith.addf %27, %28 : vector<8x128xf32>
    %30 = arith.mulf %17, %29 : vector<8x128xf32>
    %31 = arith.addf %26, %30 : vector<8x128xf32>
    %32 = math.tanh %31 : vector<8x128xf32>
    %33 = arith.subf %4, %32 : vector<8x128xf32>
    %34 = arith.mulf %25, %33 : vector<8x128xf32>
    %35 = arith.addf %32, %34 : vector<8x128xf32>
    %c1_i32 = arith.constant 1 : i32
    %36 = arith.index_cast %c1_i32 : i32 to index
    %c0_11 = arith.constant 0 : index
    %c0_12 = arith.constant 0 : index
    %37 = vector.load %arg2[%36, %c0_11, %c0_12] : memref<8x8x384xf32, #tpu.memory_space<vmem>>, vector<1x8x384xf32>
    %38 = vector.shape_cast %37 : vector<1x8x384xf32> to vector<8x384xf32>
    %c0_13 = arith.constant 0 : index
    %c0_14 = arith.constant 0 : index
    %39 = vector.load %arg3[%c0_13, %c0_14] : memref<128x384xf32, #tpu.memory_space<vmem>>, vector<128x384xf32>
    %cst_15 = arith.constant dense<0.000000e+00> : vector<8x384xf32>
    %40 = tpu.matmul %35, %39, %cst_15 {dimension_numbers = #tpu.dot_dimension_numbers<[1], [0], [0], [1], [0, 0, 1, 1], [], []>} : vector<8x128xf32>, vector<128x384xf32>, vector<8x384xf32> -> vector<8x384xf32>
    %41 = vector.extract_strided_slice %38 {offsets = [0, 0], sizes = [8, 128], strides = [1, 1]} : vector<8x384xf32> to vector<8x128xf32>
    %42 = vector.extract_strided_slice %40 {offsets = [0, 0], sizes = [8, 128], strides = [1, 1]} : vector<8x384xf32> to vector<8x128xf32>
    %43 = arith.addf %41, %42 : vector<8x128xf32>
    %44 = arith.negf %43 : vector<8x128xf32>
    %45 = math.exp %44 : vector<8x128xf32>
    %cst_16 = arith.constant 1.000000e+00 : f32
    %46 = vector.broadcast %cst_16 : f32 to vector<8x128xf32>
    %47 = arith.addf %46, %45 : vector<8x128xf32>
    %48 = arith.divf %46, %47 : vector<8x128xf32>
    %49 = vector.extract_strided_slice %38 {offsets = [0, 128], sizes = [8, 128], strides = [1, 1]} : vector<8x384xf32> to vector<8x128xf32>
    %50 = vector.extract_strided_slice %40 {offsets = [0, 128], sizes = [8, 128], strides = [1, 1]} : vector<8x384xf32> to vector<8x128xf32>
    %51 = arith.addf %49, %50 : vector<8x128xf32>
    %52 = arith.negf %51 : vector<8x128xf32>
    %53 = math.exp %52 : vector<8x128xf32>
    %cst_17 = arith.constant 1.000000e+00 : f32
    %54 = vector.broadcast %cst_17 : f32 to vector<8x128xf32>
    %55 = arith.addf %54, %53 : vector<8x128xf32>
    %56 = arith.divf %54, %55 : vector<8x128xf32>
    %57 = vector.extract_strided_slice %38 {offsets = [0, 256], sizes = [8, 128], strides = [1, 1]} : vector<8x384xf32> to vector<8x128xf32>
    %58 = vector.extract_strided_slice %40 {offsets = [0, 256], sizes = [8, 128], strides = [1, 1]} : vector<8x384xf32> to vector<8x128xf32>
    %59 = vector.broadcast %3 : vector<1x128xf32> to vector<8x128xf32>
    %60 = arith.addf %58, %59 : vector<8x128xf32>
    %61 = arith.mulf %48, %60 : vector<8x128xf32>
    %62 = arith.addf %57, %61 : vector<8x128xf32>
    %63 = math.tanh %62 : vector<8x128xf32>
    %64 = arith.subf %35, %63 : vector<8x128xf32>
    %65 = arith.mulf %56, %64 : vector<8x128xf32>
    %66 = arith.addf %63, %65 : vector<8x128xf32>
    %c2_i32 = arith.constant 2 : i32
    %67 = arith.index_cast %c2_i32 : i32 to index
    %c0_18 = arith.constant 0 : index
    %c0_19 = arith.constant 0 : index
    %68 = vector.load %arg2[%67, %c0_18, %c0_19] : memref<8x8x384xf32, #tpu.memory_space<vmem>>, vector<1x8x384xf32>
    %69 = vector.shape_cast %68 : vector<1x8x384xf32> to vector<8x384xf32>
    %c0_20 = arith.constant 0 : index
    %c0_21 = arith.constant 0 : index
    %70 = vector.load %arg3[%c0_20, %c0_21] : memref<128x384xf32, #tpu.memory_space<vmem>>, vector<128x384xf32>
    %cst_22 = arith.constant dense<0.000000e+00> : vector<8x384xf32>
    %71 = tpu.matmul %66, %70, %cst_22 {dimension_numbers = #tpu.dot_dimension_numbers<[1], [0], [0], [1], [0, 0, 1, 1], [], []>} : vector<8x128xf32>, vector<128x384xf32>, vector<8x384xf32> -> vector<8x384xf32>
    %72 = vector.extract_strided_slice %69 {offsets = [0, 0], sizes = [8, 128], strides = [1, 1]} : vector<8x384xf32> to vector<8x128xf32>
    %73 = vector.extract_strided_slice %71 {offsets = [0, 0], sizes = [8, 128], strides = [1, 1]} : vector<8x384xf32> to vector<8x128xf32>
    %74 = arith.addf %72, %73 : vector<8x128xf32>
    %75 = arith.negf %74 : vector<8x128xf32>
    %76 = math.exp %75 : vector<8x128xf32>
    %cst_23 = arith.constant 1.000000e+00 : f32
    %77 = vector.broadcast %cst_23 : f32 to vector<8x128xf32>
    %78 = arith.addf %77, %76 : vector<8x128xf32>
    %79 = arith.divf %77, %78 : vector<8x128xf32>
    %80 = vector.extract_strided_slice %69 {offsets = [0, 128], sizes = [8, 128], strides = [1, 1]} : vector<8x384xf32> to vector<8x128xf32>
    %81 = vector.extract_strided_slice %71 {offsets = [0, 128], sizes = [8, 128], strides = [1, 1]} : vector<8x384xf32> to vector<8x128xf32>
    %82 = arith.addf %80, %81 : vector<8x128xf32>
    %83 = arith.negf %82 : vector<8x128xf32>
    %84 = math.exp %83 : vector<8x128xf32>
    %cst_24 = arith.constant 1.000000e+00 : f32
    %85 = vector.broadcast %cst_24 : f32 to vector<8x128xf32>
    %86 = arith.addf %85, %84 : vector<8x128xf32>
    %87 = arith.divf %85, %86 : vector<8x128xf32>
    %88 = vector.extract_strided_slice %69 {offsets = [0, 256], sizes = [8, 128], strides = [1, 1]} : vector<8x384xf32> to vector<8x128xf32>
    %89 = vector.extract_strided_slice %71 {offsets = [0, 256], sizes = [8, 128], strides = [1, 1]} : vector<8x384xf32> to vector<8x128xf32>
    %90 = vector.broadcast %3 : vector<1x128xf32> to vector<8x128xf32>
    %91 = arith.addf %89, %90 : vector<8x128xf32>
    %92 = arith.mulf %79, %91 : vector<8x128xf32>
    %93 = arith.addf %88, %92 : vector<8x128xf32>
    %94 = math.tanh %93 : vector<8x128xf32>
    %95 = arith.subf %66, %94 : vector<8x128xf32>
    %96 = arith.mulf %87, %95 : vector<8x128xf32>
    %97 = arith.addf %94, %96 : vector<8x128xf32>
    %c3_i32 = arith.constant 3 : i32
    %98 = arith.index_cast %c3_i32 : i32 to index
    %c0_25 = arith.constant 0 : index
    %c0_26 = arith.constant 0 : index
    %99 = vector.load %arg2[%98, %c0_25, %c0_26] : memref<8x8x384xf32, #tpu.memory_space<vmem>>, vector<1x8x384xf32>
    %100 = vector.shape_cast %99 : vector<1x8x384xf32> to vector<8x384xf32>
    %c0_27 = arith.constant 0 : index
    %c0_28 = arith.constant 0 : index
    %101 = vector.load %arg3[%c0_27, %c0_28] : memref<128x384xf32, #tpu.memory_space<vmem>>, vector<128x384xf32>
    %cst_29 = arith.constant dense<0.000000e+00> : vector<8x384xf32>
    %102 = tpu.matmul %97, %101, %cst_29 {dimension_numbers = #tpu.dot_dimension_numbers<[1], [0], [0], [1], [0, 0, 1, 1], [], []>} : vector<8x128xf32>, vector<128x384xf32>, vector<8x384xf32> -> vector<8x384xf32>
    %103 = vector.extract_strided_slice %100 {offsets = [0, 0], sizes = [8, 128], strides = [1, 1]} : vector<8x384xf32> to vector<8x128xf32>
    %104 = vector.extract_strided_slice %102 {offsets = [0, 0], sizes = [8, 128], strides = [1, 1]} : vector<8x384xf32> to vector<8x128xf32>
    %105 = arith.addf %103, %104 : vector<8x128xf32>
    %106 = arith.negf %105 : vector<8x128xf32>
    %107 = math.exp %106 : vector<8x128xf32>
    %cst_30 = arith.constant 1.000000e+00 : f32
    %108 = vector.broadcast %cst_30 : f32 to vector<8x128xf32>
    %109 = arith.addf %108, %107 : vector<8x128xf32>
    %110 = arith.divf %108, %109 : vector<8x128xf32>
    %111 = vector.extract_strided_slice %100 {offsets = [0, 128], sizes = [8, 128], strides = [1, 1]} : vector<8x384xf32> to vector<8x128xf32>
    %112 = vector.extract_strided_slice %102 {offsets = [0, 128], sizes = [8, 128], strides = [1, 1]} : vector<8x384xf32> to vector<8x128xf32>
    %113 = arith.addf %111, %112 : vector<8x128xf32>
    %114 = arith.negf %113 : vector<8x128xf32>
    %115 = math.exp %114 : vector<8x128xf32>
    %cst_31 = arith.constant 1.000000e+00 : f32
    %116 = vector.broadcast %cst_31 : f32 to vector<8x128xf32>
    %117 = arith.addf %116, %115 : vector<8x128xf32>
    %118 = arith.divf %116, %117 : vector<8x128xf32>
    %119 = vector.extract_strided_slice %100 {offsets = [0, 256], sizes = [8, 128], strides = [1, 1]} : vector<8x384xf32> to vector<8x128xf32>
    %120 = vector.extract_strided_slice %102 {offsets = [0, 256], sizes = [8, 128], strides = [1, 1]} : vector<8x384xf32> to vector<8x128xf32>
    %121 = vector.broadcast %3 : vector<1x128xf32> to vector<8x128xf32>
    %122 = arith.addf %120, %121 : vector<8x128xf32>
    %123 = arith.mulf %110, %122 : vector<8x128xf32>
    %124 = arith.addf %119, %123 : vector<8x128xf32>
    %125 = math.tanh %124 : vector<8x128xf32>
    %126 = arith.subf %97, %125 : vector<8x128xf32>
    %127 = arith.mulf %118, %126 : vector<8x128xf32>
    %128 = arith.addf %125, %127 : vector<8x128xf32>
    %c4_i32 = arith.constant 4 : i32
    %129 = arith.index_cast %c4_i32 : i32 to index
    %c0_32 = arith.constant 0 : index
    %c0_33 = arith.constant 0 : index
    %130 = vector.load %arg2[%129, %c0_32, %c0_33] : memref<8x8x384xf32, #tpu.memory_space<vmem>>, vector<1x8x384xf32>
    %131 = vector.shape_cast %130 : vector<1x8x384xf32> to vector<8x384xf32>
    %c0_34 = arith.constant 0 : index
    %c0_35 = arith.constant 0 : index
    %132 = vector.load %arg3[%c0_34, %c0_35] : memref<128x384xf32, #tpu.memory_space<vmem>>, vector<128x384xf32>
    %cst_36 = arith.constant dense<0.000000e+00> : vector<8x384xf32>
    %133 = tpu.matmul %128, %132, %cst_36 {dimension_numbers = #tpu.dot_dimension_numbers<[1], [0], [0], [1], [0, 0, 1, 1], [], []>} : vector<8x128xf32>, vector<128x384xf32>, vector<8x384xf32> -> vector<8x384xf32>
    %134 = vector.extract_strided_slice %131 {offsets = [0, 0], sizes = [8, 128], strides = [1, 1]} : vector<8x384xf32> to vector<8x128xf32>
    %135 = vector.extract_strided_slice %133 {offsets = [0, 0], sizes = [8, 128], strides = [1, 1]} : vector<8x384xf32> to vector<8x128xf32>
    %136 = arith.addf %134, %135 : vector<8x128xf32>
    %137 = arith.negf %136 : vector<8x128xf32>
    %138 = math.exp %137 : vector<8x128xf32>
    %cst_37 = arith.constant 1.000000e+00 : f32
    %139 = vector.broadcast %cst_37 : f32 to vector<8x128xf32>
    %140 = arith.addf %139, %138 : vector<8x128xf32>
    %141 = arith.divf %139, %140 : vector<8x128xf32>
    %142 = vector.extract_strided_slice %131 {offsets = [0, 128], sizes = [8, 128], strides = [1, 1]} : vector<8x384xf32> to vector<8x128xf32>
    %143 = vector.extract_strided_slice %133 {offsets = [0, 128], sizes = [8, 128], strides = [1, 1]} : vector<8x384xf32> to vector<8x128xf32>
    %144 = arith.addf %142, %143 : vector<8x128xf32>
    %145 = arith.negf %144 : vector<8x128xf32>
    %146 = math.exp %145 : vector<8x128xf32>
    %cst_38 = arith.constant 1.000000e+00 : f32
    %147 = vector.broadcast %cst_38 : f32 to vector<8x128xf32>
    %148 = arith.addf %147, %146 : vector<8x128xf32>
    %149 = arith.divf %147, %148 : vector<8x128xf32>
    %150 = vector.extract_strided_slice %131 {offsets = [0, 256], sizes = [8, 128], strides = [1, 1]} : vector<8x384xf32> to vector<8x128xf32>
    %151 = vector.extract_strided_slice %133 {offsets = [0, 256], sizes = [8, 128], strides = [1, 1]} : vector<8x384xf32> to vector<8x128xf32>
    %152 = vector.broadcast %3 : vector<1x128xf32> to vector<8x128xf32>
    %153 = arith.addf %151, %152 : vector<8x128xf32>
    %154 = arith.mulf %141, %153 : vector<8x128xf32>
    %155 = arith.addf %150, %154 : vector<8x128xf32>
    %156 = math.tanh %155 : vector<8x128xf32>
    %157 = arith.subf %128, %156 : vector<8x128xf32>
    %158 = arith.mulf %149, %157 : vector<8x128xf32>
    %159 = arith.addf %156, %158 : vector<8x128xf32>
    %c5_i32 = arith.constant 5 : i32
    %160 = arith.index_cast %c5_i32 : i32 to index
    %c0_39 = arith.constant 0 : index
    %c0_40 = arith.constant 0 : index
    %161 = vector.load %arg2[%160, %c0_39, %c0_40] : memref<8x8x384xf32, #tpu.memory_space<vmem>>, vector<1x8x384xf32>
    %162 = vector.shape_cast %161 : vector<1x8x384xf32> to vector<8x384xf32>
    %c0_41 = arith.constant 0 : index
    %c0_42 = arith.constant 0 : index
    %163 = vector.load %arg3[%c0_41, %c0_42] : memref<128x384xf32, #tpu.memory_space<vmem>>, vector<128x384xf32>
    %cst_43 = arith.constant dense<0.000000e+00> : vector<8x384xf32>
    %164 = tpu.matmul %159, %163, %cst_43 {dimension_numbers = #tpu.dot_dimension_numbers<[1], [0], [0], [1], [0, 0, 1, 1], [], []>} : vector<8x128xf32>, vector<128x384xf32>, vector<8x384xf32> -> vector<8x384xf32>
    %165 = vector.extract_strided_slice %162 {offsets = [0, 0], sizes = [8, 128], strides = [1, 1]} : vector<8x384xf32> to vector<8x128xf32>
    %166 = vector.extract_strided_slice %164 {offsets = [0, 0], sizes = [8, 128], strides = [1, 1]} : vector<8x384xf32> to vector<8x128xf32>
    %167 = arith.addf %165, %166 : vector<8x128xf32>
    %168 = arith.negf %167 : vector<8x128xf32>
    %169 = math.exp %168 : vector<8x128xf32>
    %cst_44 = arith.constant 1.000000e+00 : f32
    %170 = vector.broadcast %cst_44 : f32 to vector<8x128xf32>
    %171 = arith.addf %170, %169 : vector<8x128xf32>
    %172 = arith.divf %170, %171 : vector<8x128xf32>
    %173 = vector.extract_strided_slice %162 {offsets = [0, 128], sizes = [8, 128], strides = [1, 1]} : vector<8x384xf32> to vector<8x128xf32>
    %174 = vector.extract_strided_slice %164 {offsets = [0, 128], sizes = [8, 128], strides = [1, 1]} : vector<8x384xf32> to vector<8x128xf32>
    %175 = arith.addf %173, %174 : vector<8x128xf32>
    %176 = arith.negf %175 : vector<8x128xf32>
    %177 = math.exp %176 : vector<8x128xf32>
    %cst_45 = arith.constant 1.000000e+00 : f32
    %178 = vector.broadcast %cst_45 : f32 to vector<8x128xf32>
    %179 = arith.addf %178, %177 : vector<8x128xf32>
    %180 = arith.divf %178, %179 : vector<8x128xf32>
    %181 = vector.extract_strided_slice %162 {offsets = [0, 256], sizes = [8, 128], strides = [1, 1]} : vector<8x384xf32> to vector<8x128xf32>
    %182 = vector.extract_strided_slice %164 {offsets = [0, 256], sizes = [8, 128], strides = [1, 1]} : vector<8x384xf32> to vector<8x128xf32>
    %183 = vector.broadcast %3 : vector<1x128xf32> to vector<8x128xf32>
    %184 = arith.addf %182, %183 : vector<8x128xf32>
    %185 = arith.mulf %172, %184 : vector<8x128xf32>
    %186 = arith.addf %181, %185 : vector<8x128xf32>
    %187 = math.tanh %186 : vector<8x128xf32>
    %188 = arith.subf %159, %187 : vector<8x128xf32>
    %189 = arith.mulf %180, %188 : vector<8x128xf32>
    %190 = arith.addf %187, %189 : vector<8x128xf32>
    %c6_i32 = arith.constant 6 : i32
    %191 = arith.index_cast %c6_i32 : i32 to index
    %c0_46 = arith.constant 0 : index
    %c0_47 = arith.constant 0 : index
    %192 = vector.load %arg2[%191, %c0_46, %c0_47] : memref<8x8x384xf32, #tpu.memory_space<vmem>>, vector<1x8x384xf32>
    %193 = vector.shape_cast %192 : vector<1x8x384xf32> to vector<8x384xf32>
    %c0_48 = arith.constant 0 : index
    %c0_49 = arith.constant 0 : index
    %194 = vector.load %arg3[%c0_48, %c0_49] : memref<128x384xf32, #tpu.memory_space<vmem>>, vector<128x384xf32>
    %cst_50 = arith.constant dense<0.000000e+00> : vector<8x384xf32>
    %195 = tpu.matmul %190, %194, %cst_50 {dimension_numbers = #tpu.dot_dimension_numbers<[1], [0], [0], [1], [0, 0, 1, 1], [], []>} : vector<8x128xf32>, vector<128x384xf32>, vector<8x384xf32> -> vector<8x384xf32>
    %196 = vector.extract_strided_slice %193 {offsets = [0, 0], sizes = [8, 128], strides = [1, 1]} : vector<8x384xf32> to vector<8x128xf32>
    %197 = vector.extract_strided_slice %195 {offsets = [0, 0], sizes = [8, 128], strides = [1, 1]} : vector<8x384xf32> to vector<8x128xf32>
    %198 = arith.addf %196, %197 : vector<8x128xf32>
    %199 = arith.negf %198 : vector<8x128xf32>
    %200 = math.exp %199 : vector<8x128xf32>
    %cst_51 = arith.constant 1.000000e+00 : f32
    %201 = vector.broadcast %cst_51 : f32 to vector<8x128xf32>
    %202 = arith.addf %201, %200 : vector<8x128xf32>
    %203 = arith.divf %201, %202 : vector<8x128xf32>
    %204 = vector.extract_strided_slice %193 {offsets = [0, 128], sizes = [8, 128], strides = [1, 1]} : vector<8x384xf32> to vector<8x128xf32>
    %205 = vector.extract_strided_slice %195 {offsets = [0, 128], sizes = [8, 128], strides = [1, 1]} : vector<8x384xf32> to vector<8x128xf32>
    %206 = arith.addf %204, %205 : vector<8x128xf32>
    %207 = arith.negf %206 : vector<8x128xf32>
    %208 = math.exp %207 : vector<8x128xf32>
    %cst_52 = arith.constant 1.000000e+00 : f32
    %209 = vector.broadcast %cst_52 : f32 to vector<8x128xf32>
    %210 = arith.addf %209, %208 : vector<8x128xf32>
    %211 = arith.divf %209, %210 : vector<8x128xf32>
    %212 = vector.extract_strided_slice %193 {offsets = [0, 256], sizes = [8, 128], strides = [1, 1]} : vector<8x384xf32> to vector<8x128xf32>
    %213 = vector.extract_strided_slice %195 {offsets = [0, 256], sizes = [8, 128], strides = [1, 1]} : vector<8x384xf32> to vector<8x128xf32>
    %214 = vector.broadcast %3 : vector<1x128xf32> to vector<8x128xf32>
    %215 = arith.addf %213, %214 : vector<8x128xf32>
    %216 = arith.mulf %203, %215 : vector<8x128xf32>
    %217 = arith.addf %212, %216 : vector<8x128xf32>
    %218 = math.tanh %217 : vector<8x128xf32>
    %219 = arith.subf %190, %218 : vector<8x128xf32>
    %220 = arith.mulf %211, %219 : vector<8x128xf32>
    %221 = arith.addf %218, %220 : vector<8x128xf32>
    %c7_i32 = arith.constant 7 : i32
    %222 = arith.index_cast %c7_i32 : i32 to index
    %c0_53 = arith.constant 0 : index
    %c0_54 = arith.constant 0 : index
    %223 = vector.load %arg2[%222, %c0_53, %c0_54] : memref<8x8x384xf32, #tpu.memory_space<vmem>>, vector<1x8x384xf32>
    %224 = vector.shape_cast %223 : vector<1x8x384xf32> to vector<8x384xf32>
    %c0_55 = arith.constant 0 : index
    %c0_56 = arith.constant 0 : index
    %225 = vector.load %arg3[%c0_55, %c0_56] : memref<128x384xf32, #tpu.memory_space<vmem>>, vector<128x384xf32>
    %cst_57 = arith.constant dense<0.000000e+00> : vector<8x384xf32>
    %226 = tpu.matmul %221, %225, %cst_57 {dimension_numbers = #tpu.dot_dimension_numbers<[1], [0], [0], [1], [0, 0, 1, 1], [], []>} : vector<8x128xf32>, vector<128x384xf32>, vector<8x384xf32> -> vector<8x384xf32>
    %227 = vector.extract_strided_slice %224 {offsets = [0, 0], sizes = [8, 128], strides = [1, 1]} : vector<8x384xf32> to vector<8x128xf32>
    %228 = vector.extract_strided_slice %226 {offsets = [0, 0], sizes = [8, 128], strides = [1, 1]} : vector<8x384xf32> to vector<8x128xf32>
    %229 = arith.addf %227, %228 : vector<8x128xf32>
    %230 = arith.negf %229 : vector<8x128xf32>
    %231 = math.exp %230 : vector<8x128xf32>
    %cst_58 = arith.constant 1.000000e+00 : f32
    %232 = vector.broadcast %cst_58 : f32 to vector<8x128xf32>
    %233 = arith.addf %232, %231 : vector<8x128xf32>
    %234 = arith.divf %232, %233 : vector<8x128xf32>
    %235 = vector.extract_strided_slice %224 {offsets = [0, 128], sizes = [8, 128], strides = [1, 1]} : vector<8x384xf32> to vector<8x128xf32>
    %236 = vector.extract_strided_slice %226 {offsets = [0, 128], sizes = [8, 128], strides = [1, 1]} : vector<8x384xf32> to vector<8x128xf32>
    %237 = arith.addf %235, %236 : vector<8x128xf32>
    %238 = arith.negf %237 : vector<8x128xf32>
    %239 = math.exp %238 : vector<8x128xf32>
    %cst_59 = arith.constant 1.000000e+00 : f32
    %240 = vector.broadcast %cst_59 : f32 to vector<8x128xf32>
    %241 = arith.addf %240, %239 : vector<8x128xf32>
    %242 = arith.divf %240, %241 : vector<8x128xf32>
    %243 = vector.extract_strided_slice %224 {offsets = [0, 256], sizes = [8, 128], strides = [1, 1]} : vector<8x384xf32> to vector<8x128xf32>
    %244 = vector.extract_strided_slice %226 {offsets = [0, 256], sizes = [8, 128], strides = [1, 1]} : vector<8x384xf32> to vector<8x128xf32>
    %245 = vector.broadcast %3 : vector<1x128xf32> to vector<8x128xf32>
    %246 = arith.addf %244, %245 : vector<8x128xf32>
    %247 = arith.mulf %234, %246 : vector<8x128xf32>
    %248 = arith.addf %243, %247 : vector<8x128xf32>
    %249 = math.tanh %248 : vector<8x128xf32>
    %250 = arith.subf %221, %249 : vector<8x128xf32>
    %251 = arith.mulf %242, %250 : vector<8x128xf32>
    %252 = arith.addf %249, %251 : vector<8x128xf32>
    %c8_i32 = arith.constant 8 : i32
    %c0_60 = arith.constant 0 : index
    %c0_61 = arith.constant 0 : index
    %253 = vector.load %arg6[%c0_60, %c0_61] : memref<8x128xf32, #tpu.memory_space<vmem>>, vector<8x128xf32>
    tpu.vector_store %arg6[%c0_60, %c0_61], %252 {strides = array<i32>} : memref<8x128xf32, #tpu.memory_space<vmem>>, vector<8x128xf32>,
    %c0_62 = arith.constant 0 : index
    %c0_63 = arith.constant 0 : index
    %254 = vector.load %arg5[%c0_62, %c0_63] : memref<8x128xf32, #tpu.memory_space<vmem>>, vector<8x128xf32>
    tpu.vector_store %arg5[%c0_62, %c0_63], %252 {strides = array<i32>} : memref<8x128xf32, #tpu.memory_space<vmem>>, vector<8x128xf32>,
    return
  }
  func.func @transform_0(%arg0: i32, %arg1: i32) -> (i32, i32, i32) {
    %c0_i32 = arith.constant 0 : i32
    %c0_i32_0 = arith.constant 0 : i32
    return %arg1, %arg0, %c0_i32 : i32, i32, i32
  }
  func.func @transform_1(%arg0: i32, %arg1: i32) -> (i32, i32) {
    %c0_i32 = arith.constant 0 : i32
    %c0_i32_0 = arith.constant 0 : i32
    %c0_i32_1 = arith.constant 0 : i32
    return %c0_i32, %c0_i32_0 : i32, i32
  }
  func.func @transform_2(%arg0: i32, %arg1: i32) -> (i32, i32) {
    %c0_i32 = arith.constant 0 : i32
    %c0_i32_0 = arith.constant 0 : i32
    %c0_i32_1 = arith.constant 0 : i32
    return %c0_i32, %c0_i32_0 : i32, i32
  }
  func.func @transform_3(%arg0: i32, %arg1: i32) -> (i32, i32) {
    %c0_i32 = arith.constant 0 : i32
    %c0_i32_0 = arith.constant 0 : i32
    return %arg0, %c0_i32 : i32, i32
  }
}

module attributes {stable_mosaic.version = 11 : i64} {
  func.func @matmul_bias_kernel(%arg0: i32, %arg1: i32, %arg2: i32, %arg3: memref<64x128xf32, #tpu.memory_space<vmem>>, %arg4: memref<128x128xf32, #tpu.memory_space<vmem>>, %arg5: memref<1x128xf32, #tpu.memory_space<vmem>>, %arg6: memref<64x128xf32, #tpu.memory_space<vmem>>, %arg7: memref<64x128xf32, #tpu.memory_space<vmem>>) attributes {dimension_semantics = [#tpu.dimension_semantics<parallel>, #tpu.dimension_semantics<parallel>, #tpu.dimension_semantics<arbitrary>], iteration_bounds = array<i64: 1, 1, 1>, scalar_prefetch = 0 : i64, scratch_operands = 1 : i64, tpu.core_type = #tpu.core_type<tc>, window_params = [{transform_indices = @transform_0, window_bounds = array<i64: 64, 128>}, {transform_indices = @transform_1, window_bounds = array<i64: 128, 128>}, {transform_indices = @transform_2, window_bounds = array<i64: 1, 128>}, {transform_indices = @transform_3, window_bounds = array<i64: 64, 128>}]} {
    %c0_i32 = arith.constant 0 : i32
    %0 = arith.cmpi eq, %arg2, %c0_i32 : i32
    %1 = arith.extui %0 : i1 to i32
    %c0_i32_0 = arith.constant 0 : i32
    %2 = arith.cmpi ne, %1, %c0_i32_0 : i32
    scf.if %2 {
      %cst_10 = arith.constant 0.000000e+00 : f32
      %12 = vector.broadcast %cst_10 : f32 to vector<64x128xf32>
      %c0_11 = arith.constant 0 : index
      %c0_12 = arith.constant 0 : index
      %13 = vector.load %arg7[%c0_11, %c0_12] : memref<64x128xf32, #tpu.memory_space<vmem>>, vector<64x128xf32>
      tpu.vector_store %arg7[%c0_11, %c0_12], %12 {strides = array<i32>} : memref<64x128xf32, #tpu.memory_space<vmem>>, vector<64x128xf32>,
    } else {
    }
    %c0 = arith.constant 0 : index
    %c0_1 = arith.constant 0 : index
    %3 = vector.load %arg7[%c0, %c0_1] : memref<64x128xf32, #tpu.memory_space<vmem>>, vector<64x128xf32>
    %c0_2 = arith.constant 0 : index
    %c0_3 = arith.constant 0 : index
    %4 = vector.load %arg3[%c0_2, %c0_3] : memref<64x128xf32, #tpu.memory_space<vmem>>, vector<64x128xf32>
    %c0_4 = arith.constant 0 : index
    %c0_5 = arith.constant 0 : index
    %5 = vector.load %arg4[%c0_4, %c0_5] : memref<128x128xf32, #tpu.memory_space<vmem>>, vector<128x128xf32>
    %cst = arith.constant dense<0.000000e+00> : vector<64x128xf32>
    %6 = tpu.matmul %4, %5, %cst {dimension_numbers = #tpu.dot_dimension_numbers<[1], [0], [0], [1], [0, 0, 1, 1], [], []>} : vector<64x128xf32>, vector<128x128xf32>, vector<64x128xf32> -> vector<64x128xf32>
    %7 = arith.addf %3, %6 : vector<64x128xf32>
    %c0_6 = arith.constant 0 : index
    %c0_7 = arith.constant 0 : index
    %8 = vector.load %arg7[%c0_6, %c0_7] : memref<64x128xf32, #tpu.memory_space<vmem>>, vector<64x128xf32>
    tpu.vector_store %arg7[%c0_6, %c0_7], %7 {strides = array<i32>} : memref<64x128xf32, #tpu.memory_space<vmem>>, vector<64x128xf32>,
    %c0_i32_8 = arith.constant 0 : i32
    %9 = arith.cmpi eq, %arg2, %c0_i32_8 : i32
    %10 = arith.extui %9 : i1 to i32
    %c0_i32_9 = arith.constant 0 : i32
    %11 = arith.cmpi ne, %10, %c0_i32_9 : i32
    scf.if %11 {
      %c0_10 = arith.constant 0 : index
      %c0_11 = arith.constant 0 : index
      %12 = vector.load %arg7[%c0_10, %c0_11] : memref<64x128xf32, #tpu.memory_space<vmem>>, vector<64x128xf32>
      %c0_12 = arith.constant 0 : index
      %c0_13 = arith.constant 0 : index
      %13 = vector.load %arg5[%c0_12, %c0_13] : memref<1x128xf32, #tpu.memory_space<vmem>>, vector<1x128xf32>
      %14 = vector.broadcast %13 : vector<1x128xf32> to vector<64x128xf32>
      %15 = arith.addf %12, %14 : vector<64x128xf32>
      %c0_14 = arith.constant 0 : index
      %c0_15 = arith.constant 0 : index
      %16 = vector.load %arg6[%c0_14, %c0_15] : memref<64x128xf32, #tpu.memory_space<vmem>>, vector<64x128xf32>
      tpu.vector_store %arg6[%c0_14, %c0_15], %15 {strides = array<i32>} : memref<64x128xf32, #tpu.memory_space<vmem>>, vector<64x128xf32>,
    } else {
    }
    return
  }
  func.func @transform_0(%arg0: i32, %arg1: i32, %arg2: i32) -> (i32, i32) {
    %c0_i32 = arith.constant 0 : i32
    return %arg0, %arg2 : i32, i32
  }
  func.func @transform_1(%arg0: i32, %arg1: i32, %arg2: i32) -> (i32, i32) {
    %c0_i32 = arith.constant 0 : i32
    return %arg2, %arg1 : i32, i32
  }
  func.func @transform_2(%arg0: i32, %arg1: i32, %arg2: i32) -> (i32, i32) {
    %c0_i32 = arith.constant 0 : i32
    %c0_i32_0 = arith.constant 0 : i32
    return %c0_i32, %arg1 : i32, i32
  }
  func.func @transform_3(%arg0: i32, %arg1: i32, %arg2: i32) -> (i32, i32) {
    %c0_i32 = arith.constant 0 : i32
    return %arg0, %arg1 : i32, i32
  }
}

</mosaic_0001>

<llo_original>
// kernel: encoder_decoder_forward.9
$region0: #{encoder_decoder_forward.9}
  #allocation0 [shape = 'u32[]', space=smem, size = 0x4, offset = 0x4, fixed_abs, tag = 'smem constant byte address 0x4 - core index']
  #allocation1 [shape = 'u32[144,128]{1,0:T(1,128)}', space=vmem, size = 0x12000, scoped, tag = 'internal scratch']
  #allocation2 [shape = 'f32[64,128]{1,0:T(8,128)}', space=vmem, size = 0x8000, scoped, tag = 'scratch operand']
  %s0 = inlined_call_operand.vmem [shape: f32[64,128], index: 0, kind: input, shape index: {}]
  %s1 = inlined_call_operand.vmem [shape: f32[128,128], index: 1, kind: input, shape index: {}]
  %s2 = inlined_call_operand.vmem [shape: f32[1,128], index: 2, kind: input, shape index: {}]
  %s3 = inlined_call_operand.vmem [shape: f32[64,128], index: 3, kind: output, shape index: {}]
  %s4 = sld [smem:[#allocation0]]
  $region30: #{encoder_decoder_forward.9} parent=0
    _
  %s6 = ssub.s32 1, %s4
  %s7 = scalar_select 0, %s6, %s4
  // Predicated region
  $region2: #{encoder_decoder_forward.9} parent=0 // pred_check
    _
  $region3: #{encoder_decoder_forward.9} parent=0 // pred_check_branch
    %9 = sbr.rel (0) target = $region5
  $region4: #{encoder_decoder_forward.9} parent=0 // pred_region
    _
  $region5: #{encoder_decoder_forward.9} parent=0 // pred_fallthru
    _
  // Predicated region
  $region6: #{encoder_decoder_forward.9} parent=0 // pred_check
    _
  $region7: #{encoder_decoder_forward.9} parent=0 // pred_check_branch
    %11 = sbr.rel (0) target = $region9
  $region8: #{encoder_decoder_forward.9} parent=0 // pred_region
    _
  $region9: #{encoder_decoder_forward.9} parent=0 // pred_fallthru
    _
  // Predicated region
  $region10: #{encoder_decoder_forward.9} parent=0 // pred_check
    _
  $region11: #{encoder_decoder_forward.9} parent=0 // pred_check_branch
    %13 = sbr.rel (0) target = $region13
  $region12: #{encoder_decoder_forward.9} parent=0 // pred_region
    _
  $region13: #{encoder_decoder_forward.9} parent=0 // pred_fallthru
    _
  %p14 = scmp.eq.s32.totalorder 0, 0
  // Predicated region
  $region14: #{encoder_decoder_forward.9} parent=0 // pred_check
    %p15 = pneg %p14
  $region15: #{encoder_decoder_forward.9} parent=0 // pred_check_branch
    %17 = sbr.rel (%p15) target = $region17
  $region16: #{encoder_decoder_forward.9} parent=0 // pred_region
    %18 = vst [vmem:[#allocation2] sm:$0xff] 0.0
    %19 = vst [vmem:[#allocation2 + $0x8] sm:$0xff] 0.0
    %20 = vst [vmem:[#allocation2 + $0x10] sm:$0xff] 0.0
    %21 = vst [vmem:[#allocation2 + $0x18] sm:$0xff] 0.0
    %22 = vst [vmem:[#allocation2 + $0x20] sm:$0xff] 0.0
    %23 = vst [vmem:[#allocation2 + $0x28] sm:$0xff] 0.0
    %24 = vst [vmem:[#allocation2 + $0x30] sm:$0xff] 0.0
    %25 = vst [vmem:[#allocation2 + $0x38] sm:$0xff] 0.0
  $region17: #{encoder_decoder_forward.9} parent=0 // pred_fallthru
    _
  %v26 = vld [vmem:[#allocation2] sm:$0xff]
  %v27 = vld [vmem:[#allocation2 + $0x8] sm:$0xff]
  %v28 = vld [vmem:[#allocation2 + $0x10] sm:$0xff]
  %v29 = vld [vmem:[#allocation2 + $0x18] sm:$0xff]
  %v30 = vld [vmem:[#allocation2 + $0x20] sm:$0xff]
  %v31 = vld [vmem:[#allocation2 + $0x28] sm:$0xff]
  %v32 = vld [vmem:[#allocation2 + $0x30] sm:$0xff]
  %v33 = vld [vmem:[#allocation2 + $0x38] sm:$0xff]
  %v34 = vld [vmem:[%s0] sm:$0xff]
  %v35 = vld [vmem:[%s0 + $0x8] sm:$0xff]
  %v36 = vld [vmem:[%s0 + $0x10] sm:$0xff]
  %v37 = vld [vmem:[%s0 + $0x18] sm:$0xff]
  %v38 = vld [vmem:[%s0 + $0x20] sm:$0xff]
  %v39 = vld [vmem:[%s0 + $0x28] sm:$0xff]
  %v40 = vld [vmem:[%s0 + $0x30] sm:$0xff]
  %v41 = vld [vmem:[%s0 + $0x38] sm:$0xff]
  %v42 = vld [vmem:[%s1] sm:$0xff]
  %v43 = vld [vmem:[%s1 + $0x8] sm:$0xff]
  %v44 = vld [vmem:[%s1 + $0x10] sm:$0xff]
  %v45 = vld [vmem:[%s1 + $0x18] sm:$0xff]
  %v46 = vld [vmem:[%s1 + $0x20] sm:$0xff]
  %v47 = vld [vmem:[%s1 + $0x28] sm:$0xff]
  %v48 = vld [vmem:[%s1 + $0x30] sm:$0xff]
  %v49 = vld [vmem:[%s1 + $0x38] sm:$0xff]
  %v50 = vld [vmem:[%s1 + $0x40] sm:$0xff]
  %v51 = vld [vmem:[%s1 + $0x48] sm:$0xff]
  %v52 = vld [vmem:[%s1 + $0x50] sm:$0xff]
  %v53 = vld [vmem:[%s1 + $0x58] sm:$0xff]
  %v54 = vld [vmem:[%s1 + $0x60] sm:$0xff]
  %v55 = vld [vmem:[%s1 + $0x68] sm:$0xff]
  %v56 = vld [vmem:[%s1 + $0x70] sm:$0xff]
  %v57 = vld [vmem:[%s1 + $0x78] sm:$0xff]
  %58 = vmatprep.subr.mxu0 0.0
  %59 = vmatpush1.msra.mxu0 %v57
  %60 = vmatprep.subr.mxu0 0.0
  %61 = vmatpush1.msra.mxu0 %v56
  %62 = vmatprep.subr.mxu0 0.0
  %63 = vmatpush1.msra.mxu0 %v55
  %64 = vmatprep.subr.mxu0 0.0
  %65 = vmatpush1.msra.mxu0 %v54
  %66 = vmatprep.subr.mxu0 0.0
  %67 = vmatpush1.msra.mxu0 %v53
  %68 = vmatprep.subr.mxu0 0.0
  %69 = vmatpush1.msra.mxu0 %v52
  %70 = vmatprep.subr.mxu0 0.0
  %71 = vmatpush1.msra.mxu0 %v51
  %72 = vmatprep.subr.mxu0 0.0
  %73 = vmatpush1.msra.mxu0 %v50
  %74 = vmatprep.subr.mxu0 0.0
  %75 = vmatpush1.msra.mxu0 %v49
  %76 = vmatprep.subr.mxu0 0.0
  %77 = vmatpush1.msra.mxu0 %v48
  %78 = vmatprep.subr.mxu0 0.0
  %79 = vmatpush1.msra.mxu0 %v47
  %80 = vmatprep.subr.mxu0 0.0
  %81 = vmatpush1.msra.mxu0 %v46
  %82 = vmatprep.subr.mxu0 0.0
  %83 = vmatpush1.msra.mxu0 %v45
  %84 = vmatprep.subr.mxu0 0.0
  %85 = vmatpush1.msra.mxu0 %v44
  %86 = vmatprep.subr.mxu0 0.0
  %87 = vmatpush1.msra.mxu0 %v43
  %88 = vmatprep.subr.mxu0 0.0
  %89 = vmatpush1.msra.mxu0 %v42
  %90 = vmatprep.subr.mxu0 0.0
  %91 = vmatpush2.msra.mxu0 0.0
  %92 = vmatprep.subr.mxu0 0.0
  %93 = vmatpush2.msra.mxu0 0.0
  %94 = vmatprep.subr.mxu0 0.0
  %95 = vmatpush2.msra.mxu0 0.0
  %96 = vmatprep.subr.mxu0 0.0
  %97 = vmatpush2.msra.mxu0 0.0
  %98 = vmatprep.subr.mxu0 0.0
  %99 = vmatpush2.msra.mxu0 0.0
  %100 = vmatprep.subr.mxu0 0.0
  %101 = vmatpush2.msra.mxu0 0.0
  %102 = vmatprep.subr.mxu0 0.0
  %103 = vmatpush2.msra.mxu0 0.0
  %104 = vmatprep.subr.mxu0 0.0
  %105 = vmatpush2.msra.mxu0 0.0
  %106 = vmatprep.subr.mxu0 0.0
  %107 = vmatpush2.msra.mxu0 0.0
  %108 = vmatprep.subr.mxu0 0.0
  %109 = vmatpush2.msra.mxu0 0.0
  %110 = vmatprep.subr.mxu0 0.0
  %111 = vmatpush2.msra.mxu0 0.0
  %112 = vmatprep.subr.mxu0 0.0
  %113 = vmatpush2.msra.mxu0 0.0
  %114 = vmatprep.subr.mxu0 0.0
  %115 = vmatpush2.msra.mxu0 0.0
  %116 = vmatprep.subr.mxu0 0.0
  %117 = vmatpush2.msra.mxu0 0.0
  %118 = vmatprep.subr.mxu0 0.0
  %119 = vmatpush2.msra.mxu0 0.0
  %120 = vmatprep.subr.mxu0 0.0
  %121 = vmatpush2.msra.mxu0 0.0
  %122 = vmatprep.mubr.f32.mxu0 0.0
  %123 = vmatmul.mubr.f32.gmra.mxu0 %v34
  %v124 = vpop.f32.mrf.mxu0
  %v125 = vadd.f32 0.0, %v124
  %v126 = vpop.f32.mrf.mxu0
  %127 = vmatprep.mubr.f32.mxu0 0.0
  %128 = vmatmul.mubr.f32.gmra.mxu0 %v35
  %v129 = vpop.f32.mrf.mxu0
  %v130 = vadd.f32 0.0, %v129
  %v131 = vpop.f32.mrf.mxu0
  %132 = vmatprep.mubr.f32.mxu0 0.0
  %133 = vmatmul.mubr.f32.gmra.mxu0 %v36
  %v134 = vpop.f32.mrf.mxu0
  %v135 = vadd.f32 0.0, %v134
  %v136 = vpop.f32.mrf.mxu0
  %137 = vmatprep.mubr.f32.mxu0 0.0
  %138 = vmatmul.mubr.f32.gmra.mxu0 %v37
  %v139 = vpop.f32.mrf.mxu0
  %v140 = vadd.f32 0.0, %v139
  %v141 = vpop.f32.mrf.mxu0
  %142 = vmatprep.mubr.f32.mxu0 0.0
  %143 = vmatmul.mubr.f32.gmra.mxu0 %v38
  %v144 = vpop.f32.mrf.mxu0
  %v145 = vadd.f32 0.0, %v144
  %v146 = vpop.f32.mrf.mxu0
  %147 = vmatprep.mubr.f32.mxu0 0.0
  %148 = vmatmul.mubr.f32.gmra.mxu0 %v39
  %v149 = vpop.f32.mrf.mxu0
  %v150 = vadd.f32 0.0, %v149
  %v151 = vpop.f32.mrf.mxu0
  %152 = vmatprep.mubr.f32.mxu0 0.0
  %153 = vmatmul.mubr.f32.gmra.mxu0 %v40
  %v154 = vpop.f32.mrf.mxu0
  %v155 = vadd.f32 0.0, %v154
  %v156 = vpop.f32.mrf.mxu0
  %157 = vmatprep.mubr.f32.mxu0 0.0
  %158 = vmatmul.mubr.f32.gmra.mxu0 %v41
  %v159 = vpop.f32.mrf.mxu0
  %v160 = vadd.f32 0.0, %v159
  %v161 = vpop.f32.mrf.mxu0
  %162 = vdwg.mxu0
  %v163 = vadd.f32 %v26, %v125
  %v164 = vadd.f32 %v27, %v130
  %v165 = vadd.f32 %v28, %v135
  %v166 = vadd.f32 %v29, %v140
  %v167 = vadd.f32 %v30, %v145
  %v168 = vadd.f32 %v31, %v150
  %v169 = vadd.f32 %v32, %v155
  %v170 = vadd.f32 %v33, %v160
  %171 = vst [vmem:[#allocation2] sm:$0xff] %v163
  %172 = vst [vmem:[#allocation2 + $0x8] sm:$0xff] %v164
  %173 = vst [vmem:[#allocation2 + $0x10] sm:$0xff] %v165
  %174 = vst [vmem:[#allocation2 + $0x18] sm:$0xff] %v166
  %175 = vst [vmem:[#allocation2 + $0x20] sm:$0xff] %v167
  %176 = vst [vmem:[#allocation2 + $0x28] sm:$0xff] %v168
  %177 = vst [vmem:[#allocation2 + $0x30] sm:$0xff] %v169
  %178 = vst [vmem:[#allocation2 + $0x38] sm:$0xff] %v170
  // Predicated region
  $region18: #{encoder_decoder_forward.9} parent=0 // pred_check
    %p179 = pneg %p14
  $region19: #{encoder_decoder_forward.9} parent=0 // pred_check_branch
    %181 = sbr.rel (%p179) target = $region21
  $region20: #{encoder_decoder_forward.9} parent=0 // pred_region
    %v182 = vld [vmem:[#allocation2] sm:$0xff]
    %v183 = vld [vmem:[#allocation2 + $0x8] sm:$0xff]
    %v184 = vld [vmem:[#allocation2 + $0x10] sm:$0xff]
    %v185 = vld [vmem:[#allocation2 + $0x18] sm:$0xff]
    %v186 = vld [vmem:[#allocation2 + $0x20] sm:$0xff]
    %v187 = vld [vmem:[#allocation2 + $0x28] sm:$0xff]
    %v188 = vld [vmem:[#allocation2 + $0x30] sm:$0xff]
    %v189 = vld [vmem:[#allocation2 + $0x38] sm:$0xff]
    %v190 = vld [vmem:[%s2] sm:$0x1]
    %v192 = vlaneseq
    %v193 = vshrl.u32 %v192, 7
    %v194 = vsub.s32 0, %v193
    %v195 = vrot.slane %v190, %v194
    %v197 = vadd.f32 %v182, %v195
    %v198 = vadd.f32 %v183, %v195
    %v199 = vadd.f32 %v184, %v195
    %v200 = vadd.f32 %v185, %v195
    %v201 = vadd.f32 %v186, %v195
    %v202 = vadd.f32 %v187, %v195
    %v203 = vadd.f32 %v188, %v195
    %v204 = vadd.f32 %v189, %v195
    %205 = vst [vmem:[%s3] sm:$0xff] %v197
    %206 = vst [vmem:[%s3 + $0x8] sm:$0xff] %v198
    %207 = vst [vmem:[%s3 + $0x10] sm:$0xff] %v199
    %208 = vst [vmem:[%s3 + $0x18] sm:$0xff] %v200
    %209 = vst [vmem:[%s3 + $0x20] sm:$0xff] %v201
    %210 = vst [vmem:[%s3 + $0x28] sm:$0xff] %v202
    %211 = vst [vmem:[%s3 + $0x30] sm:$0xff] %v203
    %212 = vst [vmem:[%s3 + $0x38] sm:$0xff] %v204
  $region21: #{encoder_decoder_forward.9} parent=0 // pred_fallthru
    _
  // Predicated region
  $region22: #{encoder_decoder_forward.9} parent=0 // pred_check
    _
  $region23: #{encoder_decoder_forward.9} parent=0 // pred_check_branch
    %214 = sbr.rel (0) target = $region25
  $region24: #{encoder_decoder_forward.9} parent=0 // pred_region
    _
  $region25: #{encoder_decoder_forward.9} parent=0 // pred_fallthru
    _
  // Predicated region
  $region26: #{encoder_decoder_forward.9} parent=0 // pred_check
    _
  $region27: #{encoder_decoder_forward.9} parent=0 // pred_check_branch
    %216 = sbr.rel (0) target = $region29
  $region28: #{encoder_decoder_forward.9} parent=0 // pred_region
    _
  $region29: #{encoder_decoder_forward.9} parent=0 // pred_fallthru
    _

// kernel: encoder_decoder_forward.5
$region0: #{encoder_decoder_forward.5}
  #allocation0 [shape = 'u32[]', space=smem, size = 0x4, offset = 0x4, fixed_abs, tag = 'smem constant byte address 0x4 - core index']
  #allocation1 [shape = 'u32[144,128]{1,0:T(1,128)}', space=vmem, size = 0x12000, scoped, tag = 'internal scratch']
  #allocation2 [shape = 'f32[64,384]{1,0:T(8,128)}', space=vmem, size = 0x18000, scoped, tag = 'scratch operand']
  %s0 = inlined_call_operand.vmem [shape: f32[64,16], index: 0, kind: input, shape index: {}]
  %s1 = inlined_call_operand.vmem [shape: f32[16,384], index: 1, kind: input, shape index: {}]
  %s2 = inlined_call_operand.vmem [shape: f32[1,384], index: 2, kind: input, shape index: {}]
  %s3 = inlined_call_operand.vmem [shape: f32[64,384], index: 3, kind: output, shape index: {}]
  %s4 = sld [smem:[#allocation0]]
  $region30: #{encoder_decoder_forward.5} parent=0
    _
  %s6 = ssub.s32 1, %s4
  %s7 = scalar_select 0, %s6, %s4
  // Predicated region
  $region2: #{encoder_decoder_forward.5} parent=0 // pred_check
    _
  $region3: #{encoder_decoder_forward.5} parent=0 // pred_check_branch
    %9 = sbr.rel (0) target = $region5
  $region4: #{encoder_decoder_forward.5} parent=0 // pred_region
    _
  $region5: #{encoder_decoder_forward.5} parent=0 // pred_fallthru
    _
  // Predicated region
  $region6: #{encoder_decoder_forward.5} parent=0 // pred_check
    _
  $region7: #{encoder_decoder_forward.5} parent=0 // pred_check_branch
    %11 = sbr.rel (0) target = $region9
  $region8: #{encoder_decoder_forward.5} parent=0 // pred_region
    _
  $region9: #{encoder_decoder_forward.5} parent=0 // pred_fallthru
    _
  // Predicated region
  $region10: #{encoder_decoder_forward.5} parent=0 // pred_check
    _
  $region11: #{encoder_decoder_forward.5} parent=0 // pred_check_branch
    %13 = sbr.rel (0) target = $region13
  $region12: #{encoder_decoder_forward.5} parent=0 // pred_region
    _
  $region13: #{encoder_decoder_forward.5} parent=0 // pred_fallthru
    _
  %p14 = scmp.eq.s32.totalorder 0, 0
  // Predicated region
  $region14: #{encoder_decoder_forward.5} parent=0 // pred_check
    %p15 = pneg %p14
  $region15: #{encoder_decoder_forward.5} parent=0 // pred_check_branch
    %17 = sbr.rel (%p15) target = $region17
  $region16: #{encoder_decoder_forward.5} parent=0 // pred_region
    %18 = vst [vmem:[#allocation2] sm:$0xff] 0.0
    %19 = vst [vmem:[#allocation2 + $0x8] sm:$0xff] 0.0
    %20 = vst [vmem:[#allocation2 + $0x10] sm:$0xff] 0.0
    %21 = vst [vmem:[#allocation2 + $0x18] sm:$0xff] 0.0
    %22 = vst [vmem:[#allocation2 + $0x20] sm:$0xff] 0.0
    %23 = vst [vmem:[#allocation2 + $0x28] sm:$0xff] 0.0
    %24 = vst [vmem:[#allocation2 + $0x30] sm:$0xff] 0.0
    %25 = vst [vmem:[#allocation2 + $0x38] sm:$0xff] 0.0
    %26 = vst [vmem:[#allocation2 + $0x40] sm:$0xff] 0.0
    %27 = vst [vmem:[#allocation2 + $0x48] sm:$0xff] 0.0
    %28 = vst [vmem:[#allocation2 + $0x50] sm:$0xff] 0.0
    %29 = vst [vmem:[#allocation2 + $0x58] sm:$0xff] 0.0
    %30 = vst [vmem:[#allocation2 + $0x60] sm:$0xff] 0.0
    %31 = vst [vmem:[#allocation2 + $0x68] sm:$0xff] 0.0
    %32 = vst [vmem:[#allocation2 + $0x70] sm:$0xff] 0.0
    %33 = vst [vmem:[#allocation2 + $0x78] sm:$0xff] 0.0
    %34 = vst [vmem:[#allocation2 + $0x80] sm:$0xff] 0.0
    %35 = vst [vmem:[#allocation2 + $0x88] sm:$0xff] 0.0
    %36 = vst [vmem:[#allocation2 + $0x90] sm:$0xff] 0.0
    %37 = vst [vmem:[#allocation2 + $0x98] sm:$0xff] 0.0
    %38 = vst [vmem:[#allocation2 + $0xa0] sm:$0xff] 0.0
    %39 = vst [vmem:[#allocation2 + $0xa8] sm:$0xff] 0.0
    %40 = vst [vmem:[#allocation2 + $0xb0] sm:$0xff] 0.0
    %41 = vst [vmem:[#allocation2 + $0xb8] sm:$0xff] 0.0
  $region17: #{encoder_decoder_forward.5} parent=0 // pred_fallthru
    _
  %v42 = vld [vmem:[#allocation2] sm:$0xff]
  %v43 = vld [vmem:[#allocation2 + $0x8] sm:$0xff]
  %v44 = vld [vmem:[#allocation2 + $0x10] sm:$0xff]
  %v45 = vld [vmem:[#allocation2 + $0x18] sm:$0xff]
  %v46 = vld [vmem:[#allocation2 + $0x20] sm:$0xff]
  %v47 = vld [vmem:[#allocation2 + $0x28] sm:$0xff]
  %v48 = vld [vmem:[#allocation2 + $0x30] sm:$0xff]
  %v49 = vld [vmem:[#allocation2 + $0x38] sm:$0xff]
  %v50 = vld [vmem:[#allocation2 + $0x40] sm:$0xff]
  %v51 = vld [vmem:[#allocation2 + $0x48] sm:$0xff]
  %v52 = vld [vmem:[#allocation2 + $0x50] sm:$0xff]
  %v53 = vld [vmem:[#allocation2 + $0x58] sm:$0xff]
  %v54 = vld [vmem:[#allocation2 + $0x60] sm:$0xff]
  %v55 = vld [vmem:[#allocation2 + $0x68] sm:$0xff]
  %v56 = vld [vmem:[#allocation2 + $0x70] sm:$0xff]
  %v57 = vld [vmem:[#allocation2 + $0x78] sm:$0xff]
  %v58 = vld [vmem:[#allocation2 + $0x80] sm:$0xff]
  %v59 = vld [vmem:[#allocation2 + $0x88] sm:$0xff]
  %v60 = vld [vmem:[#allocation2 + $0x90] sm:$0xff]
  %v61 = vld [vmem:[#allocation2 + $0x98] sm:$0xff]
  %v62 = vld [vmem:[#allocation2 + $0xa0] sm:$0xff]
  %v63 = vld [vmem:[#allocation2 + $0xa8] sm:$0xff]
  %v64 = vld [vmem:[#allocation2 + $0xb0] sm:$0xff]
  %v65 = vld [vmem:[#allocation2 + $0xb8] sm:$0xff]
  %v66 = vld [vmem:[%s0] sm:$0xff]
  %v67 = vld [vmem:[%s0 + $0x8] sm:$0xff]
  %v68 = vld [vmem:[%s0 + $0x10] sm:$0xff]
  %v69 = vld [vmem:[%s0 + $0x18] sm:$0xff]
  %v70 = vld [vmem:[%s0 + $0x20] sm:$0xff]
  %v71 = vld [vmem:[%s0 + $0x28] sm:$0xff]
  %v72 = vld [vmem:[%s0 + $0x30] sm:$0xff]
  %v73 = vld [vmem:[%s0 + $0x38] sm:$0xff]
  %v74 = vld [vmem:[%s1] sm:$0xff]
  %v75 = vld [vmem:[%s1 + $0x8] sm:$0xff]
  %v76 = vld [vmem:[%s1 + $0x10] sm:$0xff]
  %v77 = vld [vmem:[%s1 + $0x18] sm:$0xff]
  %v78 = vld [vmem:[%s1 + $0x20] sm:$0xff]
  %v79 = vld [vmem:[%s1 + $0x28] sm:$0xff]
  %vm80 = vcmask 130048
  %v82 = vsel %vm80, %v66, 0
  %v85 = vsel %vm80, %v67, 0
  %v88 = vsel %vm80, %v68, 0
  %v91 = vsel %vm80, %v69, 0
  %v94 = vsel %vm80, %v70, 0
  %v97 = vsel %vm80, %v71, 0
  %v100 = vsel %vm80, %v72, 0
  %v103 = vsel %vm80, %v73, 0
  %105 = vmatprep.subr.mxu0 0.0
  %106 = vmatpush1.msra.mxu0 0.0
  %107 = vmatprep.subr.mxu0 0.0
  %108 = vmatpush1.msra.mxu0 0.0
  %109 = vmatprep.subr.mxu0 0.0
  %110 = vmatpush1.msra.mxu0 0.0
  %111 = vmatprep.subr.mxu0 0.0
  %112 = vmatpush1.msra.mxu0 0.0
  %113 = vmatprep.subr.mxu0 0.0
  %114 = vmatpush1.msra.mxu0 0.0
  %115 = vmatprep.subr.mxu0 0.0
  %116 = vmatpush1.msra.mxu0 0.0
  %117 = vmatprep.subr.mxu0 0.0
  %118 = vmatpush1.msra.mxu0 0.0
  %119 = vmatprep.subr.mxu0 0.0
  %120 = vmatpush1.msra.mxu0 0.0
  %121 = vmatprep.subr.mxu0 0.0
  %122 = vmatpush1.msra.mxu0 0.0
  %123 = vmatprep.subr.mxu0 0.0
  %124 = vmatpush1.msra.mxu0 0.0
  %125 = vmatprep.subr.mxu0 0.0
  %126 = vmatpush1.msra.mxu0 0.0
  %127 = vmatprep.subr.mxu0 0.0
  %128 = vmatpush1.msra.mxu0 0.0
  %129 = vmatprep.subr.mxu0 0.0
  %130 = vmatpush1.msra.mxu0 0.0
  %131 = vmatprep.subr.mxu0 0.0
  %132 = vmatpush1.msra.mxu0 0.0
  %133 = vmatprep.subr.mxu0 %v78
  %134 = vmatpush1.msra.mxu0 %v77
  %135 = vmatprep.subr.mxu0 %v75
  %136 = vmatpush1.msra.mxu0 %v74
  %137 = vmatprep.subr.mxu0 0.0
  %138 = vmatpush2.msra.mxu0 0.0
  %139 = vmatprep.subr.mxu0 0.0
  %140 = vmatpush2.msra.mxu0 0.0
  %141 = vmatprep.subr.mxu0 0.0
  %142 = vmatpush2.msra.mxu0 0.0
  %143 = vmatprep.subr.mxu0 0.0
  %144 = vmatpush2.msra.mxu0 0.0
  %145 = vmatprep.subr.mxu0 0.0
  %146 = vmatpush2.msra.mxu0 0.0
  %147 = vmatprep.subr.mxu0 0.0
  %148 = vmatpush2.msra.mxu0 0.0
  %149 = vmatprep.subr.mxu0 0.0
  %150 = vmatpush2.msra.mxu0 0.0
  %151 = vmatprep.subr.mxu0 0.0
  %152 = vmatpush2.msra.mxu0 0.0
  %153 = vmatprep.subr.mxu0 0.0
  %154 = vmatpush2.msra.mxu0 0.0
  %155 = vmatprep.subr.mxu0 0.0
  %156 = vmatpush2.msra.mxu0 0.0
  %157 = vmatprep.subr.mxu0 0.0
  %158 = vmatpush2.msra.mxu0 0.0
  %159 = vmatprep.subr.mxu0 0.0
  %160 = vmatpush2.msra.mxu0 0.0
  %161 = vmatprep.subr.mxu0 0.0
  %162 = vmatpush2.msra.mxu0 0.0
  %163 = vmatprep.subr.mxu0 0.0
  %164 = vmatpush2.msra.mxu0 0.0
  %165 = vmatprep.subr.mxu0 0.0
  %166 = vmatpush2.msra.mxu0 0.0
  %167 = vmatprep.subr.mxu0 0.0
  %168 = vmatpush2.msra.mxu0 0.0
  %169 = vmatprep.mubr.f32.mxu0 0.0
  %170 = vmatmul.mubr.f32.gmra.mxu0 %v82
  %v171 = vpop.f32.mrf.mxu0
  %v172 = vadd.f32 0.0, %v171
  %v173 = vpop.f32.mrf.mxu0
  %v174 = vadd.f32 0.0, %v173
  %175 = vmatprep.mubr.f32.mxu0 0.0
  %176 = vmatmul.mubr.f32.gmra.mxu0 %v85
  %v177 = vpop.f32.mrf.mxu0
  %v178 = vadd.f32 0.0, %v177
  %v179 = vpop.f32.mrf.mxu0
  %v180 = vadd.f32 0.0, %v179
  %181 = vmatprep.mubr.f32.mxu0 0.0
  %182 = vmatmul.mubr.f32.gmra.mxu0 %v88
  %v183 = vpop.f32.mrf.mxu0
  %v184 = vadd.f32 0.0, %v183
  %v185 = vpop.f32.mrf.mxu0
  %v186 = vadd.f32 0.0, %v185
  %187 = vmatprep.mubr.f32.mxu0 0.0
  %188 = vmatmul.mubr.f32.gmra.mxu0 %v91
  %v189 = vpop.f32.mrf.mxu0
  %v190 = vadd.f32 0.0, %v189
  %v191 = vpop.f32.mrf.mxu0
  %v192 = vadd.f32 0.0, %v191
  %193 = vmatprep.mubr.f32.mxu0 0.0
  %194 = vmatmul.mubr.f32.gmra.mxu0 %v94
  %v195 = vpop.f32.mrf.mxu0
  %v196 = vadd.f32 0.0, %v195
  %v197 = vpop.f32.mrf.mxu0
  %v198 = vadd.f32 0.0, %v197
  %199 = vmatprep.mubr.f32.mxu0 0.0
  %200 = vmatmul.mubr.f32.gmra.mxu0 %v97
  %v201 = vpop.f32.mrf.mxu0
  %v202 = vadd.f32 0.0, %v201
  %v203 = vpop.f32.mrf.mxu0
  %v204 = vadd.f32 0.0, %v203
  %205 = vmatprep.mubr.f32.mxu0 0.0
  %206 = vmatmul.mubr.f32.gmra.mxu0 %v100
  %v207 = vpop.f32.mrf.mxu0
  %v208 = vadd.f32 0.0, %v207
  %v209 = vpop.f32.mrf.mxu0
  %v210 = vadd.f32 0.0, %v209
  %211 = vmatprep.mubr.f32.mxu0 0.0
  %212 = vmatmul.mubr.f32.gmra.mxu0 %v103
  %v213 = vpop.f32.mrf.mxu0
  %v214 = vadd.f32 0.0, %v213
  %v215 = vpop.f32.mrf.mxu0
  %v216 = vadd.f32 0.0, %v215
  %217 = vdwg.mxu0
  %218 = vmatprep.subr.mxu0 0.0
  %219 = vmatpush1.msra.mxu0 0.0
  %220 = vmatprep.subr.mxu0 0.0
  %221 = vmatpush1.msra.mxu0 0.0
  %222 = vmatprep.subr.mxu0 0.0
  %223 = vmatpush1.msra.mxu0 0.0
  %224 = vmatprep.subr.mxu0 0.0
  %225 = vmatpush1.msra.mxu0 0.0
  %226 = vmatprep.subr.mxu0 0.0
  %227 = vmatpush1.msra.mxu0 0.0
  %228 = vmatprep.subr.mxu0 0.0
  %229 = vmatpush1.msra.mxu0 0.0
  %230 = vmatprep.subr.mxu0 0.0
  %231 = vmatpush1.msra.mxu0 0.0
  %232 = vmatprep.subr.mxu0 0.0
  %233 = vmatpush1.msra.mxu0 0.0
  %234 = vmatprep.subr.mxu0 0.0
  %235 = vmatpush1.msra.mxu0 0.0
  %236 = vmatprep.subr.mxu0 0.0
  %237 = vmatpush1.msra.mxu0 0.0
  %238 = vmatprep.subr.mxu0 0.0
  %239 = vmatpush1.msra.mxu0 0.0
  %240 = vmatprep.subr.mxu0 0.0
  %241 = vmatpush1.msra.mxu0 0.0
  %242 = vmatprep.subr.mxu0 0.0
  %243 = vmatpush1.msra.mxu0 0.0
  %244 = vmatprep.subr.mxu0 0.0
  %245 = vmatpush1.msra.mxu0 0.0
  %246 = vmatprep.subr.mxu0 0.0
  %247 = vmatpush1.msra.mxu0 %v79
  %248 = vmatprep.subr.mxu0 0.0
  %249 = vmatpush1.msra.mxu0 %v76
  %250 = vmatprep.subr.mxu0 0.0
  %251 = vmatpush2.msra.mxu0 0.0
  %252 = vmatprep.subr.mxu0 0.0
  %253 = vmatpush2.msra.mxu0 0.0
  %254 = vmatprep.subr.mxu0 0.0
  %255 = vmatpush2.msra.mxu0 0.0
  %256 = vmatprep.subr.mxu0 0.0
  %257 = vmatpush2.msra.mxu0 0.0
  %258 = vmatprep.subr.mxu0 0.0
  %259 = vmatpush2.msra.mxu0 0.0
  %260 = vmatprep.subr.mxu0 0.0
  %261 = vmatpush2.msra.mxu0 0.0
  %262 = vmatprep.subr.mxu0 0.0
  %263 = vmatpush2.msra.mxu0 0.0
  %264 = vmatprep.subr.mxu0 0.0
  %265 = vmatpush2.msra.mxu0 0.0
  %266 = vmatprep.subr.mxu0 0.0
  %267 = vmatpush2.msra.mxu0 0.0
  %268 = vmatprep.subr.mxu0 0.0
  %269 = vmatpush2.msra.mxu0 0.0
  %270 = vmatprep.subr.mxu0 0.0
  %271 = vmatpush2.msra.mxu0 0.0
  %272 = vmatprep.subr.mxu0 0.0
  %273 = vmatpush2.msra.mxu0 0.0
  %274 = vmatprep.subr.mxu0 0.0
  %275 = vmatpush2.msra.mxu0 0.0
  %276 = vmatprep.subr.mxu0 0.0
  %277 = vmatpush2.msra.mxu0 0.0
  %278 = vmatprep.subr.mxu0 0.0
  %279 = vmatpush2.msra.mxu0 0.0
  %280 = vmatprep.subr.mxu0 0.0
  %281 = vmatpush2.msra.mxu0 0.0
  %282 = vmatprep.mubr.f32.mxu0 0.0
  %283 = vmatmul.mubr.f32.gmra.mxu0 %v82
  %v284 = vpop.f32.mrf.mxu0
  %v285 = vadd.f32 0.0, %v284
  %v286 = vpop.f32.mrf.mxu0
  %287 = vmatprep.mubr.f32.mxu0 0.0
  %288 = vmatmul.mubr.f32.gmra.mxu0 %v85
  %v289 = vpop.f32.mrf.mxu0
  %v290 = vadd.f32 0.0, %v289
  %v291 = vpop.f32.mrf.mxu0
  %292 = vmatprep.mubr.f32.mxu0 0.0
  %293 = vmatmul.mubr.f32.gmra.mxu0 %v88
  %v294 = vpop.f32.mrf.mxu0
  %v295 = vadd.f32 0.0, %v294
  %v296 = vpop.f32.mrf.mxu0
  %297 = vmatprep.mubr.f32.mxu0 0.0
  %298 = vmatmul.mubr.f32.gmra.mxu0 %v91
  %v299 = vpop.f32.mrf.mxu0
  %v300 = vadd.f32 0.0, %v299
  %v301 = vpop.f32.mrf.mxu0
  %302 = vmatprep.mubr.f32.mxu0 0.0
  %303 = vmatmul.mubr.f32.gmra.mxu0 %v94
  %v304 = vpop.f32.mrf.mxu0
  %v305 = vadd.f32 0.0, %v304
  %v306 = vpop.f32.mrf.mxu0
  %307 = vmatprep.mubr.f32.mxu0 0.0
  %308 = vmatmul.mubr.f32.gmra.mxu0 %v97
  %v309 = vpop.f32.mrf.mxu0
  %v310 = vadd.f32 0.0, %v309
  %v311 = vpop.f32.mrf.mxu0
  %312 = vmatprep.mubr.f32.mxu0 0.0
  %313 = vmatmul.mubr.f32.gmra.mxu0 %v100
  %v314 = vpop.f32.mrf.mxu0
  %v315 = vadd.f32 0.0, %v314
  %v316 = vpop.f32.mrf.mxu0
  %317 = vmatprep.mubr.f32.mxu0 0.0
  %318 = vmatmul.mubr.f32.gmra.mxu0 %v103
  %v319 = vpop.f32.mrf.mxu0
  %v320 = vadd.f32 0.0, %v319
  %v321 = vpop.f32.mrf.mxu0
  %322 = vdwg.mxu0
  %v323 = vadd.f32 %v42, %v172
  %v324 = vadd.f32 %v43, %v174
  %v325 = vadd.f32 %v44, %v285
  %v326 = vadd.f32 %v45, %v178
  %v327 = vadd.f32 %v46, %v180
  %v328 = vadd.f32 %v47, %v290
  %v329 = vadd.f32 %v48, %v184
  %v330 = vadd.f32 %v49, %v186
  %v331 = vadd.f32 %v50, %v295
  %v332 = vadd.f32 %v51, %v190
  %v333 = vadd.f32 %v52, %v192
  %v334 = vadd.f32 %v53, %v300
  %v335 = vadd.f32 %v54, %v196
  %v336 = vadd.f32 %v55, %v198
  %v337 = vadd.f32 %v56, %v305
  %v338 = vadd.f32 %v57, %v202
  %v339 = vadd.f32 %v58, %v204
  %v340 = vadd.f32 %v59, %v310
  %v341 = vadd.f32 %v60, %v208
  %v342 = vadd.f32 %v61, %v210
  %v343 = vadd.f32 %v62, %v315
  %v344 = vadd.f32 %v63, %v214
  %v345 = vadd.f32 %v64, %v216
  %v346 = vadd.f32 %v65, %v320
  %347 = vst [vmem:[#allocation2] sm:$0xff] %v323
  %348 = vst [vmem:[#allocation2 + $0x8] sm:$0xff] %v324
  %349 = vst [vmem:[#allocation2 + $0x10] sm:$0xff] %v325
  %350 = vst [vmem:[#allocation2 + $0x18] sm:$0xff] %v326
  %351 = vst [vmem:[#allocation2 + $0x20] sm:$0xff] %v327
  %352 = vst [vmem:[#allocation2 + $0x28] sm:$0xff] %v328
  %353 = vst [vmem:[#allocation2 + $0x30] sm:$0xff] %v329
  %354 = vst [vmem:[#allocation2 + $0x38] sm:$0xff] %v330
  %355 = vst [vmem:[#allocation2 + $0x40] sm:$0xff] %v331
  %356 = vst [vmem:[#allocation2 + $0x48] sm:$0xff] %v332
  %357 = vst [vmem:[#allocation2 + $0x50] sm:$0xff] %v333
  %358 = vst [vmem:[#allocation2 + $0x58] sm:$0xff] %v334
  %359 = vst [vmem:[#allocation2 + $0x60] sm:$0xff] %v335
  %360 = vst [vmem:[#allocation2 + $0x68] sm:$0xff] %v336
  %361 = vst [vmem:[#allocation2 + $0x70] sm:$0xff] %v337
  %362 = vst [vmem:[#allocation2 + $0x78] sm:$0xff] %v338
  %363 = vst [vmem:[#allocation2 + $0x80] sm:$0xff] %v339
  %364 = vst [vmem:[#allocation2 + $0x88] sm:$0xff] %v340
  %365 = vst [vmem:[#allocation2 + $0x90] sm:$0xff] %v341
  %366 = vst [vmem:[#allocation2 + $0x98] sm:$0xff] %v342
  %367 = vst [vmem:[#allocation2 + $0xa0] sm:$0xff] %v343
  %368 = vst [vmem:[#allocation2 + $0xa8] sm:$0xff] %v344
  %369 = vst [vmem:[#allocation2 + $0xb0] sm:$0xff] %v345
  %370 = vst [vmem:[#allocation2 + $0xb8] sm:$0xff] %v346
  // Predicated region
  $region18: #{encoder_decoder_forward.5} parent=0 // pred_check
    %p371 = pneg %p14
  $region19: #{encoder_decoder_forward.5} parent=0 // pred_check_branch
    %373 = sbr.rel (%p371) target = $region21
  $region20: #{encoder_decoder_forward.5} parent=0 // pred_region
    %v374 = vld [vmem:[#allocation2] sm:$0xff]
    %v375 = vld [vmem:[#allocation2 + $0x8] sm:$0xff]
    %v376 = vld [vmem:[#allocation2 + $0x10] sm:$0xff]
    %v377 = vld [vmem:[#allocation2 + $0x18] sm:$0xff]
    %v378 = vld [vmem:[#allocation2 + $0x20] sm:$0xff]
    %v379 = vld [vmem:[#allocation2 + $0x28] sm:$0xff]
    %v380 = vld [vmem:[#allocation2 + $0x30] sm:$0xff]
    %v381 = vld [vmem:[#allocation2 + $0x38] sm:$0xff]
    %v382 = vld [vmem:[#allocation2 + $0x40] sm:$0xff]
    %v383 = vld [vmem:[#allocation2 + $0x48] sm:$0xff]
    %v384 = vld [vmem:[#allocation2 + $0x50] sm:$0xff]
    %v385 = vld [vmem:[#allocation2 + $0x58] sm:$0xff]
    %v386 = vld [vmem:[#allocation2 + $0x60] sm:$0xff]
    %v387 = vld [vmem:[#allocation2 + $0x68] sm:$0xff]
    %v388 = vld [vmem:[#allocation2 + $0x70] sm:$0xff]
    %v389 = vld [vmem:[#allocation2 + $0x78] sm:$0xff]
    %v390 = vld [vmem:[#allocation2 + $0x80] sm:$0xff]
    %v391 = vld [vmem:[#allocation2 + $0x88] sm:$0xff]
    %v392 = vld [vmem:[#allocation2 + $0x90] sm:$0xff]
    %v393 = vld [vmem:[#allocation2 + $0x98] sm:$0xff]
    %v394 = vld [vmem:[#allocation2 + $0xa0] sm:$0xff]
    %v395 = vld [vmem:[#allocation2 + $0xa8] sm:$0xff]
    %v396 = vld [vmem:[#allocation2 + $0xb0] sm:$0xff]
    %v397 = vld [vmem:[#allocation2 + $0xb8] sm:$0xff]
    %v398 = vld [vmem:[%s2] sm:$0x7]
    %v400 = vlaneseq
    %v401 = vshrl.u32 %v400, 7
    %v402 = vsub.s32 0, %v401
    %v403 = vrot.slane %v398, %v402
    %v404 = vlaneseq
    %v405 = vshrl.u32 %v404, 7
    %v406 = vsub.s32 1, %v405
    %v407 = vrot.slane %v398, %v406
    %v408 = vlaneseq
    %v409 = vshrl.u32 %v408, 7
    %v410 = vsub.s32 2, %v409
    %v411 = vrot.slane %v398, %v410
    %v415 = vadd.f32 %v374, %v403
    %v416 = vadd.f32 %v375, %v407
    %v417 = vadd.f32 %v376, %v411
    %v418 = vadd.f32 %v377, %v403
    %v419 = vadd.f32 %v378, %v407
    %v420 = vadd.f32 %v379, %v411
    %v421 = vadd.f32 %v380, %v403
    %v422 = vadd.f32 %v381, %v407
    %v423 = vadd.f32 %v382, %v411
    %v424 = vadd.f32 %v383, %v403
    %v425 = vadd.f32 %v384, %v407
    %v426 = vadd.f32 %v385, %v411
    %v427 = vadd.f32 %v386, %v403
    %v428 = vadd.f32 %v387, %v407
    %v429 = vadd.f32 %v388, %v411
    %v430 = vadd.f32 %v389, %v403
    %v431 = vadd.f32 %v390, %v407
    %v432 = vadd.f32 %v391, %v411
    %v433 = vadd.f32 %v392, %v403
    %v434 = vadd.f32 %v393, %v407
    %v435 = vadd.f32 %v394, %v411
    %v436 = vadd.f32 %v395, %v403
    %v437 = vadd.f32 %v396, %v407
    %v438 = vadd.f32 %v397, %v411
    %439 = vst [vmem:[%s3] sm:$0xff] %v415
    %440 = vst [vmem:[%s3 + $0x8] sm:$0xff] %v416
    %441 = vst [vmem:[%s3 + $0x10] sm:$0xff] %v417
    %442 = vst [vmem:[%s3 + $0x18] sm:$0xff] %v418
    %443 = vst [vmem:[%s3 + $0x20] sm:$0xff] %v419
    %444 = vst [vmem:[%s3 + $0x28] sm:$0xff] %v420
    %445 = vst [vmem:[%s3 + $0x30] sm:$0xff] %v421
    %446 = vst [vmem:[%s3 + $0x38] sm:$0xff] %v422
    %447 = vst [vmem:[%s3 + $0x40] sm:$0xff] %v423
    %448 = vst [vmem:[%s3 + $0x48] sm:$0xff] %v424
    %449 = vst [vmem:[%s3 + $0x50] sm:$0xff] %v425
    %450 = vst [vmem:[%s3 + $0x58] sm:$0xff] %v426
    %451 = vst [vmem:[%s3 + $0x60] sm:$0xff] %v427
    %452 = vst [vmem:[%s3 + $0x68] sm:$0xff] %v428
    %453 = vst [vmem:[%s3 + $0x70] sm:$0xff] %v429
    %454 = vst [vmem:[%s3 + $0x78] sm:$0xff] %v430
    %455 = vst [vmem:[%s3 + $0x80] sm:$0xff] %v431
    %456 = vst [vmem:[%s3 + $0x88] sm:$0xff] %v432
    %457 = vst [vmem:[%s3 + $0x90] sm:$0xff] %v433
    %458 = vst [vmem:[%s3 + $0x98] sm:$0xff] %v434
    %459 = vst [vmem:[%s3 + $0xa0] sm:$0xff] %v435
    %460 = vst [vmem:[%s3 + $0xa8] sm:$0xff] %v436
    %461 = vst [vmem:[%s3 + $0xb0] sm:$0xff] %v437
    %462 = vst [vmem:[%s3 + $0xb8] sm:$0xff] %v438
  $region21: #{encoder_decoder_forward.5} parent=0 // pred_fallthru
    _
  // Predicated region
  $region22: #{encoder_decoder_forward.5} parent=0 // pred_check
    _
  $region23: #{encoder_decoder_forward.5} parent=0 // pred_check_branch
    %464 = sbr.rel (0) target = $region25
  $region24: #{encoder_decoder_forward.5} parent=0 // pred_region
    _
  $region25: #{encoder_decoder_forward.5} parent=0 // pred_fallthru
    _
  // Predicated region
  $region26: #{encoder_decoder_forward.5} parent=0 // pred_check
    _
  $region27: #{encoder_decoder_forward.5} parent=0 // pred_check_branch
    %466 = sbr.rel (0) target = $region29
  $region28: #{encoder_decoder_forward.5} parent=0 // pred_region
    _
  $region29: #{encoder_decoder_forward.5} parent=0 // pred_fallthru
    _

// kernel: encoder_decoder_forward.6
$region0: #{encoder_decoder_forward.6}
  #allocation0 [shape = 'u32[]', space=smem, size = 0x4, offset = 0x4, fixed_abs, tag = 'smem constant byte address 0x4 - core index']
  #allocation1 [shape = 'u32[144,128]{1,0:T(1,128)}', space=vmem, size = 0x12000, scoped, tag = 'internal scratch']
  #allocation2 [shape = 'f32[8,128]{1,0:T(8,128)}', space=vmem, size = 0x1000, scoped, tag = 'scratch operand']
  %s0 = inlined_call_operand.vmem [shape: f32[8,8,384], index: 0, kind: input, shape index: {}]
  %s1 = inlined_call_operand.vmem [shape: f32[128,384], index: 1, kind: input, shape index: {}]
  %s2 = inlined_call_operand.vmem [shape: f32[1,128], index: 2, kind: input, shape index: {}]
  %s3 = inlined_call_operand.vmem [shape: f32[8,128], index: 3, kind: output, shape index: {}]
  %s4 = sld [smem:[#allocation0]]
  $region26: #{encoder_decoder_forward.6} parent=0
    _
  %s6 = ssub.s32 1, %s4
  %s7 = scalar_select 0, %s6, %s4
  // Predicated region
  $region2: #{encoder_decoder_forward.6} parent=0 // pred_check
    _
  $region3: #{encoder_decoder_forward.6} parent=0 // pred_check_branch
    %9 = sbr.rel (0) target = $region5
  $region4: #{encoder_decoder_forward.6} parent=0 // pred_region
    _
  $region5: #{encoder_decoder_forward.6} parent=0 // pred_fallthru
    _
  // Predicated region
  $region6: #{encoder_decoder_forward.6} parent=0 // pred_check
    _
  $region7: #{encoder_decoder_forward.6} parent=0 // pred_check_branch
    %11 = sbr.rel (0) target = $region9
  $region8: #{encoder_decoder_forward.6} parent=0 // pred_region
    _
  $region9: #{encoder_decoder_forward.6} parent=0 // pred_fallthru
    _
  // Predicated region
  $region10: #{encoder_decoder_forward.6} parent=0 // pred_check
    _
  $region11: #{encoder_decoder_forward.6} parent=0 // pred_check_branch
    %13 = sbr.rel (0) target = $region13
  $region12: #{encoder_decoder_forward.6} parent=0 // pred_region
    _
  $region13: #{encoder_decoder_forward.6} parent=0 // pred_fallthru
    _
  %p14 = scmp.eq.s32.totalorder 0, 0
  // Predicated region
  $region14: #{encoder_decoder_forward.6} parent=0 // pred_check
    %p15 = pneg %p14
  $region15: #{encoder_decoder_forward.6} parent=0 // pred_check_branch
    %17 = sbr.rel (%p15) target = $region17
  $region16: #{encoder_decoder_forward.6} parent=0 // pred_region
    %18 = vst [vmem:[#allocation2] sm:$0xff] 0.0
  $region17: #{encoder_decoder_forward.6} parent=0 // pred_fallthru
    _
  %v19 = vld [vmem:[%s2] sm:$0x1]
  %v20 = vld [vmem:[#allocation2] sm:$0xff]
  %v21 = vld [vmem:[%s0] sm:$0xff]
  %v22 = vld [vmem:[%s0 + $0x8] sm:$0xff]
  %v23 = vld [vmem:[%s0 + $0x10] sm:$0xff]
  %v24 = vld [vmem:[%s1] sm:$0xff]
  %v25 = vld [vmem:[%s1 + $0x8] sm:$0xff]
  %v26 = vld [vmem:[%s1 + $0x10] sm:$0xff]
  %v27 = vld [vmem:[%s1 + $0x18] sm:$0xff]
  %v28 = vld [vmem:[%s1 + $0x20] sm:$0xff]
  %v29 = vld [vmem:[%s1 + $0x28] sm:$0xff]
  %v30 = vld [vmem:[%s1 + $0x30] sm:$0xff]
  %v31 = vld [vmem:[%s1 + $0x38] sm:$0xff]
  %v32 = vld [vmem:[%s1 + $0x40] sm:$0xff]
  %v33 = vld [vmem:[%s1 + $0x48] sm:$0xff]
  %v34 = vld [vmem:[%s1 + $0x50] sm:$0xff]
  %v35 = vld [vmem:[%s1 + $0x58] sm:$0xff]
  %v36 = vld [vmem:[%s1 + $0x60] sm:$0xff]
  %v37 = vld [vmem:[%s1 + $0x68] sm:$0xff]
  %v38 = vld [vmem:[%s1 + $0x70] sm:$0xff]
  %v39 = vld [vmem:[%s1 + $0x78] sm:$0xff]
  %v40 = vld [vmem:[%s1 + $0x80] sm:$0xff]
  %v41 = vld [vmem:[%s1 + $0x88] sm:$0xff]
  %v42 = vld [vmem:[%s1 + $0x90] sm:$0xff]
  %v43 = vld [vmem:[%s1 + $0x98] sm:$0xff]
  %v44 = vld [vmem:[%s1 + $0xa0] sm:$0xff]
  %v45 = vld [vmem:[%s1 + $0xa8] sm:$0xff]
  %v46 = vld [vmem:[%s1 + $0xb0] sm:$0xff]
  %v47 = vld [vmem:[%s1 + $0xb8] sm:$0xff]
  %v48 = vld [vmem:[%s1 + $0xc0] sm:$0xff]
  %v49 = vld [vmem:[%s1 + $0xc8] sm:$0xff]
  %v50 = vld [vmem:[%s1 + $0xd0] sm:$0xff]
  %v51 = vld [vmem:[%s1 + $0xd8] sm:$0xff]
  %v52 = vld [vmem:[%s1 + $0xe0] sm:$0xff]
  %v53 = vld [vmem:[%s1 + $0xe8] sm:$0xff]
  %v54 = vld [vmem:[%s1 + $0xf0] sm:$0xff]
  %v55 = vld [vmem:[%s1 + $0xf8] sm:$0xff]
  %v56 = vld [vmem:[%s1 + $0x100] sm:$0xff]
  %v57 = vld [vmem:[%s1 + $0x108] sm:$0xff]
  %v58 = vld [vmem:[%s1 + $0x110] sm:$0xff]
  %v59 = vld [vmem:[%s1 + $0x118] sm:$0xff]
  %v60 = vld [vmem:[%s1 + $0x120] sm:$0xff]
  %v61 = vld [vmem:[%s1 + $0x128] sm:$0xff]
  %v62 = vld [vmem:[%s1 + $0x130] sm:$0xff]
  %v63 = vld [vmem:[%s1 + $0x138] sm:$0xff]
  %v64 = vld [vmem:[%s1 + $0x140] sm:$0xff]
  %v65 = vld [vmem:[%s1 + $0x148] sm:$0xff]
  %v66 = vld [vmem:[%s1 + $0x150] sm:$0xff]
  %v67 = vld [vmem:[%s1 + $0x158] sm:$0xff]
  %v68 = vld [vmem:[%s1 + $0x160] sm:$0xff]
  %v69 = vld [vmem:[%s1 + $0x168] sm:$0xff]
  %v70 = vld [vmem:[%s1 + $0x170] sm:$0xff]
  %v71 = vld [vmem:[%s1 + $0x178] sm:$0xff]
  %72 = vmatprep.subr.mxu0 %v70
  %73 = vmatpush1.msra.mxu0 %v69
  %74 = vmatprep.subr.mxu0 %v67
  %75 = vmatpush1.msra.mxu0 %v66
  %76 = vmatprep.subr.mxu0 %v64
  %77 = vmatpush1.msra.mxu0 %v63
  %78 = vmatprep.subr.mxu0 %v61
  %79 = vmatpush1.msra.mxu0 %v60
  %80 = vmatprep.subr.mxu0 %v58
  %81 = vmatpush1.msra.mxu0 %v57
  %82 = vmatprep.subr.mxu0 %v55
  %83 = vmatpush1.msra.mxu0 %v54
  %84 = vmatprep.subr.mxu0 %v52
  %85 = vmatpush1.msra.mxu0 %v51
  %86 = vmatprep.subr.mxu0 %v49
  %87 = vmatpush1.msra.mxu0 %v48
  %88 = vmatprep.subr.mxu0 %v46
  %89 = vmatpush1.msra.mxu0 %v45
  %90 = vmatprep.subr.mxu0 %v43
  %91 = vmatpush1.msra.mxu0 %v42
  %92 = vmatprep.subr.mxu0 %v40
  %93 = vmatpush1.msra.mxu0 %v39
  %94 = vmatprep.subr.mxu0 %v37
  %95 = vmatpush1.msra.mxu0 %v36
  %96 = vmatprep.subr.mxu0 %v34
  %97 = vmatpush1.msra.mxu0 %v33
  %98 = vmatprep.subr.mxu0 %v31
  %99 = vmatpush1.msra.mxu0 %v30
  %100 = vmatprep.subr.mxu0 %v28
  %101 = vmatpush1.msra.mxu0 %v27
  %102 = vmatprep.subr.mxu0 %v25
  %103 = vmatpush1.msra.mxu0 %v24
  %104 = vmatprep.subr.mxu0 0.0
  %105 = vmatpush2.msra.mxu0 0.0
  %106 = vmatprep.subr.mxu0 0.0
  %107 = vmatpush2.msra.mxu0 0.0
  %108 = vmatprep.subr.mxu0 0.0
  %109 = vmatpush2.msra.mxu0 0.0
  %110 = vmatprep.subr.mxu0 0.0
  %111 = vmatpush2.msra.mxu0 0.0
  %112 = vmatprep.subr.mxu0 0.0
  %113 = vmatpush2.msra.mxu0 0.0
  %114 = vmatprep.subr.mxu0 0.0
  %115 = vmatpush2.msra.mxu0 0.0
  %116 = vmatprep.subr.mxu0 0.0
  %117 = vmatpush2.msra.mxu0 0.0
  %118 = vmatprep.subr.mxu0 0.0
  %119 = vmatpush2.msra.mxu0 0.0
  %120 = vmatprep.subr.mxu0 0.0
  %121 = vmatpush2.msra.mxu0 0.0
  %122 = vmatprep.subr.mxu0 0.0
  %123 = vmatpush2.msra.mxu0 0.0
  %124 = vmatprep.subr.mxu0 0.0
  %125 = vmatpush2.msra.mxu0 0.0
  %126 = vmatprep.subr.mxu0 0.0
  %127 = vmatpush2.msra.mxu0 0.0
  %128 = vmatprep.subr.mxu0 0.0
  %129 = vmatpush2.msra.mxu0 0.0
  %130 = vmatprep.subr.mxu0 0.0
  %131 = vmatpush2.msra.mxu0 0.0
  %132 = vmatprep.subr.mxu0 0.0
  %133 = vmatpush2.msra.mxu0 0.0
  %134 = vmatprep.subr.mxu0 0.0
  %135 = vmatpush2.msra.mxu0 0.0
  %136 = vmatprep.mubr.f32.mxu0 0.0
  %137 = vmatmul.mubr.f32.gmra.mxu0 %v20
  %v138 = vpop.f32.mrf.mxu0
  %v139 = vadd.f32 0.0, %v138
  %v140 = vpop.f32.mrf.mxu0
  %v141 = vadd.f32 0.0, %v140
  %142 = vdwg.mxu0
  %143 = vmatprep.subr.mxu0 0.0
  %144 = vmatpush1.msra.mxu0 %v71
  %145 = vmatprep.subr.mxu0 0.0
  %146 = vmatpush1.msra.mxu0 %v68
  %147 = vmatprep.subr.mxu0 0.0
  %148 = vmatpush1.msra.mxu0 %v65
  %149 = vmatprep.subr.mxu0 0.0
  %150 = vmatpush1.msra.mxu0 %v62
  %151 = vmatprep.subr.mxu0 0.0
  %152 = vmatpush1.msra.mxu0 %v59
  %153 = vmatprep.subr.mxu0 0.0
  %154 = vmatpush1.msra.mxu0 %v56
  %155 = vmatprep.subr.mxu0 0.0
  %156 = vmatpush1.msra.mxu0 %v53
  %157 = vmatprep.subr.mxu0 0.0
  %158 = vmatpush1.msra.mxu0 %v50
  %159 = vmatprep.subr.mxu0 0.0
  %160 = vmatpush1.msra.mxu0 %v47
  %161 = vmatprep.subr.mxu0 0.0
  %162 = vmatpush1.msra.mxu0 %v44
  %163 = vmatprep.subr.mxu0 0.0
  %164 = vmatpush1.msra.mxu0 %v41
  %165 = vmatprep.subr.mxu0 0.0
  %166 = vmatpush1.msra.mxu0 %v38
  %167 = vmatprep.subr.mxu0 0.0
  %168 = vmatpush1.msra.mxu0 %v35
  %169 = vmatprep.subr.mxu0 0.0
  %170 = vmatpush1.msra.mxu0 %v32
  %171 = vmatprep.subr.mxu0 0.0
  %172 = vmatpush1.msra.mxu0 %v29
  %173 = vmatprep.subr.mxu0 0.0
  %174 = vmatpush1.msra.mxu0 %v26
  %175 = vmatprep.subr.mxu0 0.0
  %176 = vmatpush2.msra.mxu0 0.0
  %177 = vmatprep.subr.mxu0 0.0
  %178 = vmatpush2.msra.mxu0 0.0
  %179 = vmatprep.subr.mxu0 0.0
  %180 = vmatpush2.msra.mxu0 0.0
  %181 = vmatprep.subr.mxu0 0.0
  %182 = vmatpush2.msra.mxu0 0.0
  %183 = vmatprep.subr.mxu0 0.0
  %184 = vmatpush2.msra.mxu0 0.0
  %185 = vmatprep.subr.mxu0 0.0
  %186 = vmatpush2.msra.mxu0 0.0
  %187 = vmatprep.subr.mxu0 0.0
  %188 = vmatpush2.msra.mxu0 0.0
  %189 = vmatprep.subr.mxu0 0.0
  %190 = vmatpush2.msra.mxu0 0.0
  %191 = vmatprep.subr.mxu0 0.0
  %192 = vmatpush2.msra.mxu0 0.0
  %193 = vmatprep.subr.mxu0 0.0
  %194 = vmatpush2.msra.mxu0 0.0
  %195 = vmatprep.subr.mxu0 0.0
  %196 = vmatpush2.msra.mxu0 0.0
  %197 = vmatprep.subr.mxu0 0.0
  %198 = vmatpush2.msra.mxu0 0.0
  %199 = vmatprep.subr.mxu0 0.0
  %200 = vmatpush2.msra.mxu0 0.0
  %201 = vmatprep.subr.mxu0 0.0
  %202 = vmatpush2.msra.mxu0 0.0
  %203 = vmatprep.subr.mxu0 0.0
  %204 = vmatpush2.msra.mxu0 0.0
  %205 = vmatprep.subr.mxu0 0.0
  %206 = vmatpush2.msra.mxu0 0.0
  %207 = vmatprep.mubr.f32.mxu0 0.0
  %208 = vmatmul.mubr.f32.gmra.mxu0 %v20
  %v209 = vpop.f32.mrf.mxu0
  %v210 = vadd.f32 0.0, %v209
  %v211 = vpop.f32.mrf.mxu0
  %212 = vdwg.mxu0
  %v213 = vadd.f32 %v21, %v139
  %v214 = vxor.u32 %v213, 2147483648
  %v215 = vmul.f32 %v214, 1.442695
  %v216 = vpow.pop %v215
  %v217 = vadd.f32 %v216, 1.0
  %v218 = vrcp.pop %v217
  %v219 = vmul.f32 1.0, %v218
  %v220 = vadd.f32 %v22, %v141
  %v221 = vxor.u32 %v220, 2147483648
  %v222 = vmul.f32 %v221, 1.442695
  %v223 = vpow.pop %v222
  %v224 = vadd.f32 %v223, 1.0
  %v225 = vrcp.pop %v224
  %v226 = vmul.f32 1.0, %v225
  %v228 = vlaneseq
  %v229 = vshrl.u32 %v228, 7
  %v230 = vsub.s32 0, %v229
  %v231 = vrot.slane %v19, %v230
  %v233 = vadd.f32 %v210, %v231
  %v234 = vmul.f32 %v219, %v233
  %v235 = vadd.f32 %v23, %v234
  %v236 = vtanh.pop %v235
  %v237 = vsub.f32 %v20, %v236
  %v238 = vmul.f32 %v226, %v237
  %v239 = vadd.f32 %v236, %v238
  %s240 = scalar_lea.vmem %s0, 24
  %v241 = vld [vmem:[%s240] sm:$0xff]
  %v242 = vld [vmem:[%s240 + $0x8] sm:$0xff]
  %v243 = vld [vmem:[%s240 + $0x10] sm:$0xff]
  %244 = vmatprep.subr.mxu0 %v70
  %245 = vmatpush1.msra.mxu0 %v69
  %246 = vmatprep.subr.mxu0 %v67
  %247 = vmatpush1.msra.mxu0 %v66
  %248 = vmatprep.subr.mxu0 %v64
  %249 = vmatpush1.msra.mxu0 %v63
  %250 = vmatprep.subr.mxu0 %v61
  %251 = vmatpush1.msra.mxu0 %v60
  %252 = vmatprep.subr.mxu0 %v58
  %253 = vmatpush1.msra.mxu0 %v57
  %254 = vmatprep.subr.mxu0 %v55
  %255 = vmatpush1.msra.mxu0 %v54
  %256 = vmatprep.subr.mxu0 %v52
  %257 = vmatpush1.msra.mxu0 %v51
  %258 = vmatprep.subr.mxu0 %v49
  %259 = vmatpush1.msra.mxu0 %v48
  %260 = vmatprep.subr.mxu0 %v46
  %261 = vmatpush1.msra.mxu0 %v45
  %262 = vmatprep.subr.mxu0 %v43
  %263 = vmatpush1.msra.mxu0 %v42
  %264 = vmatprep.subr.mxu0 %v40
  %265 = vmatpush1.msra.mxu0 %v39
  %266 = vmatprep.subr.mxu0 %v37
  %267 = vmatpush1.msra.mxu0 %v36
  %268 = vmatprep.subr.mxu0 %v34
  %269 = vmatpush1.msra.mxu0 %v33
  %270 = vmatprep.subr.mxu0 %v31
  %271 = vmatpush1.msra.mxu0 %v30
  %272 = vmatprep.subr.mxu0 %v28
  %273 = vmatpush1.msra.mxu0 %v27
  %274 = vmatprep.subr.mxu0 %v25
  %275 = vmatpush1.msra.mxu0 %v24
  %276 = vmatprep.subr.mxu0 0.0
  %277 = vmatpush2.msra.mxu0 0.0
  %278 = vmatprep.subr.mxu0 0.0
  %279 = vmatpush2.msra.mxu0 0.0
  %280 = vmatprep.subr.mxu0 0.0
  %281 = vmatpush2.msra.mxu0 0.0
  %282 = vmatprep.subr.mxu0 0.0
  %283 = vmatpush2.msra.mxu0 0.0
  %284 = vmatprep.subr.mxu0 0.0
  %285 = vmatpush2.msra.mxu0 0.0
  %286 = vmatprep.subr.mxu0 0.0
  %287 = vmatpush2.msra.mxu0 0.0
  %288 = vmatprep.subr.mxu0 0.0
  %289 = vmatpush2.msra.mxu0 0.0
  %290 = vmatprep.subr.mxu0 0.0
  %291 = vmatpush2.msra.mxu0 0.0
  %292 = vmatprep.subr.mxu0 0.0
  %293 = vmatpush2.msra.mxu0 0.0
  %294 = vmatprep.subr.mxu0 0.0
  %295 = vmatpush2.msra.mxu0 0.0
  %296 = vmatprep.subr.mxu0 0.0
  %297 = vmatpush2.msra.mxu0 0.0
  %298 = vmatprep.subr.mxu0 0.0
  %299 = vmatpush2.msra.mxu0 0.0
  %300 = vmatprep.subr.mxu0 0.0
  %301 = vmatpush2.msra.mxu0 0.0
  %302 = vmatprep.subr.mxu0 0.0
  %303 = vmatpush2.msra.mxu0 0.0
  %304 = vmatprep.subr.mxu0 0.0
  %305 = vmatpush2.msra.mxu0 0.0
  %306 = vmatprep.subr.mxu0 0.0
  %307 = vmatpush2.msra.mxu0 0.0
  %308 = vmatprep.mubr.f32.mxu0 0.0
  %309 = vmatmul.mubr.f32.gmra.mxu0 %v239
  %v310 = vpop.f32.mrf.mxu0
  %v311 = vadd.f32 0.0, %v310
  %v312 = vpop.f32.mrf.mxu0
  %v313 = vadd.f32 0.0, %v312
  %314 = vdwg.mxu0
  %315 = vmatprep.subr.mxu0 0.0
  %316 = vmatpush1.msra.mxu0 %v71
  %317 = vmatprep.subr.mxu0 0.0
  %318 = vmatpush1.msra.mxu0 %v68
  %319 = vmatprep.subr.mxu0 0.0
  %320 = vmatpush1.msra.mxu0 %v65
  %321 = vmatprep.subr.mxu0 0.0
  %322 = vmatpush1.msra.mxu0 %v62
  %323 = vmatprep.subr.mxu0 0.0
  %324 = vmatpush1.msra.mxu0 %v59
  %325 = vmatprep.subr.mxu0 0.0
  %326 = vmatpush1.msra.mxu0 %v56
  %327 = vmatprep.subr.mxu0 0.0
  %328 = vmatpush1.msra.mxu0 %v53
  %329 = vmatprep.subr.mxu0 0.0
  %330 = vmatpush1.msra.mxu0 %v50
  %331 = vmatprep.subr.mxu0 0.0
  %332 = vmatpush1.msra.mxu0 %v47
  %333 = vmatprep.subr.mxu0 0.0
  %334 = vmatpush1.msra.mxu0 %v44
  %335 = vmatprep.subr.mxu0 0.0
  %336 = vmatpush1.msra.mxu0 %v41
  %337 = vmatprep.subr.mxu0 0.0
  %338 = vmatpush1.msra.mxu0 %v38
  %339 = vmatprep.subr.mxu0 0.0
  %340 = vmatpush1.msra.mxu0 %v35
  %341 = vmatprep.subr.mxu0 0.0
  %342 = vmatpush1.msra.mxu0 %v32
  %343 = vmatprep.subr.mxu0 0.0
  %344 = vmatpush1.msra.mxu0 %v29
  %345 = vmatprep.subr.mxu0 0.0
  %346 = vmatpush1.msra.mxu0 %v26
  %347 = vmatprep.subr.mxu0 0.0
  %348 = vmatpush2.msra.mxu0 0.0
  %349 = vmatprep.subr.mxu0 0.0
  %350 = vmatpush2.msra.mxu0 0.0
  %351 = vmatprep.subr.mxu0 0.0
  %352 = vmatpush2.msra.mxu0 0.0
  %353 = vmatprep.subr.mxu0 0.0
  %354 = vmatpush2.msra.mxu0 0.0
  %355 = vmatprep.subr.mxu0 0.0
  %356 = vmatpush2.msra.mxu0 0.0
  %357 = vmatprep.subr.mxu0 0.0
  %358 = vmatpush2.msra.mxu0 0.0
  %359 = vmatprep.subr.mxu0 0.0
  %360 = vmatpush2.msra.mxu0 0.0
  %361 = vmatprep.subr.mxu0 0.0
  %362 = vmatpush2.msra.mxu0 0.0
  %363 = vmatprep.subr.mxu0 0.0
  %364 = vmatpush2.msra.mxu0 0.0
  %365 = vmatprep.subr.mxu0 0.0
  %366 = vmatpush2.msra.mxu0 0.0
  %367 = vmatprep.subr.mxu0 0.0
  %368 = vmatpush2.msra.mxu0 0.0
  %369 = vmatprep.subr.mxu0 0.0
  %370 = vmatpush2.msra.mxu0 0.0
  %371 = vmatprep.subr.mxu0 0.0
  %372 = vmatpush2.msra.mxu0 0.0
  %373 = vmatprep.subr.mxu0 0.0
  %374 = vmatpush2.msra.mxu0 0.0
  %375 = vmatprep.subr.mxu0 0.0
  %376 = vmatpush2.msra.mxu0 0.0
  %377 = vmatprep.subr.mxu0 0.0
  %378 = vmatpush2.msra.mxu0 0.0
  %379 = vmatprep.mubr.f32.mxu0 0.0
  %380 = vmatmul.mubr.f32.gmra.mxu0 %v239
  %v381 = vpop.f32.mrf.mxu0
  %v382 = vadd.f32 0.0, %v381
  %v383 = vpop.f32.mrf.mxu0
  %384 = vdwg.mxu0
  %v385 = vadd.f32 %v241, %v311
  %v386 = vxor.u32 %v385, 2147483648
  %v387 = vmul.f32 %v386, 1.442695
  %v388 = vpow.pop %v387
  %v389 = vadd.f32 %v388, 1.0
  %v390 = vrcp.pop %v389
  %v391 = vmul.f32 1.0, %v390
  %v392 = vadd.f32 %v242, %v313
  %v393 = vxor.u32 %v392, 2147483648
  %v394 = vmul.f32 %v393, 1.442695
  %v395 = vpow.pop %v394
  %v396 = vadd.f32 %v395, 1.0
  %v397 = vrcp.pop %v396
  %v398 = vmul.f32 1.0, %v397
  %v399 = vadd.f32 %v382, %v231
  %v400 = vmul.f32 %v391, %v399
  %v401 = vadd.f32 %v243, %v400
  %v402 = vtanh.pop %v401
  %v403 = vsub.f32 %v239, %v402
  %v404 = vmul.f32 %v398, %v403
  %v405 = vadd.f32 %v402, %v404
  %s406 = scalar_lea.vmem %s0, 48
  %v407 = vld [vmem:[%s406] sm:$0xff]
  %v408 = vld [vmem:[%s406 + $0x8] sm:$0xff]
  %v409 = vld [vmem:[%s406 + $0x10] sm:$0xff]
  %410 = vmatprep.subr.mxu0 %v70
  %411 = vmatpush1.msra.mxu0 %v69
  %412 = vmatprep.subr.mxu0 %v67
  %413 = vmatpush1.msra.mxu0 %v66
  %414 = vmatprep.subr.mxu0 %v64
  %415 = vmatpush1.msra.mxu0 %v63
  %416 = vmatprep.subr.mxu0 %v61
  %417 = vmatpush1.msra.mxu0 %v60
  %418 = vmatprep.subr.mxu0 %v58
  %419 = vmatpush1.msra.mxu0 %v57
  %420 = vmatprep.subr.mxu0 %v55
  %421 = vmatpush1.msra.mxu0 %v54
  %422 = vmatprep.subr.mxu0 %v52
  %423 = vmatpush1.msra.mxu0 %v51
  %424 = vmatprep.subr.mxu0 %v49
  %425 = vmatpush1.msra.mxu0 %v48
  %426 = vmatprep.subr.mxu0 %v46
  %427 = vmatpush1.msra.mxu0 %v45
  %428 = vmatprep.subr.mxu0 %v43
  %429 = vmatpush1.msra.mxu0 %v42
  %430 = vmatprep.subr.mxu0 %v40
  %431 = vmatpush1.msra.mxu0 %v39
  %432 = vmatprep.subr.mxu0 %v37
  %433 = vmatpush1.msra.mxu0 %v36
  %434 = vmatprep.subr.mxu0 %v34
  %435 = vmatpush1.msra.mxu0 %v33
  %436 = vmatprep.subr.mxu0 %v31
  %437 = vmatpush1.msra.mxu0 %v30
  %438 = vmatprep.subr.mxu0 %v28
  %439 = vmatpush1.msra.mxu0 %v27
  %440 = vmatprep.subr.mxu0 %v25
  %441 = vmatpush1.msra.mxu0 %v24
  %442 = vmatprep.subr.mxu0 0.0
  %443 = vmatpush2.msra.mxu0 0.0
  %444 = vmatprep.subr.mxu0 0.0
  %445 = vmatpush2.msra.mxu0 0.0
  %446 = vmatprep.subr.mxu0 0.0
  %447 = vmatpush2.msra.mxu0 0.0
  %448 = vmatprep.subr.mxu0 0.0
  %449 = vmatpush2.msra.mxu0 0.0
  %450 = vmatprep.subr.mxu0 0.0
  %451 = vmatpush2.msra.mxu0 0.0
  %452 = vmatprep.subr.mxu0 0.0
  %453 = vmatpush2.msra.mxu0 0.0
  %454 = vmatprep.subr.mxu0 0.0
  %455 = vmatpush2.msra.mxu0 0.0
  %456 = vmatprep.subr.mxu0 0.0
  %457 = vmatpush2.msra.mxu0 0.0
  %458 = vmatprep.subr.mxu0 0.0
  %459 = vmatpush2.msra.mxu0 0.0
  %460 = vmatprep.subr.mxu0 0.0
  %461 = vmatpush2.msra.mxu0 0.0
  %462 = vmatprep.subr.mxu0 0.0
  %463 = vmatpush2.msra.mxu0 0.0
  %464 = vmatprep.subr.mxu0 0.0
  %465 = vmatpush2.msra.mxu0 0.0
  %466 = vmatprep.subr.mxu0 0.0
  %467 = vmatpush2.msra.mxu0 0.0
  %468 = vmatprep.subr.mxu0 0.0
  %469 = vmatpush2.msra.mxu0 0.0
  %470 = vmatprep.subr.mxu0 0.0
  %471 = vmatpush2.msra.mxu0 0.0
  %472 = vmatprep.subr.mxu0 0.0
  %473 = vmatpush2.msra.mxu0 0.0
  %474 = vmatprep.mubr.f32.mxu0 0.0
  %475 = vmatmul.mubr.f32.gmra.mxu0 %v405
  %v476 = vpop.f32.mrf.mxu0
  %v477 = vadd.f32 0.0, %v476
  %v478 = vpop.f32.mrf.mxu0
  %v479 = vadd.f32 0.0, %v478
  %480 = vdwg.mxu0
  %481 = vmatprep.subr.mxu0 0.0
  %482 = vmatpush1.msra.mxu0 %v71
  %483 = vmatprep.subr.mxu0 0.0
  %484 = vmatpush1.msra.mxu0 %v68
  %485 = vmatprep.subr.mxu0 0.0
  %486 = vmatpush1.msra.mxu0 %v65
  %487 = vmatprep.subr.mxu0 0.0
  %488 = vmatpush1.msra.mxu0 %v62
  %489 = vmatprep.subr.mxu0 0.0
  %490 = vmatpush1.msra.mxu0 %v59
  %491 = vmatprep.subr.mxu0 0.0
  %492 = vmatpush1.msra.mxu0 %v56
  %493 = vmatprep.subr.mxu0 0.0
  %494 = vmatpush1.msra.mxu0 %v53
  %495 = vmatprep.subr.mxu0 0.0
  %496 = vmatpush1.msra.mxu0 %v50
  %497 = vmatprep.subr.mxu0 0.0
  %498 = vmatpush1.msra.mxu0 %v47
  %499 = vmatprep.subr.mxu0 0.0
  %500 = vmatpush1.msra.mxu0 %v44
  %501 = vmatprep.subr.mxu0 0.0
  %502 = vmatpush1.msra.mxu0 %v41
  %503 = vmatprep.subr.mxu0 0.0
  %504 = vmatpush1.msra.mxu0 %v38
  %505 = vmatprep.subr.mxu0 0.0
  %506 = vmatpush1.msra.mxu0 %v35
  %507 = vmatprep.subr.mxu0 0.0
  %508 = vmatpush1.msra.mxu0 %v32
  %509 = vmatprep.subr.mxu0 0.0
  %510 = vmatpush1.msra.mxu0 %v29
  %511 = vmatprep.subr.mxu0 0.0
  %512 = vmatpush1.msra.mxu0 %v26
  %513 = vmatprep.subr.mxu0 0.0
  %514 = vmatpush2.msra.mxu0 0.0
  %515 = vmatprep.subr.mxu0 0.0
  %516 = vmatpush2.msra.mxu0 0.0
  %517 = vmatprep.subr.mxu0 0.0
  %518 = vmatpush2.msra.mxu0 0.0
  %519 = vmatprep.subr.mxu0 0.0
  %520 = vmatpush2.msra.mxu0 0.0
  %521 = vmatprep.subr.mxu0 0.0
  %522 = vmatpush2.msra.mxu0 0.0
  %523 = vmatprep.subr.mxu0 0.0
  %524 = vmatpush2.msra.mxu0 0.0
  %525 = vmatprep.subr.mxu0 0.0
  %526 = vmatpush2.msra.mxu0 0.0
  %527 = vmatprep.subr.mxu0 0.0
  %528 = vmatpush2.msra.mxu0 0.0
  %529 = vmatprep.subr.mxu0 0.0
  %530 = vmatpush2.msra.mxu0 0.0
  %531 = vmatprep.subr.mxu0 0.0
  %532 = vmatpush2.msra.mxu0 0.0
  %533 = vmatprep.subr.mxu0 0.0
  %534 = vmatpush2.msra.mxu0 0.0
  %535 = vmatprep.subr.mxu0 0.0
  %536 = vmatpush2.msra.mxu0 0.0
  %537 = vmatprep.subr.mxu0 0.0
  %538 = vmatpush2.msra.mxu0 0.0
  %539 = vmatprep.subr.mxu0 0.0
  %540 = vmatpush2.msra.mxu0 0.0
  %541 = vmatprep.subr.mxu0 0.0
  %542 = vmatpush2.msra.mxu0 0.0
  %543 = vmatprep.subr.mxu0 0.0
  %544 = vmatpush2.msra.mxu0 0.0
  %545 = vmatprep.mubr.f32.mxu0 0.0
  %546 = vmatmul.mubr.f32.gmra.mxu0 %v405
  %v547 = vpop.f32.mrf.mxu0
  %v548 = vadd.f32 0.0, %v547
  %v549 = vpop.f32.mrf.mxu0
  %550 = vdwg.mxu0
  %v551 = vadd.f32 %v407, %v477
  %v552 = vxor.u32 %v551, 2147483648
  %v553 = vmul.f32 %v552, 1.442695
  %v554 = vpow.pop %v553
  %v555 = vadd.f32 %v554, 1.0
  %v556 = vrcp.pop %v555
  %v557 = vmul.f32 1.0, %v556
  %v558 = vadd.f32 %v408, %v479
  %v559 = vxor.u32 %v558, 2147483648
  %v560 = vmul.f32 %v559, 1.442695
  %v561 = vpow.pop %v560
  %v562 = vadd.f32 %v561, 1.0
  %v563 = vrcp.pop %v562
  %v564 = vmul.f32 1.0, %v563
  %v565 = vadd.f32 %v548, %v231
  %v566 = vmul.f32 %v557, %v565
  %v567 = vadd.f32 %v409, %v566
  %v568 = vtanh.pop %v567
  %v569 = vsub.f32 %v405, %v568
  %v570 = vmul.f32 %v564, %v569
  %v571 = vadd.f32 %v568, %v570
  %s572 = scalar_lea.vmem %s0, 72
  %v573 = vld [vmem:[%s572] sm:$0xff]
  %v574 = vld [vmem:[%s572 + $0x8] sm:$0xff]
  %v575 = vld [vmem:[%s572 + $0x10] sm:$0xff]
  %576 = vmatprep.subr.mxu0 %v70
  %577 = vmatpush1.msra.mxu0 %v69
  %578 = vmatprep.subr.mxu0 %v67
  %579 = vmatpush1.msra.mxu0 %v66
  %580 = vmatprep.subr.mxu0 %v64
  %581 = vmatpush1.msra.mxu0 %v63
  %582 = vmatprep.subr.mxu0 %v61
  %583 = vmatpush1.msra.mxu0 %v60
  %584 = vmatprep.subr.mxu0 %v58
  %585 = vmatpush1.msra.mxu0 %v57
  %586 = vmatprep.subr.mxu0 %v55
  %587 = vmatpush1.msra.mxu0 %v54
  %588 = vmatprep.subr.mxu0 %v52
  %589 = vmatpush1.msra.mxu0 %v51
  %590 = vmatprep.subr.mxu0 %v49
  %591 = vmatpush1.msra.mxu0 %v48
  %592 = vmatprep.subr.mxu0 %v46
  %593 = vmatpush1.msra.mxu0 %v45
  %594 = vmatprep.subr.mxu0 %v43
  %595 = vmatpush1.msra.mxu0 %v42
  %596 = vmatprep.subr.mxu0 %v40
  %597 = vmatpush1.msra.mxu0 %v39
  %598 = vmatprep.subr.mxu0 %v37
  %599 = vmatpush1.msra.mxu0 %v36
  %600 = vmatprep.subr.mxu0 %v34
  %601 = vmatpush1.msra.mxu0 %v33
  %602 = vmatprep.subr.mxu0 %v31
  %603 = vmatpush1.msra.mxu0 %v30
  %604 = vmatprep.subr.mxu0 %v28
  %605 = vmatpush1.msra.mxu0 %v27
  %606 = vmatprep.subr.mxu0 %v25
  %607 = vmatpush1.msra.mxu0 %v24
  %608 = vmatprep.subr.mxu0 0.0
  %609 = vmatpush2.msra.mxu0 0.0
  %610 = vmatprep.subr.mxu0 0.0
  %611 = vmatpush2.msra.mxu0 0.0
  %612 = vmatprep.subr.mxu0 0.0
  %613 = vmatpush2.msra.mxu0 0.0
  %614 = vmatprep.subr.mxu0 0.0
  %615 = vmatpush2.msra.mxu0 0.0
  %616 = vmatprep.subr.mxu0 0.0
  %617 = vmatpush2.msra.mxu0 0.0
  %618 = vmatprep.subr.mxu0 0.0
  %619 = vmatpush2.msra.mxu0 0.0
  %620 = vmatprep.subr.mxu0 0.0
  %621 = vmatpush2.msra.mxu0 0.0
  %622 = vmatprep.subr.mxu0 0.0
  %623 = vmatpush2.msra.mxu0 0.0
  %624 = vmatprep.subr.mxu0 0.0
  %625 = vmatpush2.msra.mxu0 0.0
  %626 = vmatprep.subr.mxu0 0.0
  %627 = vmatpush2.msra.mxu0 0.0
  %628 = vmatprep.subr.mxu0 0.0
  %629 = vmatpush2.msra.mxu0 0.0
  %630 = vmatprep.subr.mxu0 0.0
  %631 = vmatpush2.msra.mxu0 0.0
  %632 = vmatprep.subr.mxu0 0.0
  %633 = vmatpush2.msra.mxu0 0.0
  %634 = vmatprep.subr.mxu0 0.0
  %635 = vmatpush2.msra.mxu0 0.0
  %636 = vmatprep.subr.mxu0 0.0
  %637 = vmatpush2.msra.mxu0 0.0
  %638 = vmatprep.subr.mxu0 0.0
  %639 = vmatpush2.msra.mxu0 0.0
  %640 = vmatprep.mubr.f32.mxu0 0.0
  %641 = vmatmul.mubr.f32.gmra.mxu0 %v571
  %v642 = vpop.f32.mrf.mxu0
  %v643 = vadd.f32 0.0, %v642
  %v644 = vpop.f32.mrf.mxu0
  %v645 = vadd.f32 0.0, %v644
  %646 = vdwg.mxu0
  %647 = vmatprep.subr.mxu0 0.0
  %648 = vmatpush1.msra.mxu0 %v71
  %649 = vmatprep.subr.mxu0 0.0
  %650 = vmatpush1.msra.mxu0 %v68
  %651 = vmatprep.subr.mxu0 0.0
  %652 = vmatpush1.msra.mxu0 %v65
  %653 = vmatprep.subr.mxu0 0.0
  %654 = vmatpush1.msra.mxu0 %v62
  %655 = vmatprep.subr.mxu0 0.0
  %656 = vmatpush1.msra.mxu0 %v59
  %657 = vmatprep.subr.mxu0 0.0
  %658 = vmatpush1.msra.mxu0 %v56
  %659 = vmatprep.subr.mxu0 0.0
  %660 = vmatpush1.msra.mxu0 %v53
  %661 = vmatprep.subr.mxu0 0.0
  %662 = vmatpush1.msra.mxu0 %v50
  %663 = vmatprep.subr.mxu0 0.0
  %664 = vmatpush1.msra.mxu0 %v47
  %665 = vmatprep.subr.mxu0 0.0
  %666 = vmatpush1.msra.mxu0 %v44
  %667 = vmatprep.subr.mxu0 0.0
  %668 = vmatpush1.msra.mxu0 %v41
  %669 = vmatprep.subr.mxu0 0.0
  %670 = vmatpush1.msra.mxu0 %v38
  %671 = vmatprep.subr.mxu0 0.0
  %672 = vmatpush1.msra.mxu0 %v35
  %673 = vmatprep.subr.mxu0 0.0
  %674 = vmatpush1.msra.mxu0 %v32
  %675 = vmatprep.subr.mxu0 0.0
  %676 = vmatpush1.msra.mxu0 %v29
  %677 = vmatprep.subr.mxu0 0.0
  %678 = vmatpush1.msra.mxu0 %v26
  %679 = vmatprep.subr.mxu0 0.0
  %680 = vmatpush2.msra.mxu0 0.0
  %681 = vmatprep.subr.mxu0 0.0
  %682 = vmatpush2.msra.mxu0 0.0
  %683 = vmatprep.subr.mxu0 0.0
  %684 = vmatpush2.msra.mxu0 0.0
  %685 = vmatprep.subr.mxu0 0.0
  %686 = vmatpush2.msra.mxu0 0.0
  %687 = vmatprep.subr.mxu0 0.0
  %688 = vmatpush2.msra.mxu0 0.0
  %689 = vmatprep.subr.mxu0 0.0
  %690 = vmatpush2.msra.mxu0 0.0
  %691 = vmatprep.subr.mxu0 0.0
  %692 = vmatpush2.msra.mxu0 0.0
  %693 = vmatprep.subr.mxu0 0.0
  %694 = vmatpush2.msra.mxu0 0.0
  %695 = vmatprep.subr.mxu0 0.0
  %696 = vmatpush2.msra.mxu0 0.0
  %697 = vmatprep.subr.mxu0 0.0
  %698 = vmatpush2.msra.mxu0 0.0
  %699 = vmatprep.subr.mxu0 0.0
  %700 = vmatpush2.msra.mxu0 0.0
  %701 = vmatprep.subr.mxu0 0.0
  %702 = vmatpush2.msra.mxu0 0.0
  %703 = vmatprep.subr.mxu0 0.0
  %704 = vmatpush2.msra.mxu0 0.0
  %705 = vmatprep.subr.mxu0 0.0
  %706 = vmatpush2.msra.mxu0 0.0
  %707 = vmatprep.subr.mxu0 0.0
  %708 = vmatpush2.msra.mxu0 0.0
  %709 = vmatprep.subr.mxu0 0.0
  %710 = vmatpush2.msra.mxu0 0.0
  %711 = vmatprep.mubr.f32.mxu0 0.0
  %712 = vmatmul.mubr.f32.gmra.mxu0 %v571
  %v713 = vpop.f32.mrf.mxu0
  %v714 = vadd.f32 0.0, %v713
  %v715 = vpop.f32.mrf.mxu0
  %716 = vdwg.mxu0
  %v717 = vadd.f32 %v573, %v643
  %v718 = vxor.u32 %v717, 2147483648
  %v719 = vmul.f32 %v718, 1.442695
  %v720 = vpow.pop %v719
  %v721 = vadd.f32 %v720, 1.0
  %v722 = vrcp.pop %v721
  %v723 = vmul.f32 1.0, %v722
  %v724 = vadd.f32 %v574, %v645
  %v725 = vxor.u32 %v724, 2147483648
  %v726 = vmul.f32 %v725, 1.442695
  %v727 = vpow.pop %v726
  %v728 = vadd.f32 %v727, 1.0
  %v729 = vrcp.pop %v728
  %v730 = vmul.f32 1.0, %v729
  %v731 = vadd.f32 %v714, %v231
  %v732 = vmul.f32 %v723, %v731
  %v733 = vadd.f32 %v575, %v732
  %v734 = vtanh.pop %v733
  %v735 = vsub.f32 %v571, %v734
  %v736 = vmul.f32 %v730, %v735
  %v737 = vadd.f32 %v734, %v736
  %s738 = scalar_lea.vmem %s0, 96
  %v739 = vld [vmem:[%s738] sm:$0xff]
  %v740 = vld [vmem:[%s738 + $0x8] sm:$0xff]
  %v741 = vld [vmem:[%s738 + $0x10] sm:$0xff]
  %742 = vmatprep.subr.mxu0 %v70
  %743 = vmatpush1.msra.mxu0 %v69
  %744 = vmatprep.subr.mxu0 %v67
  %745 = vmatpush1.msra.mxu0 %v66
  %746 = vmatprep.subr.mxu0 %v64
  %747 = vmatpush1.msra.mxu0 %v63
  %748 = vmatprep.subr.mxu0 %v61
  %749 = vmatpush1.msra.mxu0 %v60
  %750 = vmatprep.subr.mxu0 %v58
  %751 = vmatpush1.msra.mxu0 %v57
  %752 = vmatprep.subr.mxu0 %v55
  %753 = vmatpush1.msra.mxu0 %v54
  %754 = vmatprep.subr.mxu0 %v52
  %755 = vmatpush1.msra.mxu0 %v51
  %756 = vmatprep.subr.mxu0 %v49
  %757 = vmatpush1.msra.mxu0 %v48
  %758 = vmatprep.subr.mxu0 %v46
  %759 = vmatpush1.msra.mxu0 %v45
  %760 = vmatprep.subr.mxu0 %v43
  %761 = vmatpush1.msra.mxu0 %v42
  %762 = vmatprep.subr.mxu0 %v40
  %763 = vmatpush1.msra.mxu0 %v39
  %764 = vmatprep.subr.mxu0 %v37
  %765 = vmatpush1.msra.mxu0 %v36
  %766 = vmatprep.subr.mxu0 %v34
  %767 = vmatpush1.msra.mxu0 %v33
  %768 = vmatprep.subr.mxu0 %v31
  %769 = vmatpush1.msra.mxu0 %v30
  %770 = vmatprep.subr.mxu0 %v28
  %771 = vmatpush1.msra.mxu0 %v27
  %772 = vmatprep.subr.mxu0 %v25
  %773 = vmatpush1.msra.mxu0 %v24
  %774 = vmatprep.subr.mxu0 0.0
  %775 = vmatpush2.msra.mxu0 0.0
  %776 = vmatprep.subr.mxu0 0.0
  %777 = vmatpush2.msra.mxu0 0.0
  %778 = vmatprep.subr.mxu0 0.0
  %779 = vmatpush2.msra.mxu0 0.0
  %780 = vmatprep.subr.mxu0 0.0
  %781 = vmatpush2.msra.mxu0 0.0
  %782 = vmatprep.subr.mxu0 0.0
  %783 = vmatpush2.msra.mxu0 0.0
  %784 = vmatprep.subr.mxu0 0.0
  %785 = vmatpush2.msra.mxu0 0.0
  %786 = vmatprep.subr.mxu0 0.0
  %787 = vmatpush2.msra.mxu0 0.0
  %788 = vmatprep.subr.mxu0 0.0
  %789 = vmatpush2.msra.mxu0 0.0
  %790 = vmatprep.subr.mxu0 0.0
  %791 = vmatpush2.msra.mxu0 0.0
  %792 = vmatprep.subr.mxu0 0.0
  %793 = vmatpush2.msra.mxu0 0.0
  %794 = vmatprep.subr.mxu0 0.0
  %795 = vmatpush2.msra.mxu0 0.0
  %796 = vmatprep.subr.mxu0 0.0
  %797 = vmatpush2.msra.mxu0 0.0
  %798 = vmatprep.subr.mxu0 0.0
  %799 = vmatpush2.msra.mxu0 0.0
  %800 = vmatprep.subr.mxu0 0.0
  %801 = vmatpush2.msra.mxu0 0.0
  %802 = vmatprep.subr.mxu0 0.0
  %803 = vmatpush2.msra.mxu0 0.0
  %804 = vmatprep.subr.mxu0 0.0
  %805 = vmatpush2.msra.mxu0 0.0
  %806 = vmatprep.mubr.f32.mxu0 0.0
  %807 = vmatmul.mubr.f32.gmra.mxu0 %v737
  %v808 = vpop.f32.mrf.mxu0
  %v809 = vadd.f32 0.0, %v808
  %v810 = vpop.f32.mrf.mxu0
  %v811 = vadd.f32 0.0, %v810
  %812 = vdwg.mxu0
  %813 = vmatprep.subr.mxu0 0.0
  %814 = vmatpush1.msra.mxu0 %v71
  %815 = vmatprep.subr.mxu0 0.0
  %816 = vmatpush1.msra.mxu0 %v68
  %817 = vmatprep.subr.mxu0 0.0
  %818 = vmatpush1.msra.mxu0 %v65
  %819 = vmatprep.subr.mxu0 0.0
  %820 = vmatpush1.msra.mxu0 %v62
  %821 = vmatprep.subr.mxu0 0.0
  %822 = vmatpush1.msra.mxu0 %v59
  %823 = vmatprep.subr.mxu0 0.0
  %824 = vmatpush1.msra.mxu0 %v56
  %825 = vmatprep.subr.mxu0 0.0
  %826 = vmatpush1.msra.mxu0 %v53
  %827 = vmatprep.subr.mxu0 0.0
  %828 = vmatpush1.msra.mxu0 %v50
  %829 = vmatprep.subr.mxu0 0.0
  %830 = vmatpush1.msra.mxu0 %v47
  %831 = vmatprep.subr.mxu0 0.0
  %832 = vmatpush1.msra.mxu0 %v44
  %833 = vmatprep.subr.mxu0 0.0
  %834 = vmatpush1.msra.mxu0 %v41
  %835 = vmatprep.subr.mxu0 0.0
  %836 = vmatpush1.msra.mxu0 %v38
  %837 = vmatprep.subr.mxu0 0.0
  %838 = vmatpush1.msra.mxu0 %v35
  %839 = vmatprep.subr.mxu0 0.0
  %840 = vmatpush1.msra.mxu0 %v32
  %841 = vmatprep.subr.mxu0 0.0
  %842 = vmatpush1.msra.mxu0 %v29
  %843 = vmatprep.subr.mxu0 0.0
  %844 = vmatpush1.msra.mxu0 %v26
  %845 = vmatprep.subr.mxu0 0.0
  %846 = vmatpush2.msra.mxu0 0.0
  %847 = vmatprep.subr.mxu0 0.0
  %848 = vmatpush2.msra.mxu0 0.0
  %849 = vmatprep.subr.mxu0 0.0
  %850 = vmatpush2.msra.mxu0 0.0
  %851 = vmatprep.subr.mxu0 0.0
  %852 = vmatpush2.msra.mxu0 0.0
  %853 = vmatprep.subr.mxu0 0.0
  %854 = vmatpush2.msra.mxu0 0.0
  %855 = vmatprep.subr.mxu0 0.0
  %856 = vmatpush2.msra.mxu0 0.0
  %857 = vmatprep.subr.mxu0 0.0
  %858 = vmatpush2.msra.mxu0 0.0
  %859 = vmatprep.subr.mxu0 0.0
  %860 = vmatpush2.msra.mxu0 0.0
  %861 = vmatprep.subr.mxu0 0.0
  %862 = vmatpush2.msra.mxu0 0.0
  %863 = vmatprep.subr.mxu0 0.0
  %864 = vmatpush2.msra.mxu0 0.0
  %865 = vmatprep.subr.mxu0 0.0
  %866 = vmatpush2.msra.mxu0 0.0
  %867 = vmatprep.subr.mxu0 0.0
  %868 = vmatpush2.msra.mxu0 0.0
  %869 = vmatprep.subr.mxu0 0.0
  %870 = vmatpush2.msra.mxu0 0.0
  %871 = vmatprep.subr.mxu0 0.0
  %872 = vmatpush2.msra.mxu0 0.0
  %873 = vmatprep.subr.mxu0 0.0
  %874 = vmatpush2.msra.mxu0 0.0
  %875 = vmatprep.subr.mxu0 0.0
  %876 = vmatpush2.msra.mxu0 0.0
  %877 = vmatprep.mubr.f32.mxu0 0.0
  %878 = vmatmul.mubr.f32.gmra.mxu0 %v737
  %v879 = vpop.f32.mrf.mxu0
  %v880 = vadd.f32 0.0, %v879
  %v881 = vpop.f32.mrf.mxu0
  %882 = vdwg.mxu0
  %v883 = vadd.f32 %v739, %v809
  %v884 = vxor.u32 %v883, 2147483648
  %v885 = vmul.f32 %v884, 1.442695
  %v886 = vpow.pop %v885
  %v887 = vadd.f32 %v886, 1.0
  %v888 = vrcp.pop %v887
  %v889 = vmul.f32 1.0, %v888
  %v890 = vadd.f32 %v740, %v811
  %v891 = vxor.u32 %v890, 2147483648
  %v892 = vmul.f32 %v891, 1.442695
  %v893 = vpow.pop %v892
  %v894 = vadd.f32 %v893, 1.0
  %v895 = vrcp.pop %v894
  %v896 = vmul.f32 1.0, %v895
  %v897 = vadd.f32 %v880, %v231
  %v898 = vmul.f32 %v889, %v897
  %v899 = vadd.f32 %v741, %v898
  %v900 = vtanh.pop %v899
  %v901 = vsub.f32 %v737, %v900
  %v902 = vmul.f32 %v896, %v901
  %v903 = vadd.f32 %v900, %v902
  %s904 = scalar_lea.vmem %s0, 120
  %v905 = vld [vmem:[%s904] sm:$0xff]
  %v906 = vld [vmem:[%s904 + $0x8] sm:$0xff]
  %v907 = vld [vmem:[%s904 + $0x10] sm:$0xff]
  %908 = vmatprep.subr.mxu0 %v70
  %909 = vmatpush1.msra.mxu0 %v69
  %910 = vmatprep.subr.mxu0 %v67
  %911 = vmatpush1.msra.mxu0 %v66
  %912 = vmatprep.subr.mxu0 %v64
  %913 = vmatpush1.msra.mxu0 %v63
  %914 = vmatprep.subr.mxu0 %v61
  %915 = vmatpush1.msra.mxu0 %v60
  %916 = vmatprep.subr.mxu0 %v58
  %917 = vmatpush1.msra.mxu0 %v57
  %918 = vmatprep.subr.mxu0 %v55
  %919 = vmatpush1.msra.mxu0 %v54
  %920 = vmatprep.subr.mxu0 %v52
  %921 = vmatpush1.msra.mxu0 %v51
  %922 = vmatprep.subr.mxu0 %v49
  %923 = vmatpush1.msra.mxu0 %v48
  %924 = vmatprep.subr.mxu0 %v46
  %925 = vmatpush1.msra.mxu0 %v45
  %926 = vmatprep.subr.mxu0 %v43
  %927 = vmatpush1.msra.mxu0 %v42
  %928 = vmatprep.subr.mxu0 %v40
  %929 = vmatpush1.msra.mxu0 %v39
  %930 = vmatprep.subr.mxu0 %v37
  %931 = vmatpush1.msra.mxu0 %v36
  %932 = vmatprep.subr.mxu0 %v34
  %933 = vmatpush1.msra.mxu0 %v33
  %934 = vmatprep.subr.mxu0 %v31
  %935 = vmatpush1.msra.mxu0 %v30
  %936 = vmatprep.subr.mxu0 %v28
  %937 = vmatpush1.msra.mxu0 %v27
  %938 = vmatprep.subr.mxu0 %v25
  %939 = vmatpush1.msra.mxu0 %v24
  %940 = vmatprep.subr.mxu0 0.0
  %941 = vmatpush2.msra.mxu0 0.0
  %942 = vmatprep.subr.mxu0 0.0
  %943 = vmatpush2.msra.mxu0 0.0
  %944 = vmatprep.subr.mxu0 0.0
  %945 = vmatpush2.msra.mxu0 0.0
  %946 = vmatprep.subr.mxu0 0.0
  %947 = vmatpush2.msra.mxu0 0.0
  %948 = vmatprep.subr.mxu0 0.0
  %949 = vmatpush2.msra.mxu0 0.0
  %950 = vmatprep.subr.mxu0 0.0
  %951 = vmatpush2.msra.mxu0 0.0
  %952 = vmatprep.subr.mxu0 0.0
  %953 = vmatpush2.msra.mxu0 0.0
  %954 = vmatprep.subr.mxu0 0.0
  %955 = vmatpush2.msra.mxu0 0.0
  %956 = vmatprep.subr.mxu0 0.0
  %957 = vmatpush2.msra.mxu0 0.0
  %958 = vmatprep.subr.mxu0 0.0
  %959 = vmatpush2.msra.mxu0 0.0
  %960 = vmatprep.subr.mxu0 0.0
  %961 = vmatpush2.msra.mxu0 0.0
  %962 = vmatprep.subr.mxu0 0.0
  %963 = vmatpush2.msra.mxu0 0.0
  %964 = vmatprep.subr.mxu0 0.0
  %965 = vmatpush2.msra.mxu0 0.0
  %966 = vmatprep.subr.mxu0 0.0
  %967 = vmatpush2.msra.mxu0 0.0
  %968 = vmatprep.subr.mxu0 0.0
  %969 = vmatpush2.msra.mxu0 0.0
  %970 = vmatprep.subr.mxu0 0.0
  %971 = vmatpush2.msra.mxu0 0.0
  %972 = vmatprep.mubr.f32.mxu0 0.0
  %973 = vmatmul.mubr.f32.gmra.mxu0 %v903
  %v974 = vpop.f32.mrf.mxu0
  %v975 = vadd.f32 0.0, %v974
  %v976 = vpop.f32.mrf.mxu0
  %v977 = vadd.f32 0.0, %v976
  %978 = vdwg.mxu0
  %979 = vmatprep.subr.mxu0 0.0
  %980 = vmatpush1.msra.mxu0 %v71
  %981 = vmatprep.subr.mxu0 0.0
  %982 = vmatpush1.msra.mxu0 %v68
  %983 = vmatprep.subr.mxu0 0.0
  %984 = vmatpush1.msra.mxu0 %v65
  %985 = vmatprep.subr.mxu0 0.0
  %986 = vmatpush1.msra.mxu0 %v62
  %987 = vmatprep.subr.mxu0 0.0
  %988 = vmatpush1.msra.mxu0 %v59
  %989 = vmatprep.subr.mxu0 0.0
  %990 = vmatpush1.msra.mxu0 %v56
  %991 = vmatprep.subr.mxu0 0.0
  %992 = vmatpush1.msra.mxu0 %v53
  %993 = vmatprep.subr.mxu0 0.0
  %994 = vmatpush1.msra.mxu0 %v50
  %995 = vmatprep.subr.mxu0 0.0
  %996 = vmatpush1.msra.mxu0 %v47
  %997 = vmatprep.subr.mxu0 0.0
  %998 = vmatpush1.msra.mxu0 %v44
  %999 = vmatprep.subr.mxu0 0.0
  %1000 = vmatpush1.msra.mxu0 %v41
  %1001 = vmatprep.subr.mxu0 0.0
  %1002 = vmatpush1.msra.mxu0 %v38
  %1003 = vmatprep.subr.mxu0 0.0
  %1004 = vmatpush1.msra.mxu0 %v35
  %1005 = vmatprep.subr.mxu0 0.0
  %1006 = vmatpush1.msra.mxu0 %v32
  %1007 = vmatprep.subr.mxu0 0.0
  %1008 = vmatpush1.msra.mxu0 %v29
  %1009 = vmatprep.subr.mxu0 0.0
  %1010 = vmatpush1.msra.mxu0 %v26
  %1011 = vmatprep.subr.mxu0 0.0
  %1012 = vmatpush2.msra.mxu0 0.0
  %1013 = vmatprep.subr.mxu0 0.0
  %1014 = vmatpush2.msra.mxu0 0.0
  %1015 = vmatprep.subr.mxu0 0.0
  %1016 = vmatpush2.msra.mxu0 0.0
  %1017 = vmatprep.subr.mxu0 0.0
  %1018 = vmatpush2.msra.mxu0 0.0
  %1019 = vmatprep.subr.mxu0 0.0
  %1020 = vmatpush2.msra.mxu0 0.0
  %1021 = vmatprep.subr.mxu0 0.0
  %1022 = vmatpush2.msra.mxu0 0.0
  %1023 = vmatprep.subr.mxu0 0.0
  %1024 = vmatpush2.msra.mxu0 0.0
  %1025 = vmatprep.subr.mxu0 0.0
  %1026 = vmatpush2.msra.mxu0 0.0
  %1027 = vmatprep.subr.mxu0 0.0
  %1028 = vmatpush2.msra.mxu0 0.0
  %1029 = vmatprep.subr.mxu0 0.0
  %1030 = vmatpush2.msra.mxu0 0.0
  %1031 = vmatprep.subr.mxu0 0.0
  %1032 = vmatpush2.msra.mxu0 0.0
  %1033 = vmatprep.subr.mxu0 0.0
  %1034 = vmatpush2.msra.mxu0 0.0
  %1035 = vmatprep.subr.mxu0 0.0
  %1036 = vmatpush2.msra.mxu0 0.0
  %1037 = vmatprep.subr.mxu0 0.0
  %1038 = vmatpush2.msra.mxu0 0.0
  %1039 = vmatprep.subr.mxu0 0.0
  %1040 = vmatpush2.msra.mxu0 0.0
  %1041 = vmatprep.subr.mxu0 0.0
  %1042 = vmatpush2.msra.mxu0 0.0
  %1043 = vmatprep.mubr.f32.mxu0 0.0
  %1044 = vmatmul.mubr.f32.gmra.mxu0 %v903
  %v1045 = vpop.f32.mrf.mxu0
  %v1046 = vadd.f32 0.0, %v1045
  %v1047 = vpop.f32.mrf.mxu0
  %1048 = vdwg.mxu0
  %v1049 = vadd.f32 %v905, %v975
  %v1050 = vxor.u32 %v1049, 2147483648
  %v1051 = vmul.f32 %v1050, 1.442695
  %v1052 = vpow.pop %v1051
  %v1053 = vadd.f32 %v1052, 1.0
  %v1054 = vrcp.pop %v1053
  %v1055 = vmul.f32 1.0, %v1054
  %v1056 = vadd.f32 %v906, %v977
  %v1057 = vxor.u32 %v1056, 2147483648
  %v1058 = vmul.f32 %v1057, 1.442695
  %v1059 = vpow.pop %v1058
  %v1060 = vadd.f32 %v1059, 1.0
  %v1061 = vrcp.pop %v1060
  %v1062 = vmul.f32 1.0, %v1061
  %v1063 = vadd.f32 %v1046, %v231
  %v1064 = vmul.f32 %v1055, %v1063
  %v1065 = vadd.f32 %v907, %v1064
  %v1066 = vtanh.pop %v1065
  %v1067 = vsub.f32 %v903, %v1066
  %v1068 = vmul.f32 %v1062, %v1067
  %v1069 = vadd.f32 %v1066, %v1068
  %s1070 = scalar_lea.vmem %s0, 144
  %v1071 = vld [vmem:[%s1070] sm:$0xff]
  %v1072 = vld [vmem:[%s1070 + $0x8] sm:$0xff]
  %v1073 = vld [vmem:[%s1070 + $0x10] sm:$0xff]
  %1074 = vmatprep.subr.mxu0 %v70
  %1075 = vmatpush1.msra.mxu0 %v69
  %1076 = vmatprep.subr.mxu0 %v67
  %1077 = vmatpush1.msra.mxu0 %v66
  %1078 = vmatprep.subr.mxu0 %v64
  %1079 = vmatpush1.msra.mxu0 %v63
  %1080 = vmatprep.subr.mxu0 %v61
  %1081 = vmatpush1.msra.mxu0 %v60
  %1082 = vmatprep.subr.mxu0 %v58
  %1083 = vmatpush1.msra.mxu0 %v57
  %1084 = vmatprep.subr.mxu0 %v55
  %1085 = vmatpush1.msra.mxu0 %v54
  %1086 = vmatprep.subr.mxu0 %v52
  %1087 = vmatpush1.msra.mxu0 %v51
  %1088 = vmatprep.subr.mxu0 %v49
  %1089 = vmatpush1.msra.mxu0 %v48
  %1090 = vmatprep.subr.mxu0 %v46
  %1091 = vmatpush1.msra.mxu0 %v45
  %1092 = vmatprep.subr.mxu0 %v43
  %1093 = vmatpush1.msra.mxu0 %v42
  %1094 = vmatprep.subr.mxu0 %v40
  %1095 = vmatpush1.msra.mxu0 %v39
  %1096 = vmatprep.subr.mxu0 %v37
  %1097 = vmatpush1.msra.mxu0 %v36
  %1098 = vmatprep.subr.mxu0 %v34
  %1099 = vmatpush1.msra.mxu0 %v33
  %1100 = vmatprep.subr.mxu0 %v31
  %1101 = vmatpush1.msra.mxu0 %v30
  %1102 = vmatprep.subr.mxu0 %v28
  %1103 = vmatpush1.msra.mxu0 %v27
  %1104 = vmatprep.subr.mxu0 %v25
  %1105 = vmatpush1.msra.mxu0 %v24
  %1106 = vmatprep.subr.mxu0 0.0
  %1107 = vmatpush2.msra.mxu0 0.0
  %1108 = vmatprep.subr.mxu0 0.0
  %1109 = vmatpush2.msra.mxu0 0.0
  %1110 = vmatprep.subr.mxu0 0.0
  %1111 = vmatpush2.msra.mxu0 0.0
  %1112 = vmatprep.subr.mxu0 0.0
  %1113 = vmatpush2.msra.mxu0 0.0
  %1114 = vmatprep.subr.mxu0 0.0
  %1115 = vmatpush2.msra.mxu0 0.0
  %1116 = vmatprep.subr.mxu0 0.0
  %1117 = vmatpush2.msra.mxu0 0.0
  %1118 = vmatprep.subr.mxu0 0.0
  %1119 = vmatpush2.msra.mxu0 0.0
  %1120 = vmatprep.subr.mxu0 0.0
  %1121 = vmatpush2.msra.mxu0 0.0
  %1122 = vmatprep.subr.mxu0 0.0
  %1123 = vmatpush2.msra.mxu0 0.0
  %1124 = vmatprep.subr.mxu0 0.0
  %1125 = vmatpush2.msra.mxu0 0.0
  %1126 = vmatprep.subr.mxu0 0.0
  %1127 = vmatpush2.msra.mxu0 0.0
  %1128 = vmatprep.subr.mxu0 0.0
  %1129 = vmatpush2.msra.mxu0 0.0
  %1130 = vmatprep.subr.mxu0 0.0
  %1131 = vmatpush2.msra.mxu0 0.0
  %1132 = vmatprep.subr.mxu0 0.0
  %1133 = vmatpush2.msra.mxu0 0.0
  %1134 = vmatprep.subr.mxu0 0.0
  %1135 = vmatpush2.msra.mxu0 0.0
  %1136 = vmatprep.subr.mxu0 0.0
  %1137 = vmatpush2.msra.mxu0 0.0
  %1138 = vmatprep.mubr.f32.mxu0 0.0
  %1139 = vmatmul.mubr.f32.gmra.mxu0 %v1069
  %v1140 = vpop.f32.mrf.mxu0
  %v1141 = vadd.f32 0.0, %v1140
  %v1142 = vpop.f32.mrf.mxu0
  %v1143 = vadd.f32 0.0, %v1142
  %1144 = vdwg.mxu0
  %1145 = vmatprep.subr.mxu0 0.0
  %1146 = vmatpush1.msra.mxu0 %v71
  %1147 = vmatprep.subr.mxu0 0.0
  %1148 = vmatpush1.msra.mxu0 %v68
  %1149 = vmatprep.subr.mxu0 0.0
  %1150 = vmatpush1.msra.mxu0 %v65
  %1151 = vmatprep.subr.mxu0 0.0
  %1152 = vmatpush1.msra.mxu0 %v62
  %1153 = vmatprep.subr.mxu0 0.0
  %1154 = vmatpush1.msra.mxu0 %v59
  %1155 = vmatprep.subr.mxu0 0.0
  %1156 = vmatpush1.msra.mxu0 %v56
  %1157 = vmatprep.subr.mxu0 0.0
  %1158 = vmatpush1.msra.mxu0 %v53
  %1159 = vmatprep.subr.mxu0 0.0
  %1160 = vmatpush1.msra.mxu0 %v50
  %1161 = vmatprep.subr.mxu0 0.0
  %1162 = vmatpush1.msra.mxu0 %v47
  %1163 = vmatprep.subr.mxu0 0.0
  %1164 = vmatpush1.msra.mxu0 %v44
  %1165 = vmatprep.subr.mxu0 0.0
  %1166 = vmatpush1.msra.mxu0 %v41
  %1167 = vmatprep.subr.mxu0 0.0
  %1168 = vmatpush1.msra.mxu0 %v38
  %1169 = vmatprep.subr.mxu0 0.0
  %1170 = vmatpush1.msra.mxu0 %v35
  %1171 = vmatprep.subr.mxu0 0.0
  %1172 = vmatpush1.msra.mxu0 %v32
  %1173 = vmatprep.subr.mxu0 0.0
  %1174 = vmatpush1.msra.mxu0 %v29
  %1175 = vmatprep.subr.mxu0 0.0
  %1176 = vmatpush1.msra.mxu0 %v26
  %1177 = vmatprep.subr.mxu0 0.0
  %1178 = vmatpush2.msra.mxu0 0.0
  %1179 = vmatprep.subr.mxu0 0.0
  %1180 = vmatpush2.msra.mxu0 0.0
  %1181 = vmatprep.subr.mxu0 0.0
  %1182 = vmatpush2.msra.mxu0 0.0
  %1183 = vmatprep.subr.mxu0 0.0
  %1184 = vmatpush2.msra.mxu0 0.0
  %1185 = vmatprep.subr.mxu0 0.0
  %1186 = vmatpush2.msra.mxu0 0.0
  %1187 = vmatprep.subr.mxu0 0.0
  %1188 = vmatpush2.msra.mxu0 0.0
  %1189 = vmatprep.subr.mxu0 0.0
  %1190 = vmatpush2.msra.mxu0 0.0
  %1191 = vmatprep.subr.mxu0 0.0
  %1192 = vmatpush2.msra.mxu0 0.0
  %1193 = vmatprep.subr.mxu0 0.0
  %1194 = vmatpush2.msra.mxu0 0.0
  %1195 = vmatprep.subr.mxu0 0.0
  %1196 = vmatpush2.msra.mxu0 0.0
  %1197 = vmatprep.subr.mxu0 0.0
  %1198 = vmatpush2.msra.mxu0 0.0
  %1199 = vmatprep.subr.mxu0 0.0
  %1200 = vmatpush2.msra.mxu0 0.0
  %1201 = vmatprep.subr.mxu0 0.0
  %1202 = vmatpush2.msra.mxu0 0.0
  %1203 = vmatprep.subr.mxu0 0.0
  %1204 = vmatpush2.msra.mxu0 0.0
  %1205 = vmatprep.subr.mxu0 0.0
  %1206 = vmatpush2.msra.mxu0 0.0
  %1207 = vmatprep.subr.mxu0 0.0
  %1208 = vmatpush2.msra.mxu0 0.0
  %1209 = vmatprep.mubr.f32.mxu0 0.0
  %1210 = vmatmul.mubr.f32.gmra.mxu0 %v1069
  %v1211 = vpop.f32.mrf.mxu0
  %v1212 = vadd.f32 0.0, %v1211
  %v1213 = vpop.f32.mrf.mxu0
  %1214 = vdwg.mxu0
  %v1215 = vadd.f32 %v1071, %v1141
  %v1216 = vxor.u32 %v1215, 2147483648
  %v1217 = vmul.f32 %v1216, 1.442695
  %v1218 = vpow.pop %v1217
  %v1219 = vadd.f32 %v1218, 1.0
  %v1220 = vrcp.pop %v1219
  %v1221 = vmul.f32 1.0, %v1220
  %v1222 = vadd.f32 %v1072, %v1143
  %v1223 = vxor.u32 %v1222, 2147483648
  %v1224 = vmul.f32 %v1223, 1.442695
  %v1225 = vpow.pop %v1224
  %v1226 = vadd.f32 %v1225, 1.0
  %v1227 = vrcp.pop %v1226
  %v1228 = vmul.f32 1.0, %v1227
  %v1229 = vadd.f32 %v1212, %v231
  %v1230 = vmul.f32 %v1221, %v1229
  %v1231 = vadd.f32 %v1073, %v1230
  %v1232 = vtanh.pop %v1231
  %v1233 = vsub.f32 %v1069, %v1232
  %v1234 = vmul.f32 %v1228, %v1233
  %v1235 = vadd.f32 %v1232, %v1234
  %s1236 = scalar_lea.vmem %s0, 168
  %v1237 = vld [vmem:[%s1236] sm:$0xff]
  %v1238 = vld [vmem:[%s1236 + $0x8] sm:$0xff]
  %v1239 = vld [vmem:[%s1236 + $0x10] sm:$0xff]
  %1240 = vmatprep.subr.mxu0 %v70
  %1241 = vmatpush1.msra.mxu0 %v69
  %1242 = vmatprep.subr.mxu0 %v67
  %1243 = vmatpush1.msra.mxu0 %v66
  %1244 = vmatprep.subr.mxu0 %v64
  %1245 = vmatpush1.msra.mxu0 %v63
  %1246 = vmatprep.subr.mxu0 %v61
  %1247 = vmatpush1.msra.mxu0 %v60
  %1248 = vmatprep.subr.mxu0 %v58
  %1249 = vmatpush1.msra.mxu0 %v57
  %1250 = vmatprep.subr.mxu0 %v55
  %1251 = vmatpush1.msra.mxu0 %v54
  %1252 = vmatprep.subr.mxu0 %v52
  %1253 = vmatpush1.msra.mxu0 %v51
  %1254 = vmatprep.subr.mxu0 %v49
  %1255 = vmatpush1.msra.mxu0 %v48
  %1256 = vmatprep.subr.mxu0 %v46
  %1257 = vmatpush1.msra.mxu0 %v45
  %1258 = vmatprep.subr.mxu0 %v43
  %1259 = vmatpush1.msra.mxu0 %v42
  %1260 = vmatprep.subr.mxu0 %v40
  %1261 = vmatpush1.msra.mxu0 %v39
  %1262 = vmatprep.subr.mxu0 %v37
  %1263 = vmatpush1.msra.mxu0 %v36
  %1264 = vmatprep.subr.mxu0 %v34
  %1265 = vmatpush1.msra.mxu0 %v33
  %1266 = vmatprep.subr.mxu0 %v31
  %1267 = vmatpush1.msra.mxu0 %v30
  %1268 = vmatprep.subr.mxu0 %v28
  %1269 = vmatpush1.msra.mxu0 %v27
  %1270 = vmatprep.subr.mxu0 %v25
  %1271 = vmatpush1.msra.mxu0 %v24
  %1272 = vmatprep.subr.mxu0 0.0
  %1273 = vmatpush2.msra.mxu0 0.0
  %1274 = vmatprep.subr.mxu0 0.0
  %1275 = vmatpush2.msra.mxu0 0.0
  %1276 = vmatprep.subr.mxu0 0.0
  %1277 = vmatpush2.msra.mxu0 0.0
  %1278 = vmatprep.subr.mxu0 0.0
  %1279 = vmatpush2.msra.mxu0 0.0
  %1280 = vmatprep.subr.mxu0 0.0
  %1281 = vmatpush2.msra.mxu0 0.0
  %1282 = vmatprep.subr.mxu0 0.0
  %1283 = vmatpush2.msra.mxu0 0.0
  %1284 = vmatprep.subr.mxu0 0.0
  %1285 = vmatpush2.msra.mxu0 0.0
  %1286 = vmatprep.subr.mxu0 0.0
  %1287 = vmatpush2.msra.mxu0 0.0
  %1288 = vmatprep.subr.mxu0 0.0
  %1289 = vmatpush2.msra.mxu0 0.0
  %1290 = vmatprep.subr.mxu0 0.0
  %1291 = vmatpush2.msra.mxu0 0.0
  %1292 = vmatprep.subr.mxu0 0.0
  %1293 = vmatpush2.msra.mxu0 0.0
  %1294 = vmatprep.subr.mxu0 0.0
  %1295 = vmatpush2.msra.mxu0 0.0
  %1296 = vmatprep.subr.mxu0 0.0
  %1297 = vmatpush2.msra.mxu0 0.0
  %1298 = vmatprep.subr.mxu0 0.0
  %1299 = vmatpush2.msra.mxu0 0.0
  %1300 = vmatprep.subr.mxu0 0.0
  %1301 = vmatpush2.msra.mxu0 0.0
  %1302 = vmatprep.subr.mxu0 0.0
  %1303 = vmatpush2.msra.mxu0 0.0
  %1304 = vmatprep.mubr.f32.mxu0 0.0
  %1305 = vmatmul.mubr.f32.gmra.mxu0 %v1235
  %v1306 = vpop.f32.mrf.mxu0
  %v1307 = vadd.f32 0.0, %v1306
  %v1308 = vpop.f32.mrf.mxu0
  %v1309 = vadd.f32 0.0, %v1308
  %1310 = vdwg.mxu0
  %1311 = vmatprep.subr.mxu0 0.0
  %1312 = vmatpush1.msra.mxu0 %v71
  %1313 = vmatprep.subr.mxu0 0.0
  %1314 = vmatpush1.msra.mxu0 %v68
  %1315 = vmatprep.subr.mxu0 0.0
  %1316 = vmatpush1.msra.mxu0 %v65
  %1317 = vmatprep.subr.mxu0 0.0
  %1318 = vmatpush1.msra.mxu0 %v62
  %1319 = vmatprep.subr.mxu0 0.0
  %1320 = vmatpush1.msra.mxu0 %v59
  %1321 = vmatprep.subr.mxu0 0.0
  %1322 = vmatpush1.msra.mxu0 %v56
  %1323 = vmatprep.subr.mxu0 0.0
  %1324 = vmatpush1.msra.mxu0 %v53
  %1325 = vmatprep.subr.mxu0 0.0
  %1326 = vmatpush1.msra.mxu0 %v50
  %1327 = vmatprep.subr.mxu0 0.0
  %1328 = vmatpush1.msra.mxu0 %v47
  %1329 = vmatprep.subr.mxu0 0.0
  %1330 = vmatpush1.msra.mxu0 %v44
  %1331 = vmatprep.subr.mxu0 0.0
  %1332 = vmatpush1.msra.mxu0 %v41
  %1333 = vmatprep.subr.mxu0 0.0
  %1334 = vmatpush1.msra.mxu0 %v38
  %1335 = vmatprep.subr.mxu0 0.0
  %1336 = vmatpush1.msra.mxu0 %v35
  %1337 = vmatprep.subr.mxu0 0.0
  %1338 = vmatpush1.msra.mxu0 %v32
  %1339 = vmatprep.subr.mxu0 0.0
  %1340 = vmatpush1.msra.mxu0 %v29
  %1341 = vmatprep.subr.mxu0 0.0
  %1342 = vmatpush1.msra.mxu0 %v26
  %1343 = vmatprep.subr.mxu0 0.0
  %1344 = vmatpush2.msra.mxu0 0.0
  %1345 = vmatprep.subr.mxu0 0.0
  %1346 = vmatpush2.msra.mxu0 0.0
  %1347 = vmatprep.subr.mxu0 0.0
  %1348 = vmatpush2.msra.mxu0 0.0
  %1349 = vmatprep.subr.mxu0 0.0
  %1350 = vmatpush2.msra.mxu0 0.0
  %1351 = vmatprep.subr.mxu0 0.0
  %1352 = vmatpush2.msra.mxu0 0.0
  %1353 = vmatprep.subr.mxu0 0.0
  %1354 = vmatpush2.msra.mxu0 0.0
  %1355 = vmatprep.subr.mxu0 0.0
  %1356 = vmatpush2.msra.mxu0 0.0
  %1357 = vmatprep.subr.mxu0 0.0
  %1358 = vmatpush2.msra.mxu0 0.0
  %1359 = vmatprep.subr.mxu0 0.0
  %1360 = vmatpush2.msra.mxu0 0.0
  %1361 = vmatprep.subr.mxu0 0.0
  %1362 = vmatpush2.msra.mxu0 0.0
  %1363 = vmatprep.subr.mxu0 0.0
  %1364 = vmatpush2.msra.mxu0 0.0
  %1365 = vmatprep.subr.mxu0 0.0
  %1366 = vmatpush2.msra.mxu0 0.0
  %1367 = vmatprep.subr.mxu0 0.0
  %1368 = vmatpush2.msra.mxu0 0.0
  %1369 = vmatprep.subr.mxu0 0.0
  %1370 = vmatpush2.msra.mxu0 0.0
  %1371 = vmatprep.subr.mxu0 0.0
  %1372 = vmatpush2.msra.mxu0 0.0
  %1373 = vmatprep.subr.mxu0 0.0
  %1374 = vmatpush2.msra.mxu0 0.0
  %1375 = vmatprep.mubr.f32.mxu0 0.0
  %1376 = vmatmul.mubr.f32.gmra.mxu0 %v1235
  %v1377 = vpop.f32.mrf.mxu0
  %v1378 = vadd.f32 0.0, %v1377
  %v1379 = vpop.f32.mrf.mxu0
  %1380 = vdwg.mxu0
  %v1381 = vadd.f32 %v1237, %v1307
  %v1382 = vxor.u32 %v1381, 2147483648
  %v1383 = vmul.f32 %v1382, 1.442695
  %v1384 = vpow.pop %v1383
  %v1385 = vadd.f32 %v1384, 1.0
  %v1386 = vrcp.pop %v1385
  %v1387 = vmul.f32 1.0, %v1386
  %v1388 = vadd.f32 %v1238, %v1309
  %v1389 = vxor.u32 %v1388, 2147483648
  %v1390 = vmul.f32 %v1389, 1.442695
  %v1391 = vpow.pop %v1390
  %v1392 = vadd.f32 %v1391, 1.0
  %v1393 = vrcp.pop %v1392
  %v1394 = vmul.f32 1.0, %v1393
  %v1395 = vadd.f32 %v1378, %v231
  %v1396 = vmul.f32 %v1387, %v1395
  %v1397 = vadd.f32 %v1239, %v1396
  %v1398 = vtanh.pop %v1397
  %v1399 = vsub.f32 %v1235, %v1398
  %v1400 = vmul.f32 %v1394, %v1399
  %v1401 = vadd.f32 %v1398, %v1400
  %1402 = vst [vmem:[#allocation2] sm:$0xff] %v1401
  %1403 = vst [vmem:[%s3] sm:$0xff] %v1401
  // Predicated region
  $region18: #{encoder_decoder_forward.6} parent=0 // pred_check
    _
  $region19: #{encoder_decoder_forward.6} parent=0 // pred_check_branch
    %1405 = sbr.rel (0) target = $region21
  $region20: #{encoder_decoder_forward.6} parent=0 // pred_region
    _
  $region21: #{encoder_decoder_forward.6} parent=0 // pred_fallthru
    _
  // Predicated region
  $region22: #{encoder_decoder_forward.6} parent=0 // pred_check
    _
  $region23: #{encoder_decoder_forward.6} parent=0 // pred_check_branch
    %1407 = sbr.rel (0) target = $region25
  $region24: #{encoder_decoder_forward.6} parent=0 // pred_region
    _
  $region25: #{encoder_decoder_forward.6} parent=0 // pred_fallthru
    _

// kernel: encoder_decoder_forward.8
$region0: #{encoder_decoder_forward.8}
  #allocation0 [shape = 'u32[]', space=smem, size = 0x4, offset = 0x4, fixed_abs, tag = 'smem constant byte address 0x4 - core index']
  #allocation1 [shape = 'u32[144,128]{1,0:T(1,128)}', space=vmem, size = 0x12000, scoped, tag = 'internal scratch']
  #allocation2 [shape = 'f32[8,128]{1,0:T(8,128)}', space=vmem, size = 0x1000, scoped, tag = 'scratch operand']
  #allocation3 [shape = 'f32[8,384]{1,0:T(8,128)}', space=vmem, size = 0x3000, scoped, tag = 'scratch operand']
  %s0 = inlined_call_operand.vmem [shape: f32[8,8,384], index: 0, kind: input, shape index: {}]
  %s1 = inlined_call_operand.vmem [shape: f32[8,128], index: 1, kind: input, shape index: {}]
  %s2 = inlined_call_operand.vmem [shape: f32[128,384], index: 2, kind: input, shape index: {}]
  %s3 = inlined_call_operand.vmem [shape: f32[128,384], index: 3, kind: input, shape index: {}]
  %s4 = inlined_call_operand.vmem [shape: f32[1,128], index: 4, kind: input, shape index: {}]
  %s5 = inlined_call_operand.vmem [shape: f32[8,8,128], index: 5, kind: output, shape index: {}]
  %s6 = sld [smem:[#allocation0]]
  $region34: #{encoder_decoder_forward.8} parent=0
    _
  %s8 = ssub.s32 1, %s6
  %s9 = scalar_select 0, %s8, %s6
  // Predicated region
  $region2: #{encoder_decoder_forward.8} parent=0 // pred_check
    _
  $region3: #{encoder_decoder_forward.8} parent=0 // pred_check_branch
    %11 = sbr.rel (0) target = $region5
  $region4: #{encoder_decoder_forward.8} parent=0 // pred_region
    _
  $region5: #{encoder_decoder_forward.8} parent=0 // pred_fallthru
    _
  // Predicated region
  $region6: #{encoder_decoder_forward.8} parent=0 // pred_check
    _
  $region7: #{encoder_decoder_forward.8} parent=0 // pred_check_branch
    %13 = sbr.rel (0) target = $region9
  $region8: #{encoder_decoder_forward.8} parent=0 // pred_region
    _
  $region9: #{encoder_decoder_forward.8} parent=0 // pred_fallthru
    _
  // Predicated region
  $region10: #{encoder_decoder_forward.8} parent=0 // pred_check
    _
  $region11: #{encoder_decoder_forward.8} parent=0 // pred_check_branch
    %15 = sbr.rel (0) target = $region13
  $region12: #{encoder_decoder_forward.8} parent=0 // pred_region
    _
  $region13: #{encoder_decoder_forward.8} parent=0 // pred_fallthru
    _
  // Predicated region
  $region14: #{encoder_decoder_forward.8} parent=0 // pred_check
    _
  $region15: #{encoder_decoder_forward.8} parent=0 // pred_check_branch
    %17 = sbr.rel (0) target = $region17
  $region16: #{encoder_decoder_forward.8} parent=0 // pred_region
    _
  $region17: #{encoder_decoder_forward.8} parent=0 // pred_fallthru
    _
  // Predicated region
  $region18: #{encoder_decoder_forward.8} parent=0 // pred_check
    _
  $region19: #{encoder_decoder_forward.8} parent=0 // pred_check_branch
    %19 = sbr.rel (0) target = $region21
  $region20: #{encoder_decoder_forward.8} parent=0 // pred_region
    _
  $region21: #{encoder_decoder_forward.8} parent=0 // pred_fallthru
    _
  %p20 = scmp.eq.s32.totalorder 0, 0
  // Predicated region
  $region22: #{encoder_decoder_forward.8} parent=0 // pred_check
    %p21 = pneg %p20
  $region23: #{encoder_decoder_forward.8} parent=0 // pred_check_branch
    %23 = sbr.rel (%p21) target = $region25
  $region24: #{encoder_decoder_forward.8} parent=0 // pred_region
    %v24 = vld [vmem:[%s1] sm:$0xff]
    %25 = vst [vmem:[#allocation2] sm:$0xff] %v24
    %v26 = vld [vmem:[%s1] sm:$0xff]
    %v27 = vld [vmem:[%s2] sm:$0xff]
    %v28 = vld [vmem:[%s2 + $0x8] sm:$0xff]
    %v29 = vld [vmem:[%s2 + $0x10] sm:$0xff]
    %v30 = vld [vmem:[%s2 + $0x18] sm:$0xff]
    %v31 = vld [vmem:[%s2 + $0x20] sm:$0xff]
    %v32 = vld [vmem:[%s2 + $0x28] sm:$0xff]
    %v33 = vld [vmem:[%s2 + $0x30] sm:$0xff]
    %v34 = vld [vmem:[%s2 + $0x38] sm:$0xff]
    %v35 = vld [vmem:[%s2 + $0x40] sm:$0xff]
    %v36 = vld [vmem:[%s2 + $0x48] sm:$0xff]
    %v37 = vld [vmem:[%s2 + $0x50] sm:$0xff]
    %v38 = vld [vmem:[%s2 + $0x58] sm:$0xff]
    %v39 = vld [vmem:[%s2 + $0x60] sm:$0xff]
    %v40 = vld [vmem:[%s2 + $0x68] sm:$0xff]
    %v41 = vld [vmem:[%s2 + $0x70] sm:$0xff]
    %v42 = vld [vmem:[%s2 + $0x78] sm:$0xff]
    %v43 = vld [vmem:[%s2 + $0x80] sm:$0xff]
    %v44 = vld [vmem:[%s2 + $0x88] sm:$0xff]
    %v45 = vld [vmem:[%s2 + $0x90] sm:$0xff]
    %v46 = vld [vmem:[%s2 + $0x98] sm:$0xff]
    %v47 = vld [vmem:[%s2 + $0xa0] sm:$0xff]
    %v48 = vld [vmem:[%s2 + $0xa8] sm:$0xff]
    %v49 = vld [vmem:[%s2 + $0xb0] sm:$0xff]
    %v50 = vld [vmem:[%s2 + $0xb8] sm:$0xff]
    %v51 = vld [vmem:[%s2 + $0xc0] sm:$0xff]
    %v52 = vld [vmem:[%s2 + $0xc8] sm:$0xff]
    %v53 = vld [vmem:[%s2 + $0xd0] sm:$0xff]
    %v54 = vld [vmem:[%s2 + $0xd8] sm:$0xff]
    %v55 = vld [vmem:[%s2 + $0xe0] sm:$0xff]
    %v56 = vld [vmem:[%s2 + $0xe8] sm:$0xff]
    %v57 = vld [vmem:[%s2 + $0xf0] sm:$0xff]
    %v58 = vld [vmem:[%s2 + $0xf8] sm:$0xff]
    %v59 = vld [vmem:[%s2 + $0x100] sm:$0xff]
    %v60 = vld [vmem:[%s2 + $0x108] sm:$0xff]
    %v61 = vld [vmem:[%s2 + $0x110] sm:$0xff]
    %v62 = vld [vmem:[%s2 + $0x118] sm:$0xff]
    %v63 = vld [vmem:[%s2 + $0x120] sm:$0xff]
    %v64 = vld [vmem:[%s2 + $0x128] sm:$0xff]
    %v65 = vld [vmem:[%s2 + $0x130] sm:$0xff]
    %v66 = vld [vmem:[%s2 + $0x138] sm:$0xff]
    %v67 = vld [vmem:[%s2 + $0x140] sm:$0xff]
    %v68 = vld [vmem:[%s2 + $0x148] sm:$0xff]
    %v69 = vld [vmem:[%s2 + $0x150] sm:$0xff]
    %v70 = vld [vmem:[%s2 + $0x158] sm:$0xff]
    %v71 = vld [vmem:[%s2 + $0x160] sm:$0xff]
    %v72 = vld [vmem:[%s2 + $0x168] sm:$0xff]
    %v73 = vld [vmem:[%s2 + $0x170] sm:$0xff]
    %v74 = vld [vmem:[%s2 + $0x178] sm:$0xff]
    %75 = vmatprep.subr.mxu0 %v73
    %76 = vmatpush1.msra.mxu0 %v72
    %77 = vmatprep.subr.mxu0 %v70
    %78 = vmatpush1.msra.mxu0 %v69
    %79 = vmatprep.subr.mxu0 %v67
    %80 = vmatpush1.msra.mxu0 %v66
    %81 = vmatprep.subr.mxu0 %v64
    %82 = vmatpush1.msra.mxu0 %v63
    %83 = vmatprep.subr.mxu0 %v61
    %84 = vmatpush1.msra.mxu0 %v60
    %85 = vmatprep.subr.mxu0 %v58
    %86 = vmatpush1.msra.mxu0 %v57
    %87 = vmatprep.subr.mxu0 %v55
    %88 = vmatpush1.msra.mxu0 %v54
    %89 = vmatprep.subr.mxu0 %v52
    %90 = vmatpush1.msra.mxu0 %v51
    %91 = vmatprep.subr.mxu0 %v49
    %92 = vmatpush1.msra.mxu0 %v48
    %93 = vmatprep.subr.mxu0 %v46
    %94 = vmatpush1.msra.mxu0 %v45
    %95 = vmatprep.subr.mxu0 %v43
    %96 = vmatpush1.msra.mxu0 %v42
    %97 = vmatprep.subr.mxu0 %v40
    %98 = vmatpush1.msra.mxu0 %v39
    %99 = vmatprep.subr.mxu0 %v37
    %100 = vmatpush1.msra.mxu0 %v36
    %101 = vmatprep.subr.mxu0 %v34
    %102 = vmatpush1.msra.mxu0 %v33
    %103 = vmatprep.subr.mxu0 %v31
    %104 = vmatpush1.msra.mxu0 %v30
    %105 = vmatprep.subr.mxu0 %v28
    %106 = vmatpush1.msra.mxu0 %v27
    %107 = vmatprep.subr.mxu0 0.0
    %108 = vmatpush2.msra.mxu0 0.0
    %109 = vmatprep.subr.mxu0 0.0
    %110 = vmatpush2.msra.mxu0 0.0
    %111 = vmatprep.subr.mxu0 0.0
    %112 = vmatpush2.msra.mxu0 0.0
    %113 = vmatprep.subr.mxu0 0.0
    %114 = vmatpush2.msra.mxu0 0.0
    %115 = vmatprep.subr.mxu0 0.0
    %116 = vmatpush2.msra.mxu0 0.0
    %117 = vmatprep.subr.mxu0 0.0
    %118 = vmatpush2.msra.mxu0 0.0
    %119 = vmatprep.subr.mxu0 0.0
    %120 = vmatpush2.msra.mxu0 0.0
    %121 = vmatprep.subr.mxu0 0.0
    %122 = vmatpush2.msra.mxu0 0.0
    %123 = vmatprep.subr.mxu0 0.0
    %124 = vmatpush2.msra.mxu0 0.0
    %125 = vmatprep.subr.mxu0 0.0
    %126 = vmatpush2.msra.mxu0 0.0
    %127 = vmatprep.subr.mxu0 0.0
    %128 = vmatpush2.msra.mxu0 0.0
    %129 = vmatprep.subr.mxu0 0.0
    %130 = vmatpush2.msra.mxu0 0.0
    %131 = vmatprep.subr.mxu0 0.0
    %132 = vmatpush2.msra.mxu0 0.0
    %133 = vmatprep.subr.mxu0 0.0
    %134 = vmatpush2.msra.mxu0 0.0
    %135 = vmatprep.subr.mxu0 0.0
    %136 = vmatpush2.msra.mxu0 0.0
    %137 = vmatprep.subr.mxu0 0.0
    %138 = vmatpush2.msra.mxu0 0.0
    %139 = vmatprep.mubr.f32.mxu0 0.0
    %140 = vmatmul.mubr.f32.gmra.mxu0 %v26
    %v141 = vpop.f32.mrf.mxu0
    %v142 = vadd.f32 0.0, %v141
    %v143 = vpop.f32.mrf.mxu0
    %v144 = vadd.f32 0.0, %v143
    %145 = vdwg.mxu0
    %146 = vmatprep.subr.mxu0 0.0
    %147 = vmatpush1.msra.mxu0 %v74
    %148 = vmatprep.subr.mxu0 0.0
    %149 = vmatpush1.msra.mxu0 %v71
    %150 = vmatprep.subr.mxu0 0.0
    %151 = vmatpush1.msra.mxu0 %v68
    %152 = vmatprep.subr.mxu0 0.0
    %153 = vmatpush1.msra.mxu0 %v65
    %154 = vmatprep.subr.mxu0 0.0
    %155 = vmatpush1.msra.mxu0 %v62
    %156 = vmatprep.subr.mxu0 0.0
    %157 = vmatpush1.msra.mxu0 %v59
    %158 = vmatprep.subr.mxu0 0.0
    %159 = vmatpush1.msra.mxu0 %v56
    %160 = vmatprep.subr.mxu0 0.0
    %161 = vmatpush1.msra.mxu0 %v53
    %162 = vmatprep.subr.mxu0 0.0
    %163 = vmatpush1.msra.mxu0 %v50
    %164 = vmatprep.subr.mxu0 0.0
    %165 = vmatpush1.msra.mxu0 %v47
    %166 = vmatprep.subr.mxu0 0.0
    %167 = vmatpush1.msra.mxu0 %v44
    %168 = vmatprep.subr.mxu0 0.0
    %169 = vmatpush1.msra.mxu0 %v41
    %170 = vmatprep.subr.mxu0 0.0
    %171 = vmatpush1.msra.mxu0 %v38
    %172 = vmatprep.subr.mxu0 0.0
    %173 = vmatpush1.msra.mxu0 %v35
    %174 = vmatprep.subr.mxu0 0.0
    %175 = vmatpush1.msra.mxu0 %v32
    %176 = vmatprep.subr.mxu0 0.0
    %177 = vmatpush1.msra.mxu0 %v29
    %178 = vmatprep.subr.mxu0 0.0
    %179 = vmatpush2.msra.mxu0 0.0
    %180 = vmatprep.subr.mxu0 0.0
    %181 = vmatpush2.msra.mxu0 0.0
    %182 = vmatprep.subr.mxu0 0.0
    %183 = vmatpush2.msra.mxu0 0.0
    %184 = vmatprep.subr.mxu0 0.0
    %185 = vmatpush2.msra.mxu0 0.0
    %186 = vmatprep.subr.mxu0 0.0
    %187 = vmatpush2.msra.mxu0 0.0
    %188 = vmatprep.subr.mxu0 0.0
    %189 = vmatpush2.msra.mxu0 0.0
    %190 = vmatprep.subr.mxu0 0.0
    %191 = vmatpush2.msra.mxu0 0.0
    %192 = vmatprep.subr.mxu0 0.0
    %193 = vmatpush2.msra.mxu0 0.0
    %194 = vmatprep.subr.mxu0 0.0
    %195 = vmatpush2.msra.mxu0 0.0
    %196 = vmatprep.subr.mxu0 0.0
    %197 = vmatpush2.msra.mxu0 0.0
    %198 = vmatprep.subr.mxu0 0.0
    %199 = vmatpush2.msra.mxu0 0.0
    %200 = vmatprep.subr.mxu0 0.0
    %201 = vmatpush2.msra.mxu0 0.0
    %202 = vmatprep.subr.mxu0 0.0
    %203 = vmatpush2.msra.mxu0 0.0
    %204 = vmatprep.subr.mxu0 0.0
    %205 = vmatpush2.msra.mxu0 0.0
    %206 = vmatprep.subr.mxu0 0.0
    %207 = vmatpush2.msra.mxu0 0.0
    %208 = vmatprep.subr.mxu0 0.0
    %209 = vmatpush2.msra.mxu0 0.0
    %210 = vmatprep.mubr.f32.mxu0 0.0
    %211 = vmatmul.mubr.f32.gmra.mxu0 %v26
    %v212 = vpop.f32.mrf.mxu0
    %v213 = vadd.f32 0.0, %v212
    %v214 = vpop.f32.mrf.mxu0
    %215 = vdwg.mxu0
    %216 = vst [vmem:[#allocation3] sm:$0xff] %v142
    %217 = vst [vmem:[#allocation3 + $0x8] sm:$0xff] %v144
    %218 = vst [vmem:[#allocation3 + $0x10] sm:$0xff] %v213
  $region25: #{encoder_decoder_forward.8} parent=0 // pred_fallthru
    _
  %v219 = vld [vmem:[#allocation3] sm:$0xff]
  %v220 = vld [vmem:[#allocation3 + $0x8] sm:$0xff]
  %v221 = vld [vmem:[#allocation3 + $0x10] sm:$0xff]
  %v222 = vld [vmem:[%s4] sm:$0x1]
  %v223 = vld [vmem:[#allocation2] sm:$0xff]
  %v224 = vld [vmem:[%s0] sm:$0xff]
  %v225 = vld [vmem:[%s0 + $0x8] sm:$0xff]
  %v226 = vld [vmem:[%s0 + $0x10] sm:$0xff]
  %v227 = vadd.f32 %v224, %v219
  %v228 = vadd.f32 %v225, %v220
  %v229 = vadd.f32 %v226, %v221
  %v230 = vld [vmem:[%s3] sm:$0xff]
  %v231 = vld [vmem:[%s3 + $0x8] sm:$0xff]
  %v232 = vld [vmem:[%s3 + $0x10] sm:$0xff]
  %v233 = vld [vmem:[%s3 + $0x18] sm:$0xff]
  %v234 = vld [vmem:[%s3 + $0x20] sm:$0xff]
  %v235 = vld [vmem:[%s3 + $0x28] sm:$0xff]
  %v236 = vld [vmem:[%s3 + $0x30] sm:$0xff]
  %v237 = vld [vmem:[%s3 + $0x38] sm:$0xff]
  %v238 = vld [vmem:[%s3 + $0x40] sm:$0xff]
  %v239 = vld [vmem:[%s3 + $0x48] sm:$0xff]
  %v240 = vld [vmem:[%s3 + $0x50] sm:$0xff]
  %v241 = vld [vmem:[%s3 + $0x58] sm:$0xff]
  %v242 = vld [vmem:[%s3 + $0x60] sm:$0xff]
  %v243 = vld [vmem:[%s3 + $0x68] sm:$0xff]
  %v244 = vld [vmem:[%s3 + $0x70] sm:$0xff]
  %v245 = vld [vmem:[%s3 + $0x78] sm:$0xff]
  %v246 = vld [vmem:[%s3 + $0x80] sm:$0xff]
  %v247 = vld [vmem:[%s3 + $0x88] sm:$0xff]
  %v248 = vld [vmem:[%s3 + $0x90] sm:$0xff]
  %v249 = vld [vmem:[%s3 + $0x98] sm:$0xff]
  %v250 = vld [vmem:[%s3 + $0xa0] sm:$0xff]
  %v251 = vld [vmem:[%s3 + $0xa8] sm:$0xff]
  %v252 = vld [vmem:[%s3 + $0xb0] sm:$0xff]
  %v253 = vld [vmem:[%s3 + $0xb8] sm:$0xff]
  %v254 = vld [vmem:[%s3 + $0xc0] sm:$0xff]
  %v255 = vld [vmem:[%s3 + $0xc8] sm:$0xff]
  %v256 = vld [vmem:[%s3 + $0xd0] sm:$0xff]
  %v257 = vld [vmem:[%s3 + $0xd8] sm:$0xff]
  %v258 = vld [vmem:[%s3 + $0xe0] sm:$0xff]
  %v259 = vld [vmem:[%s3 + $0xe8] sm:$0xff]
  %v260 = vld [vmem:[%s3 + $0xf0] sm:$0xff]
  %v261 = vld [vmem:[%s3 + $0xf8] sm:$0xff]
  %v262 = vld [vmem:[%s3 + $0x100] sm:$0xff]
  %v263 = vld [vmem:[%s3 + $0x108] sm:$0xff]
  %v264 = vld [vmem:[%s3 + $0x110] sm:$0xff]
  %v265 = vld [vmem:[%s3 + $0x118] sm:$0xff]
  %v266 = vld [vmem:[%s3 + $0x120] sm:$0xff]
  %v267 = vld [vmem:[%s3 + $0x128] sm:$0xff]
  %v268 = vld [vmem:[%s3 + $0x130] sm:$0xff]
  %v269 = vld [vmem:[%s3 + $0x138] sm:$0xff]
  %v270 = vld [vmem:[%s3 + $0x140] sm:$0xff]
  %v271 = vld [vmem:[%s3 + $0x148] sm:$0xff]
  %v272 = vld [vmem:[%s3 + $0x150] sm:$0xff]
  %v273 = vld [vmem:[%s3 + $0x158] sm:$0xff]
  %v274 = vld [vmem:[%s3 + $0x160] sm:$0xff]
  %v275 = vld [vmem:[%s3 + $0x168] sm:$0xff]
  %v276 = vld [vmem:[%s3 + $0x170] sm:$0xff]
  %v277 = vld [vmem:[%s3 + $0x178] sm:$0xff]
  %278 = vmatprep.subr.mxu0 %v276
  %279 = vmatpush1.msra.mxu0 %v275
  %280 = vmatprep.subr.mxu0 %v273
  %281 = vmatpush1.msra.mxu0 %v272
  %282 = vmatprep.subr.mxu0 %v270
  %283 = vmatpush1.msra.mxu0 %v269
  %284 = vmatprep.subr.mxu0 %v267
  %285 = vmatpush1.msra.mxu0 %v266
  %286 = vmatprep.subr.mxu0 %v264
  %287 = vmatpush1.msra.mxu0 %v263
  %288 = vmatprep.subr.mxu0 %v261
  %289 = vmatpush1.msra.mxu0 %v260
  %290 = vmatprep.subr.mxu0 %v258
  %291 = vmatpush1.msra.mxu0 %v257
  %292 = vmatprep.subr.mxu0 %v255
  %293 = vmatpush1.msra.mxu0 %v254
  %294 = vmatprep.subr.mxu0 %v252
  %295 = vmatpush1.msra.mxu0 %v251
  %296 = vmatprep.subr.mxu0 %v249
  %297 = vmatpush1.msra.mxu0 %v248
  %298 = vmatprep.subr.mxu0 %v246
  %299 = vmatpush1.msra.mxu0 %v245
  %300 = vmatprep.subr.mxu0 %v243
  %301 = vmatpush1.msra.mxu0 %v242
  %302 = vmatprep.subr.mxu0 %v240
  %303 = vmatpush1.msra.mxu0 %v239
  %304 = vmatprep.subr.mxu0 %v237
  %305 = vmatpush1.msra.mxu0 %v236
  %306 = vmatprep.subr.mxu0 %v234
  %307 = vmatpush1.msra.mxu0 %v233
  %308 = vmatprep.subr.mxu0 %v231
  %309 = vmatpush1.msra.mxu0 %v230
  %310 = vmatprep.subr.mxu0 0.0
  %311 = vmatpush2.msra.mxu0 0.0
  %312 = vmatprep.subr.mxu0 0.0
  %313 = vmatpush2.msra.mxu0 0.0
  %314 = vmatprep.subr.mxu0 0.0
  %315 = vmatpush2.msra.mxu0 0.0
  %316 = vmatprep.subr.mxu0 0.0
  %317 = vmatpush2.msra.mxu0 0.0
  %318 = vmatprep.subr.mxu0 0.0
  %319 = vmatpush2.msra.mxu0 0.0
  %320 = vmatprep.subr.mxu0 0.0
  %321 = vmatpush2.msra.mxu0 0.0
  %322 = vmatprep.subr.mxu0 0.0
  %323 = vmatpush2.msra.mxu0 0.0
  %324 = vmatprep.subr.mxu0 0.0
  %325 = vmatpush2.msra.mxu0 0.0
  %326 = vmatprep.subr.mxu0 0.0
  %327 = vmatpush2.msra.mxu0 0.0
  %328 = vmatprep.subr.mxu0 0.0
  %329 = vmatpush2.msra.mxu0 0.0
  %330 = vmatprep.subr.mxu0 0.0
  %331 = vmatpush2.msra.mxu0 0.0
  %332 = vmatprep.subr.mxu0 0.0
  %333 = vmatpush2.msra.mxu0 0.0
  %334 = vmatprep.subr.mxu0 0.0
  %335 = vmatpush2.msra.mxu0 0.0
  %336 = vmatprep.subr.mxu0 0.0
  %337 = vmatpush2.msra.mxu0 0.0
  %338 = vmatprep.subr.mxu0 0.0
  %339 = vmatpush2.msra.mxu0 0.0
  %340 = vmatprep.subr.mxu0 0.0
  %341 = vmatpush2.msra.mxu0 0.0
  %342 = vmatprep.mubr.f32.mxu0 0.0
  %343 = vmatmul.mubr.f32.gmra.mxu0 %v223
  %v344 = vpop.f32.mrf.mxu0
  %v345 = vadd.f32 0.0, %v344
  %v346 = vpop.f32.mrf.mxu0
  %v347 = vadd.f32 0.0, %v346
  %348 = vdwg.mxu0
  %349 = vmatprep.subr.mxu0 0.0
  %350 = vmatpush1.msra.mxu0 %v277
  %351 = vmatprep.subr.mxu0 0.0
  %352 = vmatpush1.msra.mxu0 %v274
  %353 = vmatprep.subr.mxu0 0.0
  %354 = vmatpush1.msra.mxu0 %v271
  %355 = vmatprep.subr.mxu0 0.0
  %356 = vmatpush1.msra.mxu0 %v268
  %357 = vmatprep.subr.mxu0 0.0
  %358 = vmatpush1.msra.mxu0 %v265
  %359 = vmatprep.subr.mxu0 0.0
  %360 = vmatpush1.msra.mxu0 %v262
  %361 = vmatprep.subr.mxu0 0.0
  %362 = vmatpush1.msra.mxu0 %v259
  %363 = vmatprep.subr.mxu0 0.0
  %364 = vmatpush1.msra.mxu0 %v256
  %365 = vmatprep.subr.mxu0 0.0
  %366 = vmatpush1.msra.mxu0 %v253
  %367 = vmatprep.subr.mxu0 0.0
  %368 = vmatpush1.msra.mxu0 %v250
  %369 = vmatprep.subr.mxu0 0.0
  %370 = vmatpush1.msra.mxu0 %v247
  %371 = vmatprep.subr.mxu0 0.0
  %372 = vmatpush1.msra.mxu0 %v244
  %373 = vmatprep.subr.mxu0 0.0
  %374 = vmatpush1.msra.mxu0 %v241
  %375 = vmatprep.subr.mxu0 0.0
  %376 = vmatpush1.msra.mxu0 %v238
  %377 = vmatprep.subr.mxu0 0.0
  %378 = vmatpush1.msra.mxu0 %v235
  %379 = vmatprep.subr.mxu0 0.0
  %380 = vmatpush1.msra.mxu0 %v232
  %381 = vmatprep.subr.mxu0 0.0
  %382 = vmatpush2.msra.mxu0 0.0
  %383 = vmatprep.subr.mxu0 0.0
  %384 = vmatpush2.msra.mxu0 0.0
  %385 = vmatprep.subr.mxu0 0.0
  %386 = vmatpush2.msra.mxu0 0.0
  %387 = vmatprep.subr.mxu0 0.0
  %388 = vmatpush2.msra.mxu0 0.0
  %389 = vmatprep.subr.mxu0 0.0
  %390 = vmatpush2.msra.mxu0 0.0
  %391 = vmatprep.subr.mxu0 0.0
  %392 = vmatpush2.msra.mxu0 0.0
  %393 = vmatprep.subr.mxu0 0.0
  %394 = vmatpush2.msra.mxu0 0.0
  %395 = vmatprep.subr.mxu0 0.0
  %396 = vmatpush2.msra.mxu0 0.0
  %397 = vmatprep.subr.mxu0 0.0
  %398 = vmatpush2.msra.mxu0 0.0
  %399 = vmatprep.subr.mxu0 0.0
  %400 = vmatpush2.msra.mxu0 0.0
  %401 = vmatprep.subr.mxu0 0.0
  %402 = vmatpush2.msra.mxu0 0.0
  %403 = vmatprep.subr.mxu0 0.0
  %404 = vmatpush2.msra.mxu0 0.0
  %405 = vmatprep.subr.mxu0 0.0
  %406 = vmatpush2.msra.mxu0 0.0
  %407 = vmatprep.subr.mxu0 0.0
  %408 = vmatpush2.msra.mxu0 0.0
  %409 = vmatprep.subr.mxu0 0.0
  %410 = vmatpush2.msra.mxu0 0.0
  %411 = vmatprep.subr.mxu0 0.0
  %412 = vmatpush2.msra.mxu0 0.0
  %413 = vmatprep.mubr.f32.mxu0 0.0
  %414 = vmatmul.mubr.f32.gmra.mxu0 %v223
  %v415 = vpop.f32.mrf.mxu0
  %v416 = vadd.f32 0.0, %v415
  %v417 = vpop.f32.mrf.mxu0
  %418 = vdwg.mxu0
  %v419 = vadd.f32 %v227, %v345
  %v420 = vxor.u32 %v419, 2147483648
  %v421 = vmul.f32 %v420, 1.442695
  %v422 = vpow.pop %v421
  %v423 = vadd.f32 %v422, 1.0
  %v424 = vrcp.pop %v423
  %v425 = vmul.f32 1.0, %v424
  %v426 = vadd.f32 %v228, %v347
  %v427 = vxor.u32 %v426, 2147483648
  %v428 = vmul.f32 %v427, 1.442695
  %v429 = vpow.pop %v428
  %v430 = vadd.f32 %v429, 1.0
  %v431 = vrcp.pop %v430
  %v432 = vmul.f32 1.0, %v431
  %v434 = vlaneseq
  %v435 = vshrl.u32 %v434, 7
  %v436 = vsub.s32 0, %v435
  %v437 = vrot.slane %v222, %v436
  %v439 = vadd.f32 %v416, %v437
  %v440 = vmul.f32 %v425, %v439
  %v441 = vadd.f32 %v229, %v440
  %v442 = vtanh.pop %v441
  %v443 = vsub.f32 %v223, %v442
  %v444 = vmul.f32 %v432, %v443
  %v445 = vadd.f32 %v442, %v444
  %446 = vst [vmem:[%s5] sm:$0xff] %v445
  %s447 = scalar_lea.vmem %s0, 24
  %v448 = vld [vmem:[%s447] sm:$0xff]
  %v449 = vld [vmem:[%s447 + $0x8] sm:$0xff]
  %v450 = vld [vmem:[%s447 + $0x10] sm:$0xff]
  %v451 = vadd.f32 %v448, %v219
  %v452 = vadd.f32 %v449, %v220
  %v453 = vadd.f32 %v450, %v221
  %v454 = vld [vmem:[%s3] sm:$0xff]
  %v455 = vld [vmem:[%s3 + $0x8] sm:$0xff]
  %v456 = vld [vmem:[%s3 + $0x10] sm:$0xff]
  %v457 = vld [vmem:[%s3 + $0x18] sm:$0xff]
  %v458 = vld [vmem:[%s3 + $0x20] sm:$0xff]
  %v459 = vld [vmem:[%s3 + $0x28] sm:$0xff]
  %v460 = vld [vmem:[%s3 + $0x30] sm:$0xff]
  %v461 = vld [vmem:[%s3 + $0x38] sm:$0xff]
  %v462 = vld [vmem:[%s3 + $0x40] sm:$0xff]
  %v463 = vld [vmem:[%s3 + $0x48] sm:$0xff]
  %v464 = vld [vmem:[%s3 + $0x50] sm:$0xff]
  %v465 = vld [vmem:[%s3 + $0x58] sm:$0xff]
  %v466 = vld [vmem:[%s3 + $0x60] sm:$0xff]
  %v467 = vld [vmem:[%s3 + $0x68] sm:$0xff]
  %v468 = vld [vmem:[%s3 + $0x70] sm:$0xff]
  %v469 = vld [vmem:[%s3 + $0x78] sm:$0xff]
  %v470 = vld [vmem:[%s3 + $0x80] sm:$0xff]
  %v471 = vld [vmem:[%s3 + $0x88] sm:$0xff]
  %v472 = vld [vmem:[%s3 + $0x90] sm:$0xff]
  %v473 = vld [vmem:[%s3 + $0x98] sm:$0xff]
  %v474 = vld [vmem:[%s3 + $0xa0] sm:$0xff]
  %v475 = vld [vmem:[%s3 + $0xa8] sm:$0xff]
  %v476 = vld [vmem:[%s3 + $0xb0] sm:$0xff]
  %v477 = vld [vmem:[%s3 + $0xb8] sm:$0xff]
  %v478 = vld [vmem:[%s3 + $0xc0] sm:$0xff]
  %v479 = vld [vmem:[%s3 + $0xc8] sm:$0xff]
  %v480 = vld [vmem:[%s3 + $0xd0] sm:$0xff]
  %v481 = vld [vmem:[%s3 + $0xd8] sm:$0xff]
  %v482 = vld [vmem:[%s3 + $0xe0] sm:$0xff]
  %v483 = vld [vmem:[%s3 + $0xe8] sm:$0xff]
  %v484 = vld [vmem:[%s3 + $0xf0] sm:$0xff]
  %v485 = vld [vmem:[%s3 + $0xf8] sm:$0xff]
  %v486 = vld [vmem:[%s3 + $0x100] sm:$0xff]
  %v487 = vld [vmem:[%s3 + $0x108] sm:$0xff]
  %v488 = vld [vmem:[%s3 + $0x110] sm:$0xff]
  %v489 = vld [vmem:[%s3 + $0x118] sm:$0xff]
  %v490 = vld [vmem:[%s3 + $0x120] sm:$0xff]
  %v491 = vld [vmem:[%s3 + $0x128] sm:$0xff]
  %v492 = vld [vmem:[%s3 + $0x130] sm:$0xff]
  %v493 = vld [vmem:[%s3 + $0x138] sm:$0xff]
  %v494 = vld [vmem:[%s3 + $0x140] sm:$0xff]
  %v495 = vld [vmem:[%s3 + $0x148] sm:$0xff]
  %v496 = vld [vmem:[%s3 + $0x150] sm:$0xff]
  %v497 = vld [vmem:[%s3 + $0x158] sm:$0xff]
  %v498 = vld [vmem:[%s3 + $0x160] sm:$0xff]
  %v499 = vld [vmem:[%s3 + $0x168] sm:$0xff]
  %v500 = vld [vmem:[%s3 + $0x170] sm:$0xff]
  %v501 = vld [vmem:[%s3 + $0x178] sm:$0xff]
  %502 = vmatprep.subr.mxu0 %v500
  %503 = vmatpush1.msra.mxu0 %v499
  %504 = vmatprep.subr.mxu0 %v497
  %505 = vmatpush1.msra.mxu0 %v496
  %506 = vmatprep.subr.mxu0 %v494
  %507 = vmatpush1.msra.mxu0 %v493
  %508 = vmatprep.subr.mxu0 %v491
  %509 = vmatpush1.msra.mxu0 %v490
  %510 = vmatprep.subr.mxu0 %v488
  %511 = vmatpush1.msra.mxu0 %v487
  %512 = vmatprep.subr.mxu0 %v485
  %513 = vmatpush1.msra.mxu0 %v484
  %514 = vmatprep.subr.mxu0 %v482
  %515 = vmatpush1.msra.mxu0 %v481
  %516 = vmatprep.subr.mxu0 %v479
  %517 = vmatpush1.msra.mxu0 %v478
  %518 = vmatprep.subr.mxu0 %v476
  %519 = vmatpush1.msra.mxu0 %v475
  %520 = vmatprep.subr.mxu0 %v473
  %521 = vmatpush1.msra.mxu0 %v472
  %522 = vmatprep.subr.mxu0 %v470
  %523 = vmatpush1.msra.mxu0 %v469
  %524 = vmatprep.subr.mxu0 %v467
  %525 = vmatpush1.msra.mxu0 %v466
  %526 = vmatprep.subr.mxu0 %v464
  %527 = vmatpush1.msra.mxu0 %v463
  %528 = vmatprep.subr.mxu0 %v461
  %529 = vmatpush1.msra.mxu0 %v460
  %530 = vmatprep.subr.mxu0 %v458
  %531 = vmatpush1.msra.mxu0 %v457
  %532 = vmatprep.subr.mxu0 %v455
  %533 = vmatpush1.msra.mxu0 %v454
  %534 = vmatprep.subr.mxu0 0.0
  %535 = vmatpush2.msra.mxu0 0.0
  %536 = vmatprep.subr.mxu0 0.0
  %537 = vmatpush2.msra.mxu0 0.0
  %538 = vmatprep.subr.mxu0 0.0
  %539 = vmatpush2.msra.mxu0 0.0
  %540 = vmatprep.subr.mxu0 0.0
  %541 = vmatpush2.msra.mxu0 0.0
  %542 = vmatprep.subr.mxu0 0.0
  %543 = vmatpush2.msra.mxu0 0.0
  %544 = vmatprep.subr.mxu0 0.0
  %545 = vmatpush2.msra.mxu0 0.0
  %546 = vmatprep.subr.mxu0 0.0
  %547 = vmatpush2.msra.mxu0 0.0
  %548 = vmatprep.subr.mxu0 0.0
  %549 = vmatpush2.msra.mxu0 0.0
  %550 = vmatprep.subr.mxu0 0.0
  %551 = vmatpush2.msra.mxu0 0.0
  %552 = vmatprep.subr.mxu0 0.0
  %553 = vmatpush2.msra.mxu0 0.0
  %554 = vmatprep.subr.mxu0 0.0
  %555 = vmatpush2.msra.mxu0 0.0
  %556 = vmatprep.subr.mxu0 0.0
  %557 = vmatpush2.msra.mxu0 0.0
  %558 = vmatprep.subr.mxu0 0.0
  %559 = vmatpush2.msra.mxu0 0.0
  %560 = vmatprep.subr.mxu0 0.0
  %561 = vmatpush2.msra.mxu0 0.0
  %562 = vmatprep.subr.mxu0 0.0
  %563 = vmatpush2.msra.mxu0 0.0
  %564 = vmatprep.subr.mxu0 0.0
  %565 = vmatpush2.msra.mxu0 0.0
  %566 = vmatprep.mubr.f32.mxu0 0.0
  %567 = vmatmul.mubr.f32.gmra.mxu0 %v445
  %v568 = vpop.f32.mrf.mxu0
  %v569 = vadd.f32 0.0, %v568
  %v570 = vpop.f32.mrf.mxu0
  %v571 = vadd.f32 0.0, %v570
  %572 = vdwg.mxu0
  %573 = vmatprep.subr.mxu0 0.0
  %574 = vmatpush1.msra.mxu0 %v501
  %575 = vmatprep.subr.mxu0 0.0
  %576 = vmatpush1.msra.mxu0 %v498
  %577 = vmatprep.subr.mxu0 0.0
  %578 = vmatpush1.msra.mxu0 %v495
  %579 = vmatprep.subr.mxu0 0.0
  %580 = vmatpush1.msra.mxu0 %v492
  %581 = vmatprep.subr.mxu0 0.0
  %582 = vmatpush1.msra.mxu0 %v489
  %583 = vmatprep.subr.mxu0 0.0
  %584 = vmatpush1.msra.mxu0 %v486
  %585 = vmatprep.subr.mxu0 0.0
  %586 = vmatpush1.msra.mxu0 %v483
  %587 = vmatprep.subr.mxu0 0.0
  %588 = vmatpush1.msra.mxu0 %v480
  %589 = vmatprep.subr.mxu0 0.0
  %590 = vmatpush1.msra.mxu0 %v477
  %591 = vmatprep.subr.mxu0 0.0
  %592 = vmatpush1.msra.mxu0 %v474
  %593 = vmatprep.subr.mxu0 0.0
  %594 = vmatpush1.msra.mxu0 %v471
  %595 = vmatprep.subr.mxu0 0.0
  %596 = vmatpush1.msra.mxu0 %v468
  %597 = vmatprep.subr.mxu0 0.0
  %598 = vmatpush1.msra.mxu0 %v465
  %599 = vmatprep.subr.mxu0 0.0
  %600 = vmatpush1.msra.mxu0 %v462
  %601 = vmatprep.subr.mxu0 0.0
  %602 = vmatpush1.msra.mxu0 %v459
  %603 = vmatprep.subr.mxu0 0.0
  %604 = vmatpush1.msra.mxu0 %v456
  %605 = vmatprep.subr.mxu0 0.0
  %606 = vmatpush2.msra.mxu0 0.0
  %607 = vmatprep.subr.mxu0 0.0
  %608 = vmatpush2.msra.mxu0 0.0
  %609 = vmatprep.subr.mxu0 0.0
  %610 = vmatpush2.msra.mxu0 0.0
  %611 = vmatprep.subr.mxu0 0.0
  %612 = vmatpush2.msra.mxu0 0.0
  %613 = vmatprep.subr.mxu0 0.0
  %614 = vmatpush2.msra.mxu0 0.0
  %615 = vmatprep.subr.mxu0 0.0
  %616 = vmatpush2.msra.mxu0 0.0
  %617 = vmatprep.subr.mxu0 0.0
  %618 = vmatpush2.msra.mxu0 0.0
  %619 = vmatprep.subr.mxu0 0.0
  %620 = vmatpush2.msra.mxu0 0.0
  %621 = vmatprep.subr.mxu0 0.0
  %622 = vmatpush2.msra.mxu0 0.0
  %623 = vmatprep.subr.mxu0 0.0
  %624 = vmatpush2.msra.mxu0 0.0
  %625 = vmatprep.subr.mxu0 0.0
  %626 = vmatpush2.msra.mxu0 0.0
  %627 = vmatprep.subr.mxu0 0.0
  %628 = vmatpush2.msra.mxu0 0.0
  %629 = vmatprep.subr.mxu0 0.0
  %630 = vmatpush2.msra.mxu0 0.0
  %631 = vmatprep.subr.mxu0 0.0
  %632 = vmatpush2.msra.mxu0 0.0
  %633 = vmatprep.subr.mxu0 0.0
  %634 = vmatpush2.msra.mxu0 0.0
  %635 = vmatprep.subr.mxu0 0.0
  %636 = vmatpush2.msra.mxu0 0.0
  %637 = vmatprep.mubr.f32.mxu0 0.0
  %638 = vmatmul.mubr.f32.gmra.mxu0 %v445
  %v639 = vpop.f32.mrf.mxu0
  %v640 = vadd.f32 0.0, %v639
  %v641 = vpop.f32.mrf.mxu0
  %642 = vdwg.mxu0
  %v643 = vadd.f32 %v451, %v569
  %v644 = vxor.u32 %v643, 2147483648
  %v645 = vmul.f32 %v644, 1.442695
  %v646 = vpow.pop %v645
  %v647 = vadd.f32 %v646, 1.0
  %v648 = vrcp.pop %v647
  %v649 = vmul.f32 1.0, %v648
  %v650 = vadd.f32 %v452, %v571
  %v651 = vxor.u32 %v650, 2147483648
  %v652 = vmul.f32 %v651, 1.442695
  %v653 = vpow.pop %v652
  %v654 = vadd.f32 %v653, 1.0
  %v655 = vrcp.pop %v654
  %v656 = vmul.f32 1.0, %v655
  %v657 = vadd.f32 %v640, %v437
  %v658 = vmul.f32 %v649, %v657
  %v659 = vadd.f32 %v453, %v658
  %v660 = vtanh.pop %v659
  %v661 = vsub.f32 %v445, %v660
  %v662 = vmul.f32 %v656, %v661
  %v663 = vadd.f32 %v660, %v662
  %s664 = scalar_lea.vmem %s5, 8
  %665 = vst [vmem:[%s664] sm:$0xff] %v663
  %s666 = scalar_lea.vmem %s0, 48
  %v667 = vld [vmem:[%s666] sm:$0xff]
  %v668 = vld [vmem:[%s666 + $0x8] sm:$0xff]
  %v669 = vld [vmem:[%s666 + $0x10] sm:$0xff]
  %v670 = vadd.f32 %v667, %v219
  %v671 = vadd.f32 %v668, %v220
  %v672 = vadd.f32 %v669, %v221
  %v673 = vld [vmem:[%s3] sm:$0xff]
  %v674 = vld [vmem:[%s3 + $0x8] sm:$0xff]
  %v675 = vld [vmem:[%s3 + $0x10] sm:$0xff]
  %v676 = vld [vmem:[%s3 + $0x18] sm:$0xff]
  %v677 = vld [vmem:[%s3 + $0x20] sm:$0xff]
  %v678 = vld [vmem:[%s3 + $0x28] sm:$0xff]
  %v679 = vld [vmem:[%s3 + $0x30] sm:$0xff]
  %v680 = vld [vmem:[%s3 + $0x38] sm:$0xff]
  %v681 = vld [vmem:[%s3 + $0x40] sm:$0xff]
  %v682 = vld [vmem:[%s3 + $0x48] sm:$0xff]
  %v683 = vld [vmem:[%s3 + $0x50] sm:$0xff]
  %v684 = vld [vmem:[%s3 + $0x58] sm:$0xff]
  %v685 = vld [vmem:[%s3 + $0x60] sm:$0xff]
  %v686 = vld [vmem:[%s3 + $0x68] sm:$0xff]
  %v687 = vld [vmem:[%s3 + $0x70] sm:$0xff]
  %v688 = vld [vmem:[%s3 + $0x78] sm:$0xff]
  %v689 = vld [vmem:[%s3 + $0x80] sm:$0xff]
  %v690 = vld [vmem:[%s3 + $0x88] sm:$0xff]
  %v691 = vld [vmem:[%s3 + $0x90] sm:$0xff]
  %v692 = vld [vmem:[%s3 + $0x98] sm:$0xff]
  %v693 = vld [vmem:[%s3 + $0xa0] sm:$0xff]
  %v694 = vld [vmem:[%s3 + $0xa8] sm:$0xff]
  %v695 = vld [vmem:[%s3 + $0xb0] sm:$0xff]
  %v696 = vld [vmem:[%s3 + $0xb8] sm:$0xff]
  %v697 = vld [vmem:[%s3 + $0xc0] sm:$0xff]
  %v698 = vld [vmem:[%s3 + $0xc8] sm:$0xff]
  %v699 = vld [vmem:[%s3 + $0xd0] sm:$0xff]
  %v700 = vld [vmem:[%s3 + $0xd8] sm:$0xff]
  %v701 = vld [vmem:[%s3 + $0xe0] sm:$0xff]
  %v702 = vld [vmem:[%s3 + $0xe8] sm:$0xff]
  %v703 = vld [vmem:[%s3 + $0xf0] sm:$0xff]
  %v704 = vld [vmem:[%s3 + $0xf8] sm:$0xff]
  %v705 = vld [vmem:[%s3 + $0x100] sm:$0xff]
  %v706 = vld [vmem:[%s3 + $0x108] sm:$0xff]
  %v707 = vld [vmem:[%s3 + $0x110] sm:$0xff]
  %v708 = vld [vmem:[%s3 + $0x118] sm:$0xff]
  %v709 = vld [vmem:[%s3 + $0x120] sm:$0xff]
  %v710 = vld [vmem:[%s3 + $0x128] sm:$0xff]
  %v711 = vld [vmem:[%s3 + $0x130] sm:$0xff]
  %v712 = vld [vmem:[%s3 + $0x138] sm:$0xff]
  %v713 = vld [vmem:[%s3 + $0x140] sm:$0xff]
  %v714 = vld [vmem:[%s3 + $0x148] sm:$0xff]
  %v715 = vld [vmem:[%s3 + $0x150] sm:$0xff]
  %v716 = vld [vmem:[%s3 + $0x158] sm:$0xff]
  %v717 = vld [vmem:[%s3 + $0x160] sm:$0xff]
  %v718 = vld [vmem:[%s3 + $0x168] sm:$0xff]
  %v719 = vld [vmem:[%s3 + $0x170] sm:$0xff]
  %v720 = vld [vmem:[%s3 + $0x178] sm:$0xff]
  %721 = vmatprep.subr.mxu0 %v719
  %722 = vmatpush1.msra.mxu0 %v718
  %723 = vmatprep.subr.mxu0 %v716
  %724 = vmatpush1.msra.mxu0 %v715
  %725 = vmatprep.subr.mxu0 %v713
  %726 = vmatpush1.msra.mxu0 %v712
  %727 = vmatprep.subr.mxu0 %v710
  %728 = vmatpush1.msra.mxu0 %v709
  %729 = vmatprep.subr.mxu0 %v707
  %730 = vmatpush1.msra.mxu0 %v706
  %731 = vmatprep.subr.mxu0 %v704
  %732 = vmatpush1.msra.mxu0 %v703
  %733 = vmatprep.subr.mxu0 %v701
  %734 = vmatpush1.msra.mxu0 %v700
  %735 = vmatprep.subr.mxu0 %v698
  %736 = vmatpush1.msra.mxu0 %v697
  %737 = vmatprep.subr.mxu0 %v695
  %738 = vmatpush1.msra.mxu0 %v694
  %739 = vmatprep.subr.mxu0 %v692
  %740 = vmatpush1.msra.mxu0 %v691
  %741 = vmatprep.subr.mxu0 %v689
  %742 = vmatpush1.msra.mxu0 %v688
  %743 = vmatprep.subr.mxu0 %v686
  %744 = vmatpush1.msra.mxu0 %v685
  %745 = vmatprep.subr.mxu0 %v683
  %746 = vmatpush1.msra.mxu0 %v682
  %747 = vmatprep.subr.mxu0 %v680
  %748 = vmatpush1.msra.mxu0 %v679
  %749 = vmatprep.subr.mxu0 %v677
  %750 = vmatpush1.msra.mxu0 %v676
  %751 = vmatprep.subr.mxu0 %v674
  %752 = vmatpush1.msra.mxu0 %v673
  %753 = vmatprep.subr.mxu0 0.0
  %754 = vmatpush2.msra.mxu0 0.0
  %755 = vmatprep.subr.mxu0 0.0
  %756 = vmatpush2.msra.mxu0 0.0
  %757 = vmatprep.subr.mxu0 0.0
  %758 = vmatpush2.msra.mxu0 0.0
  %759 = vmatprep.subr.mxu0 0.0
  %760 = vmatpush2.msra.mxu0 0.0
  %761 = vmatprep.subr.mxu0 0.0
  %762 = vmatpush2.msra.mxu0 0.0
  %763 = vmatprep.subr.mxu0 0.0
  %764 = vmatpush2.msra.mxu0 0.0
  %765 = vmatprep.subr.mxu0 0.0
  %766 = vmatpush2.msra.mxu0 0.0
  %767 = vmatprep.subr.mxu0 0.0
  %768 = vmatpush2.msra.mxu0 0.0
  %769 = vmatprep.subr.mxu0 0.0
  %770 = vmatpush2.msra.mxu0 0.0
  %771 = vmatprep.subr.mxu0 0.0
  %772 = vmatpush2.msra.mxu0 0.0
  %773 = vmatprep.subr.mxu0 0.0
  %774 = vmatpush2.msra.mxu0 0.0
  %775 = vmatprep.subr.mxu0 0.0
  %776 = vmatpush2.msra.mxu0 0.0
  %777 = vmatprep.subr.mxu0 0.0
  %778 = vmatpush2.msra.mxu0 0.0
  %779 = vmatprep.subr.mxu0 0.0
  %780 = vmatpush2.msra.mxu0 0.0
  %781 = vmatprep.subr.mxu0 0.0
  %782 = vmatpush2.msra.mxu0 0.0
  %783 = vmatprep.subr.mxu0 0.0
  %784 = vmatpush2.msra.mxu0 0.0
  %785 = vmatprep.mubr.f32.mxu0 0.0
  %786 = vmatmul.mubr.f32.gmra.mxu0 %v663
  %v787 = vpop.f32.mrf.mxu0
  %v788 = vadd.f32 0.0, %v787
  %v789 = vpop.f32.mrf.mxu0
  %v790 = vadd.f32 0.0, %v789
  %791 = vdwg.mxu0
  %792 = vmatprep.subr.mxu0 0.0
  %793 = vmatpush1.msra.mxu0 %v720
  %794 = vmatprep.subr.mxu0 0.0
  %795 = vmatpush1.msra.mxu0 %v717
  %796 = vmatprep.subr.mxu0 0.0
  %797 = vmatpush1.msra.mxu0 %v714
  %798 = vmatprep.subr.mxu0 0.0
  %799 = vmatpush1.msra.mxu0 %v711
  %800 = vmatprep.subr.mxu0 0.0
  %801 = vmatpush1.msra.mxu0 %v708
  %802 = vmatprep.subr.mxu0 0.0
  %803 = vmatpush1.msra.mxu0 %v705
  %804 = vmatprep.subr.mxu0 0.0
  %805 = vmatpush1.msra.mxu0 %v702
  %806 = vmatprep.subr.mxu0 0.0
  %807 = vmatpush1.msra.mxu0 %v699
  %808 = vmatprep.subr.mxu0 0.0
  %809 = vmatpush1.msra.mxu0 %v696
  %810 = vmatprep.subr.mxu0 0.0
  %811 = vmatpush1.msra.mxu0 %v693
  %812 = vmatprep.subr.mxu0 0.0
  %813 = vmatpush1.msra.mxu0 %v690
  %814 = vmatprep.subr.mxu0 0.0
  %815 = vmatpush1.msra.mxu0 %v687
  %816 = vmatprep.subr.mxu0 0.0
  %817 = vmatpush1.msra.mxu0 %v684
  %818 = vmatprep.subr.mxu0 0.0
  %819 = vmatpush1.msra.mxu0 %v681
  %820 = vmatprep.subr.mxu0 0.0
  %821 = vmatpush1.msra.mxu0 %v678
  %822 = vmatprep.subr.mxu0 0.0
  %823 = vmatpush1.msra.mxu0 %v675
  %824 = vmatprep.subr.mxu0 0.0
  %825 = vmatpush2.msra.mxu0 0.0
  %826 = vmatprep.subr.mxu0 0.0
  %827 = vmatpush2.msra.mxu0 0.0
  %828 = vmatprep.subr.mxu0 0.0
  %829 = vmatpush2.msra.mxu0 0.0
  %830 = vmatprep.subr.mxu0 0.0
  %831 = vmatpush2.msra.mxu0 0.0
  %832 = vmatprep.subr.mxu0 0.0
  %833 = vmatpush2.msra.mxu0 0.0
  %834 = vmatprep.subr.mxu0 0.0
  %835 = vmatpush2.msra.mxu0 0.0
  %836 = vmatprep.subr.mxu0 0.0
  %837 = vmatpush2.msra.mxu0 0.0
  %838 = vmatprep.subr.mxu0 0.0
  %839 = vmatpush2.msra.mxu0 0.0
  %840 = vmatprep.subr.mxu0 0.0
  %841 = vmatpush2.msra.mxu0 0.0
  %842 = vmatprep.subr.mxu0 0.0
  %843 = vmatpush2.msra.mxu0 0.0
  %844 = vmatprep.subr.mxu0 0.0
  %845 = vmatpush2.msra.mxu0 0.0
  %846 = vmatprep.subr.mxu0 0.0
  %847 = vmatpush2.msra.mxu0 0.0
  %848 = vmatprep.subr.mxu0 0.0
  %849 = vmatpush2.msra.mxu0 0.0
  %850 = vmatprep.subr.mxu0 0.0
  %851 = vmatpush2.msra.mxu0 0.0
  %852 = vmatprep.subr.mxu0 0.0
  %853 = vmatpush2.msra.mxu0 0.0
  %854 = vmatprep.subr.mxu0 0.0
  %855 = vmatpush2.msra.mxu0 0.0
  %856 = vmatprep.mubr.f32.mxu0 0.0
  %857 = vmatmul.mubr.f32.gmra.mxu0 %v663
  %v858 = vpop.f32.mrf.mxu0
  %v859 = vadd.f32 0.0, %v858
  %v860 = vpop.f32.mrf.mxu0
  %861 = vdwg.mxu0
  %v862 = vadd.f32 %v670, %v788
  %v863 = vxor.u32 %v862, 2147483648
  %v864 = vmul.f32 %v863, 1.442695
  %v865 = vpow.pop %v864
  %v866 = vadd.f32 %v865, 1.0
  %v867 = vrcp.pop %v866
  %v868 = vmul.f32 1.0, %v867
  %v869 = vadd.f32 %v671, %v790
  %v870 = vxor.u32 %v869, 2147483648
  %v871 = vmul.f32 %v870, 1.442695
  %v872 = vpow.pop %v871
  %v873 = vadd.f32 %v872, 1.0
  %v874 = vrcp.pop %v873
  %v875 = vmul.f32 1.0, %v874
  %v876 = vadd.f32 %v859, %v437
  %v877 = vmul.f32 %v868, %v876
  %v878 = vadd.f32 %v672, %v877
  %v879 = vtanh.pop %v878
  %v880 = vsub.f32 %v663, %v879
  %v881 = vmul.f32 %v875, %v880
  %v882 = vadd.f32 %v879, %v881
  %s883 = scalar_lea.vmem %s5, 16
  %884 = vst [vmem:[%s883] sm:$0xff] %v882
  %s885 = scalar_lea.vmem %s0, 72
  %v886 = vld [vmem:[%s885] sm:$0xff]
  %v887 = vld [vmem:[%s885 + $0x8] sm:$0xff]
  %v888 = vld [vmem:[%s885 + $0x10] sm:$0xff]
  %v889 = vadd.f32 %v886, %v219
  %v890 = vadd.f32 %v887, %v220
  %v891 = vadd.f32 %v888, %v221
  %v892 = vld [vmem:[%s3] sm:$0xff]
  %v893 = vld [vmem:[%s3 + $0x8] sm:$0xff]
  %v894 = vld [vmem:[%s3 + $0x10] sm:$0xff]
  %v895 = vld [vmem:[%s3 + $0x18] sm:$0xff]
  %v896 = vld [vmem:[%s3 + $0x20] sm:$0xff]
  %v897 = vld [vmem:[%s3 + $0x28] sm:$0xff]
  %v898 = vld [vmem:[%s3 + $0x30] sm:$0xff]
  %v899 = vld [vmem:[%s3 + $0x38] sm:$0xff]
  %v900 = vld [vmem:[%s3 + $0x40] sm:$0xff]
  %v901 = vld [vmem:[%s3 + $0x48] sm:$0xff]
  %v902 = vld [vmem:[%s3 + $0x50] sm:$0xff]
  %v903 = vld [vmem:[%s3 + $0x58] sm:$0xff]
  %v904 = vld [vmem:[%s3 + $0x60] sm:$0xff]
  %v905 = vld [vmem:[%s3 + $0x68] sm:$0xff]
  %v906 = vld [vmem:[%s3 + $0x70] sm:$0xff]
  %v907 = vld [vmem:[%s3 + $0x78] sm:$0xff]
  %v908 = vld [vmem:[%s3 + $0x80] sm:$0xff]
  %v909 = vld [vmem:[%s3 + $0x88] sm:$0xff]
  %v910 = vld [vmem:[%s3 + $0x90] sm:$0xff]
  %v911 = vld [vmem:[%s3 + $0x98] sm:$0xff]
  %v912 = vld [vmem:[%s3 + $0xa0] sm:$0xff]
  %v913 = vld [vmem:[%s3 + $0xa8] sm:$0xff]
  %v914 = vld [vmem:[%s3 + $0xb0] sm:$0xff]
  %v915 = vld [vmem:[%s3 + $0xb8] sm:$0xff]
  %v916 = vld [vmem:[%s3 + $0xc0] sm:$0xff]
  %v917 = vld [vmem:[%s3 + $0xc8] sm:$0xff]
  %v918 = vld [vmem:[%s3 + $0xd0] sm:$0xff]
  %v919 = vld [vmem:[%s3 + $0xd8] sm:$0xff]
  %v920 = vld [vmem:[%s3 + $0xe0] sm:$0xff]
  %v921 = vld [vmem:[%s3 + $0xe8] sm:$0xff]
  %v922 = vld [vmem:[%s3 + $0xf0] sm:$0xff]
  %v923 = vld [vmem:[%s3 + $0xf8] sm:$0xff]
  %v924 = vld [vmem:[%s3 + $0x100] sm:$0xff]
  %v925 = vld [vmem:[%s3 + $0x108] sm:$0xff]
  %v926 = vld [vmem:[%s3 + $0x110] sm:$0xff]
  %v927 = vld [vmem:[%s3 + $0x118] sm:$0xff]
  %v928 = vld [vmem:[%s3 + $0x120] sm:$0xff]
  %v929 = vld [vmem:[%s3 + $0x128] sm:$0xff]
  %v930 = vld [vmem:[%s3 + $0x130] sm:$0xff]
  %v931 = vld [vmem:[%s3 + $0x138] sm:$0xff]
  %v932 = vld [vmem:[%s3 + $0x140] sm:$0xff]
  %v933 = vld [vmem:[%s3 + $0x148] sm:$0xff]
  %v934 = vld [vmem:[%s3 + $0x150] sm:$0xff]
  %v935 = vld [vmem:[%s3 + $0x158] sm:$0xff]
  %v936 = vld [vmem:[%s3 + $0x160] sm:$0xff]
  %v937 = vld [vmem:[%s3 + $0x168] sm:$0xff]
  %v938 = vld [vmem:[%s3 + $0x170] sm:$0xff]
  %v939 = vld [vmem:[%s3 + $0x178] sm:$0xff]
  %940 = vmatprep.subr.mxu0 %v938
  %941 = vmatpush1.msra.mxu0 %v937
  %942 = vmatprep.subr.mxu0 %v935
  %943 = vmatpush1.msra.mxu0 %v934
  %944 = vmatprep.subr.mxu0 %v932
  %945 = vmatpush1.msra.mxu0 %v931
  %946 = vmatprep.subr.mxu0 %v929
  %947 = vmatpush1.msra.mxu0 %v928
  %948 = vmatprep.subr.mxu0 %v926
  %949 = vmatpush1.msra.mxu0 %v925
  %950 = vmatprep.subr.mxu0 %v923
  %951 = vmatpush1.msra.mxu0 %v922
  %952 = vmatprep.subr.mxu0 %v920
  %953 = vmatpush1.msra.mxu0 %v919
  %954 = vmatprep.subr.mxu0 %v917
  %955 = vmatpush1.msra.mxu0 %v916
  %956 = vmatprep.subr.mxu0 %v914
  %957 = vmatpush1.msra.mxu0 %v913
  %958 = vmatprep.subr.mxu0 %v911
  %959 = vmatpush1.msra.mxu0 %v910
  %960 = vmatprep.subr.mxu0 %v908
  %961 = vmatpush1.msra.mxu0 %v907
  %962 = vmatprep.subr.mxu0 %v905
  %963 = vmatpush1.msra.mxu0 %v904
  %964 = vmatprep.subr.mxu0 %v902
  %965 = vmatpush1.msra.mxu0 %v901
  %966 = vmatprep.subr.mxu0 %v899
  %967 = vmatpush1.msra.mxu0 %v898
  %968 = vmatprep.subr.mxu0 %v896
  %969 = vmatpush1.msra.mxu0 %v895
  %970 = vmatprep.subr.mxu0 %v893
  %971 = vmatpush1.msra.mxu0 %v892
  %972 = vmatprep.subr.mxu0 0.0
  %973 = vmatpush2.msra.mxu0 0.0
  %974 = vmatprep.subr.mxu0 0.0
  %975 = vmatpush2.msra.mxu0 0.0
  %976 = vmatprep.subr.mxu0 0.0
  %977 = vmatpush2.msra.mxu0 0.0
  %978 = vmatprep.subr.mxu0 0.0
  %979 = vmatpush2.msra.mxu0 0.0
  %980 = vmatprep.subr.mxu0 0.0
  %981 = vmatpush2.msra.mxu0 0.0
  %982 = vmatprep.subr.mxu0 0.0
  %983 = vmatpush2.msra.mxu0 0.0
  %984 = vmatprep.subr.mxu0 0.0
  %985 = vmatpush2.msra.mxu0 0.0
  %986 = vmatprep.subr.mxu0 0.0
  %987 = vmatpush2.msra.mxu0 0.0
  %988 = vmatprep.subr.mxu0 0.0
  %989 = vmatpush2.msra.mxu0 0.0
  %990 = vmatprep.subr.mxu0 0.0
  %991 = vmatpush2.msra.mxu0 0.0
  %992 = vmatprep.subr.mxu0 0.0
  %993 = vmatpush2.msra.mxu0 0.0
  %994 = vmatprep.subr.mxu0 0.0
  %995 = vmatpush2.msra.mxu0 0.0
  %996 = vmatprep.subr.mxu0 0.0
  %997 = vmatpush2.msra.mxu0 0.0
  %998 = vmatprep.subr.mxu0 0.0
  %999 = vmatpush2.msra.mxu0 0.0
  %1000 = vmatprep.subr.mxu0 0.0
  %1001 = vmatpush2.msra.mxu0 0.0
  %1002 = vmatprep.subr.mxu0 0.0
  %1003 = vmatpush2.msra.mxu0 0.0
  %1004 = vmatprep.mubr.f32.mxu0 0.0
  %1005 = vmatmul.mubr.f32.gmra.mxu0 %v882
  %v1006 = vpop.f32.mrf.mxu0
  %v1007 = vadd.f32 0.0, %v1006
  %v1008 = vpop.f32.mrf.mxu0
  %v1009 = vadd.f32 0.0, %v1008
  %1010 = vdwg.mxu0
  %1011 = vmatprep.subr.mxu0 0.0
  %1012 = vmatpush1.msra.mxu0 %v939
  %1013 = vmatprep.subr.mxu0 0.0
  %1014 = vmatpush1.msra.mxu0 %v936
  %1015 = vmatprep.subr.mxu0 0.0
  %1016 = vmatpush1.msra.mxu0 %v933
  %1017 = vmatprep.subr.mxu0 0.0
  %1018 = vmatpush1.msra.mxu0 %v930
  %1019 = vmatprep.subr.mxu0 0.0
  %1020 = vmatpush1.msra.mxu0 %v927
  %1021 = vmatprep.subr.mxu0 0.0
  %1022 = vmatpush1.msra.mxu0 %v924
  %1023 = vmatprep.subr.mxu0 0.0
  %1024 = vmatpush1.msra.mxu0 %v921
  %1025 = vmatprep.subr.mxu0 0.0
  %1026 = vmatpush1.msra.mxu0 %v918
  %1027 = vmatprep.subr.mxu0 0.0
  %1028 = vmatpush1.msra.mxu0 %v915
  %1029 = vmatprep.subr.mxu0 0.0
  %1030 = vmatpush1.msra.mxu0 %v912
  %1031 = vmatprep.subr.mxu0 0.0
  %1032 = vmatpush1.msra.mxu0 %v909
  %1033 = vmatprep.subr.mxu0 0.0
  %1034 = vmatpush1.msra.mxu0 %v906
  %1035 = vmatprep.subr.mxu0 0.0
  %1036 = vmatpush1.msra.mxu0 %v903
  %1037 = vmatprep.subr.mxu0 0.0
  %1038 = vmatpush1.msra.mxu0 %v900
  %1039 = vmatprep.subr.mxu0 0.0
  %1040 = vmatpush1.msra.mxu0 %v897
  %1041 = vmatprep.subr.mxu0 0.0
  %1042 = vmatpush1.msra.mxu0 %v894
  %1043 = vmatprep.subr.mxu0 0.0
  %1044 = vmatpush2.msra.mxu0 0.0
  %1045 = vmatprep.subr.mxu0 0.0
  %1046 = vmatpush2.msra.mxu0 0.0
  %1047 = vmatprep.subr.mxu0 0.0
  %1048 = vmatpush2.msra.mxu0 0.0
  %1049 = vmatprep.subr.mxu0 0.0
  %1050 = vmatpush2.msra.mxu0 0.0
  %1051 = vmatprep.subr.mxu0 0.0
  %1052 = vmatpush2.msra.mxu0 0.0
  %1053 = vmatprep.subr.mxu0 0.0
  %1054 = vmatpush2.msra.mxu0 0.0
  %1055 = vmatprep.subr.mxu0 0.0
  %1056 = vmatpush2.msra.mxu0 0.0
  %1057 = vmatprep.subr.mxu0 0.0
  %1058 = vmatpush2.msra.mxu0 0.0
  %1059 = vmatprep.subr.mxu0 0.0
  %1060 = vmatpush2.msra.mxu0 0.0
  %1061 = vmatprep.subr.mxu0 0.0
  %1062 = vmatpush2.msra.mxu0 0.0
  %1063 = vmatprep.subr.mxu0 0.0
  %1064 = vmatpush2.msra.mxu0 0.0
  %1065 = vmatprep.subr.mxu0 0.0
  %1066 = vmatpush2.msra.mxu0 0.0
  %1067 = vmatprep.subr.mxu0 0.0
  %1068 = vmatpush2.msra.mxu0 0.0
  %1069 = vmatprep.subr.mxu0 0.0
  %1070 = vmatpush2.msra.mxu0 0.0
  %1071 = vmatprep.subr.mxu0 0.0
  %1072 = vmatpush2.msra.mxu0 0.0
  %1073 = vmatprep.subr.mxu0 0.0
  %1074 = vmatpush2.msra.mxu0 0.0
  %1075 = vmatprep.mubr.f32.mxu0 0.0
  %1076 = vmatmul.mubr.f32.gmra.mxu0 %v882
  %v1077 = vpop.f32.mrf.mxu0
  %v1078 = vadd.f32 0.0, %v1077
  %v1079 = vpop.f32.mrf.mxu0
  %1080 = vdwg.mxu0
  %v1081 = vadd.f32 %v889, %v1007
  %v1082 = vxor.u32 %v1081, 2147483648
  %v1083 = vmul.f32 %v1082, 1.442695
  %v1084 = vpow.pop %v1083
  %v1085 = vadd.f32 %v1084, 1.0
  %v1086 = vrcp.pop %v1085
  %v1087 = vmul.f32 1.0, %v1086
  %v1088 = vadd.f32 %v890, %v1009
  %v1089 = vxor.u32 %v1088, 2147483648
  %v1090 = vmul.f32 %v1089, 1.442695
  %v1091 = vpow.pop %v1090
  %v1092 = vadd.f32 %v1091, 1.0
  %v1093 = vrcp.pop %v1092
  %v1094 = vmul.f32 1.0, %v1093
  %v1095 = vadd.f32 %v1078, %v437
  %v1096 = vmul.f32 %v1087, %v1095
  %v1097 = vadd.f32 %v891, %v1096
  %v1098 = vtanh.pop %v1097
  %v1099 = vsub.f32 %v882, %v1098
  %v1100 = vmul.f32 %v1094, %v1099
  %v1101 = vadd.f32 %v1098, %v1100
  %s1102 = scalar_lea.vmem %s5, 24
  %1103 = vst [vmem:[%s1102] sm:$0xff] %v1101
  %s1104 = scalar_lea.vmem %s0, 96
  %v1105 = vld [vmem:[%s1104] sm:$0xff]
  %v1106 = vld [vmem:[%s1104 + $0x8] sm:$0xff]
  %v1107 = vld [vmem:[%s1104 + $0x10] sm:$0xff]
  %v1108 = vadd.f32 %v1105, %v219
  %v1109 = vadd.f32 %v1106, %v220
  %v1110 = vadd.f32 %v1107, %v221
  %v1111 = vld [vmem:[%s3] sm:$0xff]
  %v1112 = vld [vmem:[%s3 + $0x8] sm:$0xff]
  %v1113 = vld [vmem:[%s3 + $0x10] sm:$0xff]
  %v1114 = vld [vmem:[%s3 + $0x18] sm:$0xff]
  %v1115 = vld [vmem:[%s3 + $0x20] sm:$0xff]
  %v1116 = vld [vmem:[%s3 + $0x28] sm:$0xff]
  %v1117 = vld [vmem:[%s3 + $0x30] sm:$0xff]
  %v1118 = vld [vmem:[%s3 + $0x38] sm:$0xff]
  %v1119 = vld [vmem:[%s3 + $0x40] sm:$0xff]
  %v1120 = vld [vmem:[%s3 + $0x48] sm:$0xff]
  %v1121 = vld [vmem:[%s3 + $0x50] sm:$0xff]
  %v1122 = vld [vmem:[%s3 + $0x58] sm:$0xff]
  %v1123 = vld [vmem:[%s3 + $0x60] sm:$0xff]
  %v1124 = vld [vmem:[%s3 + $0x68] sm:$0xff]
  %v1125 = vld [vmem:[%s3 + $0x70] sm:$0xff]
  %v1126 = vld [vmem:[%s3 + $0x78] sm:$0xff]
  %v1127 = vld [vmem:[%s3 + $0x80] sm:$0xff]
  %v1128 = vld [vmem:[%s3 + $0x88] sm:$0xff]
  %v1129 = vld [vmem:[%s3 + $0x90] sm:$0xff]
  %v1130 = vld [vmem:[%s3 + $0x98] sm:$0xff]
  %v1131 = vld [vmem:[%s3 + $0xa0] sm:$0xff]
  %v1132 = vld [vmem:[%s3 + $0xa8] sm:$0xff]
  %v1133 = vld [vmem:[%s3 + $0xb0] sm:$0xff]
  %v1134 = vld [vmem:[%s3 + $0xb8] sm:$0xff]
  %v1135 = vld [vmem:[%s3 + $0xc0] sm:$0xff]
  %v1136 = vld [vmem:[%s3 + $0xc8] sm:$0xff]
  %v1137 = vld [vmem:[%s3 + $0xd0] sm:$0xff]
  %v1138 = vld [vmem:[%s3 + $0xd8] sm:$0xff]
  %v1139 = vld [vmem:[%s3 + $0xe0] sm:$0xff]
  %v1140 = vld [vmem:[%s3 + $0xe8] sm:$0xff]
  %v1141 = vld [vmem:[%s3 + $0xf0] sm:$0xff]
  %v1142 = vld [vmem:[%s3 + $0xf8] sm:$0xff]
  %v1143 = vld [vmem:[%s3 + $0x100] sm:$0xff]
  %v1144 = vld [vmem:[%s3 + $0x108] sm:$0xff]
  %v1145 = vld [vmem:[%s3 + $0x110] sm:$0xff]
  %v1146 = vld [vmem:[%s3 + $0x118] sm:$0xff]
  %v1147 = vld [vmem:[%s3 + $0x120] sm:$0xff]
  %v1148 = vld [vmem:[%s3 + $0x128] sm:$0xff]
  %v1149 = vld [vmem:[%s3 + $0x130] sm:$0xff]
  %v1150 = vld [vmem:[%s3 + $0x138] sm:$0xff]
  %v1151 = vld [vmem:[%s3 + $0x140] sm:$0xff]
  %v1152 = vld [vmem:[%s3 + $0x148] sm:$0xff]
  %v1153 = vld [vmem:[%s3 + $0x150] sm:$0xff]
  %v1154 = vld [vmem:[%s3 + $0x158] sm:$0xff]
  %v1155 = vld [vmem:[%s3 + $0x160] sm:$0xff]
  %v1156 = vld [vmem:[%s3 + $0x168] sm:$0xff]
  %v1157 = vld [vmem:[%s3 + $0x170] sm:$0xff]
  %v1158 = vld [vmem:[%s3 + $0x178] sm:$0xff]
  %1159 = vmatprep.subr.mxu0 %v1157
  %1160 = vmatpush1.msra.mxu0 %v1156
  %1161 = vmatprep.subr.mxu0 %v1154
  %1162 = vmatpush1.msra.mxu0 %v1153
  %1163 = vmatprep.subr.mxu0 %v1151
  %1164 = vmatpush1.msra.mxu0 %v1150
  %1165 = vmatprep.subr.mxu0 %v1148
  %1166 = vmatpush1.msra.mxu0 %v1147
  %1167 = vmatprep.subr.mxu0 %v1145
  %1168 = vmatpush1.msra.mxu0 %v1144
  %1169 = vmatprep.subr.mxu0 %v1142
  %1170 = vmatpush1.msra.mxu0 %v1141
  %1171 = vmatprep.subr.mxu0 %v1139
  %1172 = vmatpush1.msra.mxu0 %v1138
  %1173 = vmatprep.subr.mxu0 %v1136
  %1174 = vmatpush1.msra.mxu0 %v1135
  %1175 = vmatprep.subr.mxu0 %v1133
  %1176 = vmatpush1.msra.mxu0 %v1132
  %1177 = vmatprep.subr.mxu0 %v1130
  %1178 = vmatpush1.msra.mxu0 %v1129
  %1179 = vmatprep.subr.mxu0 %v1127
  %1180 = vmatpush1.msra.mxu0 %v1126
  %1181 = vmatprep.subr.mxu0 %v1124
  %1182 = vmatpush1.msra.mxu0 %v1123
  %1183 = vmatprep.subr.mxu0 %v1121
  %1184 = vmatpush1.msra.mxu0 %v1120
  %1185 = vmatprep.subr.mxu0 %v1118
  %1186 = vmatpush1.msra.mxu0 %v1117
  %1187 = vmatprep.subr.mxu0 %v1115
  %1188 = vmatpush1.msra.mxu0 %v1114
  %1189 = vmatprep.subr.mxu0 %v1112
  %1190 = vmatpush1.msra.mxu0 %v1111
  %1191 = vmatprep.subr.mxu0 0.0
  %1192 = vmatpush2.msra.mxu0 0.0
  %1193 = vmatprep.subr.mxu0 0.0
  %1194 = vmatpush2.msra.mxu0 0.0
  %1195 = vmatprep.subr.mxu0 0.0
  %1196 = vmatpush2.msra.mxu0 0.0
  %1197 = vmatprep.subr.mxu0 0.0
  %1198 = vmatpush2.msra.mxu0 0.0
  %1199 = vmatprep.subr.mxu0 0.0
  %1200 = vmatpush2.msra.mxu0 0.0
  %1201 = vmatprep.subr.mxu0 0.0
  %1202 = vmatpush2.msra.mxu0 0.0
  %1203 = vmatprep.subr.mxu0 0.0
  %1204 = vmatpush2.msra.mxu0 0.0
  %1205 = vmatprep.subr.mxu0 0.0
  %1206 = vmatpush2.msra.mxu0 0.0
  %1207 = vmatprep.subr.mxu0 0.0
  %1208 = vmatpush2.msra.mxu0 0.0
  %1209 = vmatprep.subr.mxu0 0.0
  %1210 = vmatpush2.msra.mxu0 0.0
  %1211 = vmatprep.subr.mxu0 0.0
  %1212 = vmatpush2.msra.mxu0 0.0
  %1213 = vmatprep.subr.mxu0 0.0
  %1214 = vmatpush2.msra.mxu0 0.0
  %1215 = vmatprep.subr.mxu0 0.0
  %1216 = vmatpush2.msra.mxu0 0.0
  %1217 = vmatprep.subr.mxu0 0.0
  %1218 = vmatpush2.msra.mxu0 0.0
  %1219 = vmatprep.subr.mxu0 0.0
  %1220 = vmatpush2.msra.mxu0 0.0
  %1221 = vmatprep.subr.mxu0 0.0
  %1222 = vmatpush2.msra.mxu0 0.0
  %1223 = vmatprep.mubr.f32.mxu0 0.0
  %1224 = vmatmul.mubr.f32.gmra.mxu0 %v1101
  %v1225 = vpop.f32.mrf.mxu0
  %v1226 = vadd.f32 0.0, %v1225
  %v1227 = vpop.f32.mrf.mxu0
  %v1228 = vadd.f32 0.0, %v1227
  %1229 = vdwg.mxu0
  %1230 = vmatprep.subr.mxu0 0.0
  %1231 = vmatpush1.msra.mxu0 %v1158
  %1232 = vmatprep.subr.mxu0 0.0
  %1233 = vmatpush1.msra.mxu0 %v1155
  %1234 = vmatprep.subr.mxu0 0.0
  %1235 = vmatpush1.msra.mxu0 %v1152
  %1236 = vmatprep.subr.mxu0 0.0
  %1237 = vmatpush1.msra.mxu0 %v1149
  %1238 = vmatprep.subr.mxu0 0.0
  %1239 = vmatpush1.msra.mxu0 %v1146
  %1240 = vmatprep.subr.mxu0 0.0
  %1241 = vmatpush1.msra.mxu0 %v1143
  %1242 = vmatprep.subr.mxu0 0.0
  %1243 = vmatpush1.msra.mxu0 %v1140
  %1244 = vmatprep.subr.mxu0 0.0
  %1245 = vmatpush1.msra.mxu0 %v1137
  %1246 = vmatprep.subr.mxu0 0.0
  %1247 = vmatpush1.msra.mxu0 %v1134
  %1248 = vmatprep.subr.mxu0 0.0
  %1249 = vmatpush1.msra.mxu0 %v1131
  %1250 = vmatprep.subr.mxu0 0.0
  %1251 = vmatpush1.msra.mxu0 %v1128
  %1252 = vmatprep.subr.mxu0 0.0
  %1253 = vmatpush1.msra.mxu0 %v1125
  %1254 = vmatprep.subr.mxu0 0.0
  %1255 = vmatpush1.msra.mxu0 %v1122
  %1256 = vmatprep.subr.mxu0 0.0
  %1257 = vmatpush1.msra.mxu0 %v1119
  %1258 = vmatprep.subr.mxu0 0.0
  %1259 = vmatpush1.msra.mxu0 %v1116
  %1260 = vmatprep.subr.mxu0 0.0
  %1261 = vmatpush1.msra.mxu0 %v1113
  %1262 = vmatprep.subr.mxu0 0.0
  %1263 = vmatpush2.msra.mxu0 0.0
  %1264 = vmatprep.subr.mxu0 0.0
  %1265 = vmatpush2.msra.mxu0 0.0
  %1266 = vmatprep.subr.mxu0 0.0
  %1267 = vmatpush2.msra.mxu0 0.0
  %1268 = vmatprep.subr.mxu0 0.0
  %1269 = vmatpush2.msra.mxu0 0.0
  %1270 = vmatprep.subr.mxu0 0.0
  %1271 = vmatpush2.msra.mxu0 0.0
  %1272 = vmatprep.subr.mxu0 0.0
  %1273 = vmatpush2.msra.mxu0 0.0
  %1274 = vmatprep.subr.mxu0 0.0
  %1275 = vmatpush2.msra.mxu0 0.0
  %1276 = vmatprep.subr.mxu0 0.0
  %1277 = vmatpush2.msra.mxu0 0.0
  %1278 = vmatprep.subr.mxu0 0.0
  %1279 = vmatpush2.msra.mxu0 0.0
  %1280 = vmatprep.subr.mxu0 0.0
  %1281 = vmatpush2.msra.mxu0 0.0
  %1282 = vmatprep.subr.mxu0 0.0
  %1283 = vmatpush2.msra.mxu0 0.0
  %1284 = vmatprep.subr.mxu0 0.0
  %1285 = vmatpush2.msra.mxu0 0.0
  %1286 = vmatprep.subr.mxu0 0.0
  %1287 = vmatpush2.msra.mxu0 0.0
  %1288 = vmatprep.subr.mxu0 0.0
  %1289 = vmatpush2.msra.mxu0 0.0
  %1290 = vmatprep.subr.mxu0 0.0
  %1291 = vmatpush2.msra.mxu0 0.0
  %1292 = vmatprep.subr.mxu0 0.0
  %1293 = vmatpush2.msra.mxu0 0.0
  %1294 = vmatprep.mubr.f32.mxu0 0.0
  %1295 = vmatmul.mubr.f32.gmra.mxu0 %v1101
  %v1296 = vpop.f32.mrf.mxu0
  %v1297 = vadd.f32 0.0, %v1296
  %v1298 = vpop.f32.mrf.mxu0
  %1299 = vdwg.mxu0
  %v1300 = vadd.f32 %v1108, %v1226
  %v1301 = vxor.u32 %v1300, 2147483648
  %v1302 = vmul.f32 %v1301, 1.442695
  %v1303 = vpow.pop %v1302
  %v1304 = vadd.f32 %v1303, 1.0
  %v1305 = vrcp.pop %v1304
  %v1306 = vmul.f32 1.0, %v1305
  %v1307 = vadd.f32 %v1109, %v1228
  %v1308 = vxor.u32 %v1307, 2147483648
  %v1309 = vmul.f32 %v1308, 1.442695
  %v1310 = vpow.pop %v1309
  %v1311 = vadd.f32 %v1310, 1.0
  %v1312 = vrcp.pop %v1311
  %v1313 = vmul.f32 1.0, %v1312
  %v1314 = vadd.f32 %v1297, %v437
  %v1315 = vmul.f32 %v1306, %v1314
  %v1316 = vadd.f32 %v1110, %v1315
  %v1317 = vtanh.pop %v1316
  %v1318 = vsub.f32 %v1101, %v1317
  %v1319 = vmul.f32 %v1313, %v1318
  %v1320 = vadd.f32 %v1317, %v1319
  %s1321 = scalar_lea.vmem %s5, 32
  %1322 = vst [vmem:[%s1321] sm:$0xff] %v1320
  %s1323 = scalar_lea.vmem %s0, 120
  %v1324 = vld [vmem:[%s1323] sm:$0xff]
  %v1325 = vld [vmem:[%s1323 + $0x8] sm:$0xff]
  %v1326 = vld [vmem:[%s1323 + $0x10] sm:$0xff]
  %v1327 = vadd.f32 %v1324, %v219
  %v1328 = vadd.f32 %v1325, %v220
  %v1329 = vadd.f32 %v1326, %v221
  %v1330 = vld [vmem:[%s3] sm:$0xff]
  %v1331 = vld [vmem:[%s3 + $0x8] sm:$0xff]
  %v1332 = vld [vmem:[%s3 + $0x10] sm:$0xff]
  %v1333 = vld [vmem:[%s3 + $0x18] sm:$0xff]
  %v1334 = vld [vmem:[%s3 + $0x20] sm:$0xff]
  %v1335 = vld [vmem:[%s3 + $0x28] sm:$0xff]
  %v1336 = vld [vmem:[%s3 + $0x30] sm:$0xff]
  %v1337 = vld [vmem:[%s3 + $0x38] sm:$0xff]
  %v1338 = vld [vmem:[%s3 + $0x40] sm:$0xff]
  %v1339 = vld [vmem:[%s3 + $0x48] sm:$0xff]
  %v1340 = vld [vmem:[%s3 + $0x50] sm:$0xff]
  %v1341 = vld [vmem:[%s3 + $0x58] sm:$0xff]
  %v1342 = vld [vmem:[%s3 + $0x60] sm:$0xff]
  %v1343 = vld [vmem:[%s3 + $0x68] sm:$0xff]
  %v1344 = vld [vmem:[%s3 + $0x70] sm:$0xff]
  %v1345 = vld [vmem:[%s3 + $0x78] sm:$0xff]
  %v1346 = vld [vmem:[%s3 + $0x80] sm:$0xff]
  %v1347 = vld [vmem:[%s3 + $0x88] sm:$0xff]
  %v1348 = vld [vmem:[%s3 + $0x90] sm:$0xff]
  %v1349 = vld [vmem:[%s3 + $0x98] sm:$0xff]
  %v1350 = vld [vmem:[%s3 + $0xa0] sm:$0xff]
  %v1351 = vld [vmem:[%s3 + $0xa8] sm:$0xff]
  %v1352 = vld [vmem:[%s3 + $0xb0] sm:$0xff]
  %v1353 = vld [vmem:[%s3 + $0xb8] sm:$0xff]
  %v1354 = vld [vmem:[%s3 + $0xc0] sm:$0xff]
  %v1355 = vld [vmem:[%s3 + $0xc8] sm:$0xff]
  %v1356 = vld [vmem:[%s3 + $0xd0] sm:$0xff]
  %v1357 = vld [vmem:[%s3 + $0xd8] sm:$0xff]
  %v1358 = vld [vmem:[%s3 + $0xe0] sm:$0xff]
  %v1359 = vld [vmem:[%s3 + $0xe8] sm:$0xff]
  %v1360 = vld [vmem:[%s3 + $0xf0] sm:$0xff]
  %v1361 = vld [vmem:[%s3 + $0xf8] sm:$0xff]
  %v1362 = vld [vmem:[%s3 + $0x100] sm:$0xff]
  %v1363 = vld [vmem:[%s3 + $0x108] sm:$0xff]
  %v1364 = vld [vmem:[%s3 + $0x110] sm:$0xff]
  %v1365 = vld [vmem:[%s3 + $0x118] sm:$0xff]
  %v1366 = vld [vmem:[%s3 + $0x120] sm:$0xff]
  %v1367 = vld [vmem:[%s3 + $0x128] sm:$0xff]
  %v1368 = vld [vmem:[%s3 + $0x130] sm:$0xff]
  %v1369 = vld [vmem:[%s3 + $0x138] sm:$0xff]
  %v1370 = vld [vmem:[%s3 + $0x140] sm:$0xff]
  %v1371 = vld [vmem:[%s3 + $0x148] sm:$0xff]
  %v1372 = vld [vmem:[%s3 + $0x150] sm:$0xff]
  %v1373 = vld [vmem:[%s3 + $0x158] sm:$0xff]
  %v1374 = vld [vmem:[%s3 + $0x160] sm:$0xff]
  %v1375 = vld [vmem:[%s3 + $0x168] sm:$0xff]
  %v1376 = vld [vmem:[%s3 + $0x170] sm:$0xff]
  %v1377 = vld [vmem:[%s3 + $0x178] sm:$0xff]
  %1378 = vmatprep.subr.mxu0 %v1376
  %1379 = vmatpush1.msra.mxu0 %v1375
  %1380 = vmatprep.subr.mxu0 %v1373
  %1381 = vmatpush1.msra.mxu0 %v1372
  %1382 = vmatprep.subr.mxu0 %v1370
  %1383 = vmatpush1.msra.mxu0 %v1369
  %1384 = vmatprep.subr.mxu0 %v1367
  %1385 = vmatpush1.msra.mxu0 %v1366
  %1386 = vmatprep.subr.mxu0 %v1364
  %1387 = vmatpush1.msra.mxu0 %v1363
  %1388 = vmatprep.subr.mxu0 %v1361
  %1389 = vmatpush1.msra.mxu0 %v1360
  %1390 = vmatprep.subr.mxu0 %v1358
  %1391 = vmatpush1.msra.mxu0 %v1357
  %1392 = vmatprep.subr.mxu0 %v1355
  %1393 = vmatpush1.msra.mxu0 %v1354
  %1394 = vmatprep.subr.mxu0 %v1352
  %1395 = vmatpush1.msra.mxu0 %v1351
  %1396 = vmatprep.subr.mxu0 %v1349
  %1397 = vmatpush1.msra.mxu0 %v1348
  %1398 = vmatprep.subr.mxu0 %v1346
  %1399 = vmatpush1.msra.mxu0 %v1345
  %1400 = vmatprep.subr.mxu0 %v1343
  %1401 = vmatpush1.msra.mxu0 %v1342
  %1402 = vmatprep.subr.mxu0 %v1340
  %1403 = vmatpush1.msra.mxu0 %v1339
  %1404 = vmatprep.subr.mxu0 %v1337
  %1405 = vmatpush1.msra.mxu0 %v1336
  %1406 = vmatprep.subr.mxu0 %v1334
  %1407 = vmatpush1.msra.mxu0 %v1333
  %1408 = vmatprep.subr.mxu0 %v1331
  %1409 = vmatpush1.msra.mxu0 %v1330
  %1410 = vmatprep.subr.mxu0 0.0
  %1411 = vmatpush2.msra.mxu0 0.0
  %1412 = vmatprep.subr.mxu0 0.0
  %1413 = vmatpush2.msra.mxu0 0.0
  %1414 = vmatprep.subr.mxu0 0.0
  %1415 = vmatpush2.msra.mxu0 0.0
  %1416 = vmatprep.subr.mxu0 0.0
  %1417 = vmatpush2.msra.mxu0 0.0
  %1418 = vmatprep.subr.mxu0 0.0
  %1419 = vmatpush2.msra.mxu0 0.0
  %1420 = vmatprep.subr.mxu0 0.0
  %1421 = vmatpush2.msra.mxu0 0.0
  %1422 = vmatprep.subr.mxu0 0.0
  %1423 = vmatpush2.msra.mxu0 0.0
  %1424 = vmatprep.subr.mxu0 0.0
  %1425 = vmatpush2.msra.mxu0 0.0
  %1426 = vmatprep.subr.mxu0 0.0
  %1427 = vmatpush2.msra.mxu0 0.0
  %1428 = vmatprep.subr.mxu0 0.0
  %1429 = vmatpush2.msra.mxu0 0.0
  %1430 = vmatprep.subr.mxu0 0.0
  %1431 = vmatpush2.msra.mxu0 0.0
  %1432 = vmatprep.subr.mxu0 0.0
  %1433 = vmatpush2.msra.mxu0 0.0
  %1434 = vmatprep.subr.mxu0 0.0
  %1435 = vmatpush2.msra.mxu0 0.0
  %1436 = vmatprep.subr.mxu0 0.0
  %1437 = vmatpush2.msra.mxu0 0.0
  %1438 = vmatprep.subr.mxu0 0.0
  %1439 = vmatpush2.msra.mxu0 0.0
  %1440 = vmatprep.subr.mxu0 0.0
  %1441 = vmatpush2.msra.mxu0 0.0
  %1442 = vmatprep.mubr.f32.mxu0 0.0
  %1443 = vmatmul.mubr.f32.gmra.mxu0 %v1320
  %v1444 = vpop.f32.mrf.mxu0
  %v1445 = vadd.f32 0.0, %v1444
  %v1446 = vpop.f32.mrf.mxu0
  %v1447 = vadd.f32 0.0, %v1446
  %1448 = vdwg.mxu0
  %1449 = vmatprep.subr.mxu0 0.0
  %1450 = vmatpush1.msra.mxu0 %v1377
  %1451 = vmatprep.subr.mxu0 0.0
  %1452 = vmatpush1.msra.mxu0 %v1374
  %1453 = vmatprep.subr.mxu0 0.0
  %1454 = vmatpush1.msra.mxu0 %v1371
  %1455 = vmatprep.subr.mxu0 0.0
  %1456 = vmatpush1.msra.mxu0 %v1368
  %1457 = vmatprep.subr.mxu0 0.0
  %1458 = vmatpush1.msra.mxu0 %v1365
  %1459 = vmatprep.subr.mxu0 0.0
  %1460 = vmatpush1.msra.mxu0 %v1362
  %1461 = vmatprep.subr.mxu0 0.0
  %1462 = vmatpush1.msra.mxu0 %v1359
  %1463 = vmatprep.subr.mxu0 0.0
  %1464 = vmatpush1.msra.mxu0 %v1356
  %1465 = vmatprep.subr.mxu0 0.0
  %1466 = vmatpush1.msra.mxu0 %v1353
  %1467 = vmatprep.subr.mxu0 0.0
  %1468 = vmatpush1.msra.mxu0 %v1350
  %1469 = vmatprep.subr.mxu0 0.0
  %1470 = vmatpush1.msra.mxu0 %v1347
  %1471 = vmatprep.subr.mxu0 0.0
  %1472 = vmatpush1.msra.mxu0 %v1344
  %1473 = vmatprep.subr.mxu0 0.0
  %1474 = vmatpush1.msra.mxu0 %v1341
  %1475 = vmatprep.subr.mxu0 0.0
  %1476 = vmatpush1.msra.mxu0 %v1338
  %1477 = vmatprep.subr.mxu0 0.0
  %1478 = vmatpush1.msra.mxu0 %v1335
  %1479 = vmatprep.subr.mxu0 0.0
  %1480 = vmatpush1.msra.mxu0 %v1332
  %1481 = vmatprep.subr.mxu0 0.0
  %1482 = vmatpush2.msra.mxu0 0.0
  %1483 = vmatprep.subr.mxu0 0.0
  %1484 = vmatpush2.msra.mxu0 0.0
  %1485 = vmatprep.subr.mxu0 0.0
  %1486 = vmatpush2.msra.mxu0 0.0
  %1487 = vmatprep.subr.mxu0 0.0
  %1488 = vmatpush2.msra.mxu0 0.0
  %1489 = vmatprep.subr.mxu0 0.0
  %1490 = vmatpush2.msra.mxu0 0.0
  %1491 = vmatprep.subr.mxu0 0.0
  %1492 = vmatpush2.msra.mxu0 0.0
  %1493 = vmatprep.subr.mxu0 0.0
  %1494 = vmatpush2.msra.mxu0 0.0
  %1495 = vmatprep.subr.mxu0 0.0
  %1496 = vmatpush2.msra.mxu0 0.0
  %1497 = vmatprep.subr.mxu0 0.0
  %1498 = vmatpush2.msra.mxu0 0.0
  %1499 = vmatprep.subr.mxu0 0.0
  %1500 = vmatpush2.msra.mxu0 0.0
  %1501 = vmatprep.subr.mxu0 0.0
  %1502 = vmatpush2.msra.mxu0 0.0
  %1503 = vmatprep.subr.mxu0 0.0
  %1504 = vmatpush2.msra.mxu0 0.0
  %1505 = vmatprep.subr.mxu0 0.0
  %1506 = vmatpush2.msra.mxu0 0.0
  %1507 = vmatprep.subr.mxu0 0.0
  %1508 = vmatpush2.msra.mxu0 0.0
  %1509 = vmatprep.subr.mxu0 0.0
  %1510 = vmatpush2.msra.mxu0 0.0
  %1511 = vmatprep.subr.mxu0 0.0
  %1512 = vmatpush2.msra.mxu0 0.0
  %1513 = vmatprep.mubr.f32.mxu0 0.0
  %1514 = vmatmul.mubr.f32.gmra.mxu0 %v1320
  %v1515 = vpop.f32.mrf.mxu0
  %v1516 = vadd.f32 0.0, %v1515
  %v1517 = vpop.f32.mrf.mxu0
  %1518 = vdwg.mxu0
  %v1519 = vadd.f32 %v1327, %v1445
  %v1520 = vxor.u32 %v1519, 2147483648
  %v1521 = vmul.f32 %v1520, 1.442695
  %v1522 = vpow.pop %v1521
  %v1523 = vadd.f32 %v1522, 1.0
  %v1524 = vrcp.pop %v1523
  %v1525 = vmul.f32 1.0, %v1524
  %v1526 = vadd.f32 %v1328, %v1447
  %v1527 = vxor.u32 %v1526, 2147483648
  %v1528 = vmul.f32 %v1527, 1.442695
  %v1529 = vpow.pop %v1528
  %v1530 = vadd.f32 %v1529, 1.0
  %v1531 = vrcp.pop %v1530
  %v1532 = vmul.f32 1.0, %v1531
  %v1533 = vadd.f32 %v1516, %v437
  %v1534 = vmul.f32 %v1525, %v1533
  %v1535 = vadd.f32 %v1329, %v1534
  %v1536 = vtanh.pop %v1535
  %v1537 = vsub.f32 %v1320, %v1536
  %v1538 = vmul.f32 %v1532, %v1537
  %v1539 = vadd.f32 %v1536, %v1538
  %s1540 = scalar_lea.vmem %s5, 40
  %1541 = vst [vmem:[%s1540] sm:$0xff] %v1539
  %s1542 = scalar_lea.vmem %s0, 144
  %v1543 = vld [vmem:[%s1542] sm:$0xff]
  %v1544 = vld [vmem:[%s1542 + $0x8] sm:$0xff]
  %v1545 = vld [vmem:[%s1542 + $0x10] sm:$0xff]
  %v1546 = vadd.f32 %v1543, %v219
  %v1547 = vadd.f32 %v1544, %v220
  %v1548 = vadd.f32 %v1545, %v221
  %v1549 = vld [vmem:[%s3] sm:$0xff]
  %v1550 = vld [vmem:[%s3 + $0x8] sm:$0xff]
  %v1551 = vld [vmem:[%s3 + $0x10] sm:$0xff]
  %v1552 = vld [vmem:[%s3 + $0x18] sm:$0xff]
  %v1553 = vld [vmem:[%s3 + $0x20] sm:$0xff]
  %v1554 = vld [vmem:[%s3 + $0x28] sm:$0xff]
  %v1555 = vld [vmem:[%s3 + $0x30] sm:$0xff]
  %v1556 = vld [vmem:[%s3 + $0x38] sm:$0xff]
  %v1557 = vld [vmem:[%s3 + $0x40] sm:$0xff]
  %v1558 = vld [vmem:[%s3 + $0x48] sm:$0xff]
  %v1559 = vld [vmem:[%s3 + $0x50] sm:$0xff]
  %v1560 = vld [vmem:[%s3 + $0x58] sm:$0xff]
  %v1561 = vld [vmem:[%s3 + $0x60] sm:$0xff]
  %v1562 = vld [vmem:[%s3 + $0x68] sm:$0xff]
  %v1563 = vld [vmem:[%s3 + $0x70] sm:$0xff]
  %v1564 = vld [vmem:[%s3 + $0x78] sm:$0xff]
  %v1565 = vld [vmem:[%s3 + $0x80] sm:$0xff]
  %v1566 = vld [vmem:[%s3 + $0x88] sm:$0xff]
  %v1567 = vld [vmem:[%s3 + $0x90] sm:$0xff]
  %v1568 = vld [vmem:[%s3 + $0x98] sm:$0xff]
  %v1569 = vld [vmem:[%s3 + $0xa0] sm:$0xff]
  %v1570 = vld [vmem:[%s3 + $0xa8] sm:$0xff]
  %v1571 = vld [vmem:[%s3 + $0xb0] sm:$0xff]
  %v1572 = vld [vmem:[%s3 + $0xb8] sm:$0xff]
  %v1573 = vld [vmem:[%s3 + $0xc0] sm:$0xff]
  %v1574 = vld [vmem:[%s3 + $0xc8] sm:$0xff]
  %v1575 = vld [vmem:[%s3 + $0xd0] sm:$0xff]
  %v1576 = vld [vmem:[%s3 + $0xd8] sm:$0xff]
  %v1577 = vld [vmem:[%s3 + $0xe0] sm:$0xff]
  %v1578 = vld [vmem:[%s3 + $0xe8] sm:$0xff]
  %v1579 = vld [vmem:[%s3 + $0xf0] sm:$0xff]
  %v1580 = vld [vmem:[%s3 + $0xf8] sm:$0xff]
  %v1581 = vld [vmem:[%s3 + $0x100] sm:$0xff]
  %v1582 = vld [vmem:[%s3 + $0x108] sm:$0xff]
  %v1583 = vld [vmem:[%s3 + $0x110] sm:$0xff]
  %v1584 = vld [vmem:[%s3 + $0x118] sm:$0xff]
  %v1585 = vld [vmem:[%s3 + $0x120] sm:$0xff]
  %v1586 = vld [vmem:[%s3 + $0x128] sm:$0xff]
  %v1587 = vld [vmem:[%s3 + $0x130] sm:$0xff]
  %v1588 = vld [vmem:[%s3 + $0x138] sm:$0xff]
  %v1589 = vld [vmem:[%s3 + $0x140] sm:$0xff]
  %v1590 = vld [vmem:[%s3 + $0x148] sm:$0xff]
  %v1591 = vld [vmem:[%s3 + $0x150] sm:$0xff]
  %v1592 = vld [vmem:[%s3 + $0x158] sm:$0xff]
  %v1593 = vld [vmem:[%s3 + $0x160] sm:$0xff]
  %v1594 = vld [vmem:[%s3 + $0x168] sm:$0xff]
  %v1595 = vld [vmem:[%s3 + $0x170] sm:$0xff]
  %v1596 = vld [vmem:[%s3 + $0x178] sm:$0xff]
  %1597 = vmatprep.subr.mxu0 %v1595
  %1598 = vmatpush1.msra.mxu0 %v1594
  %1599 = vmatprep.subr.mxu0 %v1592
  %1600 = vmatpush1.msra.mxu0 %v1591
  %1601 = vmatprep.subr.mxu0 %v1589
  %1602 = vmatpush1.msra.mxu0 %v1588
  %1603 = vmatprep.subr.mxu0 %v1586
  %1604 = vmatpush1.msra.mxu0 %v1585
  %1605 = vmatprep.subr.mxu0 %v1583
  %1606 = vmatpush1.msra.mxu0 %v1582
  %1607 = vmatprep.subr.mxu0 %v1580
  %1608 = vmatpush1.msra.mxu0 %v1579
  %1609 = vmatprep.subr.mxu0 %v1577
  %1610 = vmatpush1.msra.mxu0 %v1576
  %1611 = vmatprep.subr.mxu0 %v1574
  %1612 = vmatpush1.msra.mxu0 %v1573
  %1613 = vmatprep.subr.mxu0 %v1571
  %1614 = vmatpush1.msra.mxu0 %v1570
  %1615 = vmatprep.subr.mxu0 %v1568
  %1616 = vmatpush1.msra.mxu0 %v1567
  %1617 = vmatprep.subr.mxu0 %v1565
  %1618 = vmatpush1.msra.mxu0 %v1564
  %1619 = vmatprep.subr.mxu0 %v1562
  %1620 = vmatpush1.msra.mxu0 %v1561
  %1621 = vmatprep.subr.mxu0 %v1559
  %1622 = vmatpush1.msra.mxu0 %v1558
  %1623 = vmatprep.subr.mxu0 %v1556
  %1624 = vmatpush1.msra.mxu0 %v1555
  %1625 = vmatprep.subr.mxu0 %v1553
  %1626 = vmatpush1.msra.mxu0 %v1552
  %1627 = vmatprep.subr.mxu0 %v1550
  %1628 = vmatpush1.msra.mxu0 %v1549
  %1629 = vmatprep.subr.mxu0 0.0
  %1630 = vmatpush2.msra.mxu0 0.0
  %1631 = vmatprep.subr.mxu0 0.0
  %1632 = vmatpush2.msra.mxu0 0.0
  %1633 = vmatprep.subr.mxu0 0.0
  %1634 = vmatpush2.msra.mxu0 0.0
  %1635 = vmatprep.subr.mxu0 0.0
  %1636 = vmatpush2.msra.mxu0 0.0
  %1637 = vmatprep.subr.mxu0 0.0
  %1638 = vmatpush2.msra.mxu0 0.0
  %1639 = vmatprep.subr.mxu0 0.0
  %1640 = vmatpush2.msra.mxu0 0.0
  %1641 = vmatprep.subr.mxu0 0.0
  %1642 = vmatpush2.msra.mxu0 0.0
  %1643 = vmatprep.subr.mxu0 0.0
  %1644 = vmatpush2.msra.mxu0 0.0
  %1645 = vmatprep.subr.mxu0 0.0
  %1646 = vmatpush2.msra.mxu0 0.0
  %1647 = vmatprep.subr.mxu0 0.0
  %1648 = vmatpush2.msra.mxu0 0.0
  %1649 = vmatprep.subr.mxu0 0.0
  %1650 = vmatpush2.msra.mxu0 0.0
  %1651 = vmatprep.subr.mxu0 0.0
  %1652 = vmatpush2.msra.mxu0 0.0
  %1653 = vmatprep.subr.mxu0 0.0
  %1654 = vmatpush2.msra.mxu0 0.0
  %1655 = vmatprep.subr.mxu0 0.0
  %1656 = vmatpush2.msra.mxu0 0.0
  %1657 = vmatprep.subr.mxu0 0.0
  %1658 = vmatpush2.msra.mxu0 0.0
  %1659 = vmatprep.subr.mxu0 0.0
  %1660 = vmatpush2.msra.mxu0 0.0
  %1661 = vmatprep.mubr.f32.mxu0 0.0
  %1662 = vmatmul.mubr.f32.gmra.mxu0 %v1539
  %v1663 = vpop.f32.mrf.mxu0
  %v1664 = vadd.f32 0.0, %v1663
  %v1665 = vpop.f32.mrf.mxu0
  %v1666 = vadd.f32 0.0, %v1665
  %1667 = vdwg.mxu0
  %1668 = vmatprep.subr.mxu0 0.0
  %1669 = vmatpush1.msra.mxu0 %v1596
  %1670 = vmatprep.subr.mxu0 0.0
  %1671 = vmatpush1.msra.mxu0 %v1593
  %1672 = vmatprep.subr.mxu0 0.0
  %1673 = vmatpush1.msra.mxu0 %v1590
  %1674 = vmatprep.subr.mxu0 0.0
  %1675 = vmatpush1.msra.mxu0 %v1587
  %1676 = vmatprep.subr.mxu0 0.0
  %1677 = vmatpush1.msra.mxu0 %v1584
  %1678 = vmatprep.subr.mxu0 0.0
  %1679 = vmatpush1.msra.mxu0 %v1581
  %1680 = vmatprep.subr.mxu0 0.0
  %1681 = vmatpush1.msra.mxu0 %v1578
  %1682 = vmatprep.subr.mxu0 0.0
  %1683 = vmatpush1.msra.mxu0 %v1575
  %1684 = vmatprep.subr.mxu0 0.0
  %1685 = vmatpush1.msra.mxu0 %v1572
  %1686 = vmatprep.subr.mxu0 0.0
  %1687 = vmatpush1.msra.mxu0 %v1569
  %1688 = vmatprep.subr.mxu0 0.0
  %1689 = vmatpush1.msra.mxu0 %v1566
  %1690 = vmatprep.subr.mxu0 0.0
  %1691 = vmatpush1.msra.mxu0 %v1563
  %1692 = vmatprep.subr.mxu0 0.0
  %1693 = vmatpush1.msra.mxu0 %v1560
  %1694 = vmatprep.subr.mxu0 0.0
  %1695 = vmatpush1.msra.mxu0 %v1557
  %1696 = vmatprep.subr.mxu0 0.0
  %1697 = vmatpush1.msra.mxu0 %v1554
  %1698 = vmatprep.subr.mxu0 0.0
  %1699 = vmatpush1.msra.mxu0 %v1551
  %1700 = vmatprep.subr.mxu0 0.0
  %1701 = vmatpush2.msra.mxu0 0.0
  %1702 = vmatprep.subr.mxu0 0.0
  %1703 = vmatpush2.msra.mxu0 0.0
  %1704 = vmatprep.subr.mxu0 0.0
  %1705 = vmatpush2.msra.mxu0 0.0
  %1706 = vmatprep.subr.mxu0 0.0
  %1707 = vmatpush2.msra.mxu0 0.0
  %1708 = vmatprep.subr.mxu0 0.0
  %1709 = vmatpush2.msra.mxu0 0.0
  %1710 = vmatprep.subr.mxu0 0.0
  %1711 = vmatpush2.msra.mxu0 0.0
  %1712 = vmatprep.subr.mxu0 0.0
  %1713 = vmatpush2.msra.mxu0 0.0
  %1714 = vmatprep.subr.mxu0 0.0
  %1715 = vmatpush2.msra.mxu0 0.0
  %1716 = vmatprep.subr.mxu0 0.0
  %1717 = vmatpush2.msra.mxu0 0.0
  %1718 = vmatprep.subr.mxu0 0.0
  %1719 = vmatpush2.msra.mxu0 0.0
  %1720 = vmatprep.subr.mxu0 0.0
  %1721 = vmatpush2.msra.mxu0 0.0
  %1722 = vmatprep.subr.mxu0 0.0
  %1723 = vmatpush2.msra.mxu0 0.0
  %1724 = vmatprep.subr.mxu0 0.0
  %1725 = vmatpush2.msra.mxu0 0.0
  %1726 = vmatprep.subr.mxu0 0.0
  %1727 = vmatpush2.msra.mxu0 0.0
  %1728 = vmatprep.subr.mxu0 0.0
  %1729 = vmatpush2.msra.mxu0 0.0
  %1730 = vmatprep.subr.mxu0 0.0
  %1731 = vmatpush2.msra.mxu0 0.0
  %1732 = vmatprep.mubr.f32.mxu0 0.0
  %1733 = vmatmul.mubr.f32.gmra.mxu0 %v1539
  %v1734 = vpop.f32.mrf.mxu0
  %v1735 = vadd.f32 0.0, %v1734
  %v1736 = vpop.f32.mrf.mxu0
  %1737 = vdwg.mxu0
  %v1738 = vadd.f32 %v1546, %v1664
  %v1739 = vxor.u32 %v1738, 2147483648
  %v1740 = vmul.f32 %v1739, 1.442695
  %v1741 = vpow.pop %v1740
  %v1742 = vadd.f32 %v1741, 1.0
  %v1743 = vrcp.pop %v1742
  %v1744 = vmul.f32 1.0, %v1743
  %v1745 = vadd.f32 %v1547, %v1666
  %v1746 = vxor.u32 %v1745, 2147483648
  %v1747 = vmul.f32 %v1746, 1.442695
  %v1748 = vpow.pop %v1747
  %v1749 = vadd.f32 %v1748, 1.0
  %v1750 = vrcp.pop %v1749
  %v1751 = vmul.f32 1.0, %v1750
  %v1752 = vadd.f32 %v1735, %v437
  %v1753 = vmul.f32 %v1744, %v1752
  %v1754 = vadd.f32 %v1548, %v1753
  %v1755 = vtanh.pop %v1754
  %v1756 = vsub.f32 %v1539, %v1755
  %v1757 = vmul.f32 %v1751, %v1756
  %v1758 = vadd.f32 %v1755, %v1757
  %s1759 = scalar_lea.vmem %s5, 48
  %1760 = vst [vmem:[%s1759] sm:$0xff] %v1758
  %s1761 = scalar_lea.vmem %s0, 168
  %v1762 = vld [vmem:[%s1761] sm:$0xff]
  %v1763 = vld [vmem:[%s1761 + $0x8] sm:$0xff]
  %v1764 = vld [vmem:[%s1761 + $0x10] sm:$0xff]
  %v1765 = vadd.f32 %v1762, %v219
  %v1766 = vadd.f32 %v1763, %v220
  %v1767 = vadd.f32 %v1764, %v221
  %v1768 = vld [vmem:[%s3] sm:$0xff]
  %v1769 = vld [vmem:[%s3 + $0x8] sm:$0xff]
  %v1770 = vld [vmem:[%s3 + $0x10] sm:$0xff]
  %v1771 = vld [vmem:[%s3 + $0x18] sm:$0xff]
  %v1772 = vld [vmem:[%s3 + $0x20] sm:$0xff]
  %v1773 = vld [vmem:[%s3 + $0x28] sm:$0xff]
  %v1774 = vld [vmem:[%s3 + $0x30] sm:$0xff]
  %v1775 = vld [vmem:[%s3 + $0x38] sm:$0xff]
  %v1776 = vld [vmem:[%s3 + $0x40] sm:$0xff]
  %v1777 = vld [vmem:[%s3 + $0x48] sm:$0xff]
  %v1778 = vld [vmem:[%s3 + $0x50] sm:$0xff]
  %v1779 = vld [vmem:[%s3 + $0x58] sm:$0xff]
  %v1780 = vld [vmem:[%s3 + $0x60] sm:$0xff]
  %v1781 = vld [vmem:[%s3 + $0x68] sm:$0xff]
  %v1782 = vld [vmem:[%s3 + $0x70] sm:$0xff]
  %v1783 = vld [vmem:[%s3 + $0x78] sm:$0xff]
  %v1784 = vld [vmem:[%s3 + $0x80] sm:$0xff]
  %v1785 = vld [vmem:[%s3 + $0x88] sm:$0xff]
  %v1786 = vld [vmem:[%s3 + $0x90] sm:$0xff]
  %v1787 = vld [vmem:[%s3 + $0x98] sm:$0xff]
  %v1788 = vld [vmem:[%s3 + $0xa0] sm:$0xff]
  %v1789 = vld [vmem:[%s3 + $0xa8] sm:$0xff]
  %v1790 = vld [vmem:[%s3 + $0xb0] sm:$0xff]
  %v1791 = vld [vmem:[%s3 + $0xb8] sm:$0xff]
  %v1792 = vld [vmem:[%s3 + $0xc0] sm:$0xff]
  %v1793 = vld [vmem:[%s3 + $0xc8] sm:$0xff]
  %v1794 = vld [vmem:[%s3 + $0xd0] sm:$0xff]
  %v1795 = vld [vmem:[%s3 + $0xd8] sm:$0xff]
  %v1796 = vld [vmem:[%s3 + $0xe0] sm:$0xff]
  %v1797 = vld [vmem:[%s3 + $0xe8] sm:$0xff]
  %v1798 = vld [vmem:[%s3 + $0xf0] sm:$0xff]
  %v1799 = vld [vmem:[%s3 + $0xf8] sm:$0xff]
  %v1800 = vld [vmem:[%s3 + $0x100] sm:$0xff]
  %v1801 = vld [vmem:[%s3 + $0x108] sm:$0xff]
  %v1802 = vld [vmem:[%s3 + $0x110] sm:$0xff]
  %v1803 = vld [vmem:[%s3 + $0x118] sm:$0xff]
  %v1804 = vld [vmem:[%s3 + $0x120] sm:$0xff]
  %v1805 = vld [vmem:[%s3 + $0x128] sm:$0xff]
  %v1806 = vld [vmem:[%s3 + $0x130] sm:$0xff]
  %v1807 = vld [vmem:[%s3 + $0x138] sm:$0xff]
  %v1808 = vld [vmem:[%s3 + $0x140] sm:$0xff]
  %v1809 = vld [vmem:[%s3 + $0x148] sm:$0xff]
  %v1810 = vld [vmem:[%s3 + $0x150] sm:$0xff]
  %v1811 = vld [vmem:[%s3 + $0x158] sm:$0xff]
  %v1812 = vld [vmem:[%s3 + $0x160] sm:$0xff]
  %v1813 = vld [vmem:[%s3 + $0x168] sm:$0xff]
  %v1814 = vld [vmem:[%s3 + $0x170] sm:$0xff]
  %v1815 = vld [vmem:[%s3 + $0x178] sm:$0xff]
  %1816 = vmatprep.subr.mxu0 %v1814
  %1817 = vmatpush1.msra.mxu0 %v1813
  %1818 = vmatprep.subr.mxu0 %v1811
  %1819 = vmatpush1.msra.mxu0 %v1810
  %1820 = vmatprep.subr.mxu0 %v1808
  %1821 = vmatpush1.msra.mxu0 %v1807
  %1822 = vmatprep.subr.mxu0 %v1805
  %1823 = vmatpush1.msra.mxu0 %v1804
  %1824 = vmatprep.subr.mxu0 %v1802
  %1825 = vmatpush1.msra.mxu0 %v1801
  %1826 = vmatprep.subr.mxu0 %v1799
  %1827 = vmatpush1.msra.mxu0 %v1798
  %1828 = vmatprep.subr.mxu0 %v1796
  %1829 = vmatpush1.msra.mxu0 %v1795
  %1830 = vmatprep.subr.mxu0 %v1793
  %1831 = vmatpush1.msra.mxu0 %v1792
  %1832 = vmatprep.subr.mxu0 %v1790
  %1833 = vmatpush1.msra.mxu0 %v1789
  %1834 = vmatprep.subr.mxu0 %v1787
  %1835 = vmatpush1.msra.mxu0 %v1786
  %1836 = vmatprep.subr.mxu0 %v1784
  %1837 = vmatpush1.msra.mxu0 %v1783
  %1838 = vmatprep.subr.mxu0 %v1781
  %1839 = vmatpush1.msra.mxu0 %v1780
  %1840 = vmatprep.subr.mxu0 %v1778
  %1841 = vmatpush1.msra.mxu0 %v1777
  %1842 = vmatprep.subr.mxu0 %v1775
  %1843 = vmatpush1.msra.mxu0 %v1774
  %1844 = vmatprep.subr.mxu0 %v1772
  %1845 = vmatpush1.msra.mxu0 %v1771
  %1846 = vmatprep.subr.mxu0 %v1769
  %1847 = vmatpush1.msra.mxu0 %v1768
  %1848 = vmatprep.subr.mxu0 0.0
  %1849 = vmatpush2.msra.mxu0 0.0
  %1850 = vmatprep.subr.mxu0 0.0
  %1851 = vmatpush2.msra.mxu0 0.0
  %1852 = vmatprep.subr.mxu0 0.0
  %1853 = vmatpush2.msra.mxu0 0.0
  %1854 = vmatprep.subr.mxu0 0.0
  %1855 = vmatpush2.msra.mxu0 0.0
  %1856 = vmatprep.subr.mxu0 0.0
  %1857 = vmatpush2.msra.mxu0 0.0
  %1858 = vmatprep.subr.mxu0 0.0
  %1859 = vmatpush2.msra.mxu0 0.0
  %1860 = vmatprep.subr.mxu0 0.0
  %1861 = vmatpush2.msra.mxu0 0.0
  %1862 = vmatprep.subr.mxu0 0.0
  %1863 = vmatpush2.msra.mxu0 0.0
  %1864 = vmatprep.subr.mxu0 0.0
  %1865 = vmatpush2.msra.mxu0 0.0
  %1866 = vmatprep.subr.mxu0 0.0
  %1867 = vmatpush2.msra.mxu0 0.0
  %1868 = vmatprep.subr.mxu0 0.0
  %1869 = vmatpush2.msra.mxu0 0.0
  %1870 = vmatprep.subr.mxu0 0.0
  %1871 = vmatpush2.msra.mxu0 0.0
  %1872 = vmatprep.subr.mxu0 0.0
  %1873 = vmatpush2.msra.mxu0 0.0
  %1874 = vmatprep.subr.mxu0 0.0
  %1875 = vmatpush2.msra.mxu0 0.0
  %1876 = vmatprep.subr.mxu0 0.0
  %1877 = vmatpush2.msra.mxu0 0.0
  %1878 = vmatprep.subr.mxu0 0.0
  %1879 = vmatpush2.msra.mxu0 0.0
  %1880 = vmatprep.mubr.f32.mxu0 0.0
  %1881 = vmatmul.mubr.f32.gmra.mxu0 %v1758
  %v1882 = vpop.f32.mrf.mxu0
  %v1883 = vadd.f32 0.0, %v1882
  %v1884 = vpop.f32.mrf.mxu0
  %v1885 = vadd.f32 0.0, %v1884
  %1886 = vdwg.mxu0
  %1887 = vmatprep.subr.mxu0 0.0
  %1888 = vmatpush1.msra.mxu0 %v1815
  %1889 = vmatprep.subr.mxu0 0.0
  %1890 = vmatpush1.msra.mxu0 %v1812
  %1891 = vmatprep.subr.mxu0 0.0
  %1892 = vmatpush1.msra.mxu0 %v1809
  %1893 = vmatprep.subr.mxu0 0.0
  %1894 = vmatpush1.msra.mxu0 %v1806
  %1895 = vmatprep.subr.mxu0 0.0
  %1896 = vmatpush1.msra.mxu0 %v1803
  %1897 = vmatprep.subr.mxu0 0.0
  %1898 = vmatpush1.msra.mxu0 %v1800
  %1899 = vmatprep.subr.mxu0 0.0
  %1900 = vmatpush1.msra.mxu0 %v1797
  %1901 = vmatprep.subr.mxu0 0.0
  %1902 = vmatpush1.msra.mxu0 %v1794
  %1903 = vmatprep.subr.mxu0 0.0
  %1904 = vmatpush1.msra.mxu0 %v1791
  %1905 = vmatprep.subr.mxu0 0.0
  %1906 = vmatpush1.msra.mxu0 %v1788
  %1907 = vmatprep.subr.mxu0 0.0
  %1908 = vmatpush1.msra.mxu0 %v1785
  %1909 = vmatprep.subr.mxu0 0.0
  %1910 = vmatpush1.msra.mxu0 %v1782
  %1911 = vmatprep.subr.mxu0 0.0
  %1912 = vmatpush1.msra.mxu0 %v1779
  %1913 = vmatprep.subr.mxu0 0.0
  %1914 = vmatpush1.msra.mxu0 %v1776
  %1915 = vmatprep.subr.mxu0 0.0
  %1916 = vmatpush1.msra.mxu0 %v1773
  %1917 = vmatprep.subr.mxu0 0.0
  %1918 = vmatpush1.msra.mxu0 %v1770
  %1919 = vmatprep.subr.mxu0 0.0
  %1920 = vmatpush2.msra.mxu0 0.0
  %1921 = vmatprep.subr.mxu0 0.0
  %1922 = vmatpush2.msra.mxu0 0.0
  %1923 = vmatprep.subr.mxu0 0.0
  %1924 = vmatpush2.msra.mxu0 0.0
  %1925 = vmatprep.subr.mxu0 0.0
  %1926 = vmatpush2.msra.mxu0 0.0
  %1927 = vmatprep.subr.mxu0 0.0
  %1928 = vmatpush2.msra.mxu0 0.0
  %1929 = vmatprep.subr.mxu0 0.0
  %1930 = vmatpush2.msra.mxu0 0.0
  %1931 = vmatprep.subr.mxu0 0.0
  %1932 = vmatpush2.msra.mxu0 0.0
  %1933 = vmatprep.subr.mxu0 0.0
  %1934 = vmatpush2.msra.mxu0 0.0
  %1935 = vmatprep.subr.mxu0 0.0
  %1936 = vmatpush2.msra.mxu0 0.0
  %1937 = vmatprep.subr.mxu0 0.0
  %1938 = vmatpush2.msra.mxu0 0.0
  %1939 = vmatprep.subr.mxu0 0.0
  %1940 = vmatpush2.msra.mxu0 0.0
  %1941 = vmatprep.subr.mxu0 0.0
  %1942 = vmatpush2.msra.mxu0 0.0
  %1943 = vmatprep.subr.mxu0 0.0
  %1944 = vmatpush2.msra.mxu0 0.0
  %1945 = vmatprep.subr.mxu0 0.0
  %1946 = vmatpush2.msra.mxu0 0.0
  %1947 = vmatprep.subr.mxu0 0.0
  %1948 = vmatpush2.msra.mxu0 0.0
  %1949 = vmatprep.subr.mxu0 0.0
  %1950 = vmatpush2.msra.mxu0 0.0
  %1951 = vmatprep.mubr.f32.mxu0 0.0
  %1952 = vmatmul.mubr.f32.gmra.mxu0 %v1758
  %v1953 = vpop.f32.mrf.mxu0
  %v1954 = vadd.f32 0.0, %v1953
  %v1955 = vpop.f32.mrf.mxu0
  %1956 = vdwg.mxu0
  %v1957 = vadd.f32 %v1765, %v1883
  %v1958 = vxor.u32 %v1957, 2147483648
  %v1959 = vmul.f32 %v1958, 1.442695
  %v1960 = vpow.pop %v1959
  %v1961 = vadd.f32 %v1960, 1.0
  %v1962 = vrcp.pop %v1961
  %v1963 = vmul.f32 1.0, %v1962
  %v1964 = vadd.f32 %v1766, %v1885
  %v1965 = vxor.u32 %v1964, 2147483648
  %v1966 = vmul.f32 %v1965, 1.442695
  %v1967 = vpow.pop %v1966
  %v1968 = vadd.f32 %v1967, 1.0
  %v1969 = vrcp.pop %v1968
  %v1970 = vmul.f32 1.0, %v1969
  %v1971 = vadd.f32 %v1954, %v437
  %v1972 = vmul.f32 %v1963, %v1971
  %v1973 = vadd.f32 %v1767, %v1972
  %v1974 = vtanh.pop %v1973
  %v1975 = vsub.f32 %v1758, %v1974
  %v1976 = vmul.f32 %v1970, %v1975
  %v1977 = vadd.f32 %v1974, %v1976
  %s1978 = scalar_lea.vmem %s5, 56
  %1979 = vst [vmem:[%s1978] sm:$0xff] %v1977
  %1980 = vst [vmem:[#allocation2] sm:$0xff] %v1977
  // Predicated region
  $region26: #{encoder_decoder_forward.8} parent=0 // pred_check
    _
  $region27: #{encoder_decoder_forward.8} parent=0 // pred_check_branch
    %1982 = sbr.rel (0) target = $region29
  $region28: #{encoder_decoder_forward.8} parent=0 // pred_region
    _
  $region29: #{encoder_decoder_forward.8} parent=0 // pred_fallthru
    _
  // Predicated region
  $region30: #{encoder_decoder_forward.8} parent=0 // pred_check
    _
  $region31: #{encoder_decoder_forward.8} parent=0 // pred_check_branch
    %1984 = sbr.rel (0) target = $region33
  $region32: #{encoder_decoder_forward.8} parent=0 // pred_region
    _
  $region33: #{encoder_decoder_forward.8} parent=0 // pred_fallthru
    _

</llo_original>
